<compile_context>
chip_gen: v7x
topology: tpu7x:2x2x1
jax: 0.10.0
libtpu: 0.0.40
codegen_flags: <defaults>
</compile_context>

<pallas_src>
import functools

import jax
import jax.numpy as jnp
from jax.experimental import pallas as pl
from jax.experimental.pallas import tpu as pltpu

EPS = 1e-5


# ----------------------------------------------------------------------------
# Kernels
# ----------------------------------------------------------------------------
def _mlp_stats_kernel(seg_ref, m1_ref, w1_ref, b1_ref, x_ref,
                      actv_ref, mean_ref, rstd_ref, *, width, halo, hw_tile):
    """Shared MLP conv3x3 + ReLU (flat, zero-padded layout) + IN statistics.

    seg_ref : (label_nc, HW + 4*halo)  resized segmap, zero-padded flat (2*halo)
    m1_ref  : (3, Npad)   {interior, not-left-edge, not-right-edge} 0/1 masks
    w1_ref  : (9, nhidden, label_nc)   per-tap conv weights
    b1_ref  : (nhidden, 1) f32
    x_ref   : (C, HW)
    actv_ref: (T, nhidden, win)  out: per-HW-tile halo'd windows of relu(conv)
    mean_ref, rstd_ref: (C, 1) f32  out: full-H*W instance-norm statistics
    """
    npad = m1_ref.shape[-1]
    nh = w1_ref.shape[1]

    masks = m1_ref[...]
    interior, not_left, not_right = masks[0:1], masks[1:2], masks[2:3]

    # 3x3 conv as 9 accumulated shifted matmuls (native-dtype MXU operands,
    # f32 accumulation).  Row out-of-bounds taps hit the zero padding; column
    # wrap-around taps are killed by the edge masks.
    acc = jnp.zeros((nh, npad), jnp.float32)
    for kh in range(3):
        for kw in range(3):
            k = kh * 3 + kw
            off = (kh - 1) * width + (kw - 1)
            tap = seg_ref[:, halo + off: halo + off + npad]   # (label_nc, Npad)
            if kw == 0:
                tap = tap * not_left
            elif kw == 2:
                tap = tap * not_right
            acc = acc + jnp.dot(w1_ref[k], tap,
                                preferred_element_type=jnp.float32)
    actv = jnp.maximum(acc + b1_ref[...], 0.0) * interior     # zero the pad ring

    # Emit actv as overlapping per-tile windows (one-row halo each side) so
    # kernel 2 needs no dynamic lane slicing and stays VMEM-bounded per tile.
    n_tiles = actv_ref.shape[0]
    win = actv_ref.shape[-1]
    for t in range(n_tiles):
        actv_ref[t] = actv[:, t * hw_tile: t * hw_tile + win].astype(
            actv_ref.dtype)

    # Instance-norm statistics over the full spatial extent (biased variance,
    # matching nn.InstanceNorm2d).
    x = x_ref[...].astype(jnp.float32)
    mean = jnp.mean(x, axis=-1, keepdims=True)
    diff = x - mean
    var = jnp.mean(diff * diff, axis=-1, keepdims=True)
    mean_ref[...] = mean
    rstd_ref[...] = jax.lax.rsqrt(var + EPS)


def _spade_modulate_kernel(x_ref, mean_ref, rstd_ref, actv_ref, m2_ref,
                           w_ref, b_ref, o_ref, *, width, halo):
    """Fused gamma/beta conv3x3 + instance-norm apply + modulation per tile.

    x_ref   : (C, hw_tile)
    mean_ref, rstd_ref: (C, 1) f32
    actv_ref: (nhidden, hw_tile + 2*halo)  halo'd actv window for this tile
    m2_ref  : (2, hw_tile)  {not-left-edge, not-right-edge} 0/1 masks
    w_ref   : (9, 2C, nhidden)  per-tap fused [gamma | beta] weights
    b_ref   : (2C, 1) f32       fused [1 + bias_gamma | bias_beta]
    o_ref   : (C, hw_tile)
    """
    hw_tile = x_ref.shape[-1]
    c = x_ref.shape[0]
    two_c = w_ref.shape[1]

    masks = m2_ref[...]
    not_left, not_right = masks[0:1], masks[1:2]

    acc = jnp.zeros((two_c, hw_tile), jnp.float32)
    for kh in range(3):
        for kw in range(3):
            k = kh * 3 + kw
            off = (kh - 1) * width + (kw - 1)
            tap = actv_ref[:, halo + off: halo + off + hw_tile]  # (nhidden, hw)
            contrib = jnp.dot(w_ref[k], tap,
                              preferred_element_type=jnp.float32)
            if kw == 0:
                contrib = contrib * not_left
            elif kw == 2:
                contrib = contrib * not_right
            acc = acc + contrib
    gb = acc + b_ref[...]                    # (2C, hw_tile): [1+gamma | beta]

    xhat = (x_ref[...].astype(jnp.float32) - mean_ref[...]) * rstd_ref[...]
    o_ref[...] = (xhat * gb[:c, :] + gb[c:, :]).astype(o_ref.dtype)


# ----------------------------------------------------------------------------
# Wrapper-side layout plumbing (cheap, O(H*W))
# ----------------------------------------------------------------------------
def _nearest_resize(seg, H, W):
    """PyTorch F.interpolate(mode='nearest') equivalent."""
    # TODO(synk): the nearest-neighbour resize is a static-index gather and is
    # left to XLA in the wrapper rather than done in-kernel.
    B, C, Hs, Ws = seg.shape
    if (Hs, Ws) == (H, W):
        return seg
    hi = (jnp.arange(H) * Hs) // H
    wi = (jnp.arange(W) * Ws) // W
    return jnp.take(jnp.take(seg, hi, axis=2), wi, axis=3)


def _edge_masks(H, W, halo, dtype):
    """0/1 masks killing the column wrap-around of flattened-spatial shifts."""
    HW = H * W
    npad = HW + 2 * halo
    # kernel-1 masks over padded-flat output positions p in [0, Npad)
    p = jnp.arange(npad)
    j = p - halo
    w_idx = j % W                       # value at non-interior p is irrelevant
    interior = (j >= 0) & (j < HW)
    masks1 = jnp.stack([interior, w_idx != 0, w_idx != W - 1]).astype(dtype)
    # kernel-2 masks over un-padded output positions j in [0, HW)
    j2 = jnp.arange(HW)
    w2 = j2 % W
    masks2 = jnp.stack([w2 != 0, w2 != W - 1]).astype(dtype)
    return masks1, masks2


# ----------------------------------------------------------------------------
# SPADE forward
# ----------------------------------------------------------------------------
def spade(x, segmap, w1, b1, wg, bg, wb, bb, *, hw_tile=None):
    """x: [B,C,H,W]; segmap: [B,label_nc,Hs,Ws];
    w1:[nhidden,label_nc,3,3] b1:[nhidden]; wg/wb:[C,nhidden,3,3] bg/bb:[C]."""
    B, C, H, W = x.shape
    nhidden, label_nc = w1.shape[0], w1.shape[1]
    HW = H * W
    halo = W + 1                        # one image row (+1) in the flat layout
    npad = HW + 2 * halo

    if hw_tile is None:
        hw_tile = HW
        if HW % 128 == 0:
            for cand in range(128, min(HW, 2048) + 1, 128):
                if HW % cand == 0:
                    hw_tile = cand
    assert HW % hw_tile == 0 and (hw_tile % 128 == 0 or hw_tile == HW)
    n_hw = HW // hw_tile
    win = hw_tile + 2 * halo

    # ---- input layout prep ----
    seg = _nearest_resize(segmap, H, W).astype(x.dtype)
    seg_fp = jnp.pad(seg.reshape(B, label_nc, HW),
                     ((0, 0), (0, 0), (2 * halo, 2 * halo)))  # double halo
    masks1, masks2 = _edge_masks(H, W, halo, x.dtype)
    x_flat = x.reshape(B, C, HW)

    # Per-tap weight layout; fused [gamma|beta] output channels; f32 biases
    # with the "+1" of (1 + gamma) folded into the gamma bias.
    w1_t = jnp.transpose(w1, (2, 3, 0, 1)).reshape(9, nhidden, label_nc)
    b1_m = b1.reshape(nhidden, 1).astype(jnp.float32)
    wgb_t = jnp.transpose(jnp.concatenate([wg, wb], axis=0),
                          (2, 3, 0, 1)).reshape(9, 2 * C, nhidden)
    bgb_m = jnp.concatenate([1.0 + bg, bb]).reshape(2 * C, 1).astype(jnp.float32)

    vmem_limit = 48 * 1024 * 1024       # explicit; fits v7x's 64 MiB physical

    # ---- kernel 1: shared MLP conv+ReLU + instance-norm statistics ----
    actv_tiles, mean, rstd = pl.pallas_call(
        functools.partial(_mlp_stats_kernel, width=W, halo=halo,
                          hw_tile=hw_tile),
        out_shape=(jax.ShapeDtypeStruct((B, n_hw, nhidden, win), x.dtype),
                   jax.ShapeDtypeStruct((B, C, 1), jnp.float32),
                   jax.ShapeDtypeStruct((B, C, 1), jnp.float32)),
        grid=(B,),
        in_specs=[
            pl.BlockSpec((None, label_nc, npad + 2 * halo), lambda b: (b, 0, 0)),
            pl.BlockSpec((3, npad), lambda b: (0, 0)),
            pl.BlockSpec((9, nhidden, label_nc), lambda b: (0, 0, 0)),
            pl.BlockSpec((nhidden, 1), lambda b: (0, 0)),
            pl.BlockSpec((None, C, HW), lambda b: (b, 0, 0)),
        ],
        out_specs=(
            pl.BlockSpec((None, n_hw, nhidden, win), lambda b: (b, 0, 0, 0)),
            pl.BlockSpec((None, C, 1), lambda b: (b, 0, 0)),
            pl.BlockSpec((None, C, 1), lambda b: (b, 0, 0)),
        ),
        compiler_params=pltpu.CompilerParams(
            dimension_semantics=("parallel",),
            vmem_limit_bytes=vmem_limit),
    )(seg_fp, masks1, w1_t, b1_m, x_flat)

    # ---- kernel 2: fused gamma/beta conv + instance norm + modulation ----
    out_flat = pl.pallas_call(
        functools.partial(_spade_modulate_kernel, width=W, halo=halo),
        out_shape=jax.ShapeDtypeStruct((B, C, HW), x.dtype),
        grid=(B, n_hw),
        in_specs=[
            pl.BlockSpec((None, C, hw_tile), lambda b, t: (b, 0, t)),       # x
            pl.BlockSpec((None, C, 1), lambda b, t: (b, 0, 0)),             # mean
            pl.BlockSpec((None, C, 1), lambda b, t: (b, 0, 0)),             # rstd
            pl.BlockSpec((None, None, nhidden, win), lambda b, t: (b, t, 0, 0)),
            pl.BlockSpec((2, hw_tile), lambda b, t: (0, t)),                # masks
            pl.BlockSpec((9, 2 * C, nhidden), lambda b, t: (0, 0, 0)),      # W
            pl.BlockSpec((2 * C, 1), lambda b, t: (0, 0)),                  # b
        ],
        out_specs=pl.BlockSpec((None, C, hw_tile), lambda b, t: (b, 0, t)),
        compiler_params=pltpu.CompilerParams(
            dimension_semantics=("parallel", "arbitrary"),
            vmem_limit_bytes=vmem_limit),
    )(x_flat, mean, rstd, actv_tiles, masks2, wgb_t, bgb_m)

    return out_flat.reshape(B, C, H, W)


# ----------------------------------------------------------------------------
# Plain-JAX reference matching the PyTorch forward
# ----------------------------------------------------------------------------
def spade_ref(x, segmap, w1, b1, wg, bg, wb, bb):
    B, C, H, W = x.shape
    mean = jnp.mean(x, axis=(2, 3), keepdims=True)
    var = jnp.mean((x - mean) ** 2, axis=(2, 3), keepdims=True)
    normalized = (x - mean) / jnp.sqrt(var + EPS)

    seg = _nearest_resize(segmap, H, W)

    def conv(u, w, b):
        out = jax.lax.conv_general_dilated(
            u, w, window_strides=(1, 1), padding=((1, 1), (1, 1)),
            dimension_numbers=("NCHW", "OIHW", "NCHW"))
        return out + b[None, :, None, None]

    actv = jnp.maximum(conv(seg, w1, b1), 0.0)
    gamma = conv(actv, wg, bg)
    beta = conv(actv, wb, bb)
    return normalized * (1.0 + gamma) + beta


if __name__ == "__main__":
    B, C, H, W = 2, 4, 16, 16        # norm_nc = 4
    label_nc = 3
    nhidden = 128                    # fixed by the module
    Hs, Ws = 8, 8                    # segmap smaller -> exercises nearest resize

    key = jax.random.PRNGKey(0)
    kx, ks, k1, k2, k3, k4, k5, k6 = jax.random.split(key, 8)

    x = jax.random.normal(kx, (B, C, H, W), dtype=jnp.float32)
    segmap = jax.random.normal(ks, (B, label_nc, Hs, Ws), dtype=jnp.float32)

    def uinit(k, shape, fan_in):
        bound = 1.0 / (fan_in ** 0.5)
        return jax.random.uniform(k, shape, jnp.float32, -bound, bound)

    w1 = uinit(k1, (nhidden, label_nc, 3, 3), label_nc * 9)
    b1 = uinit(k2, (nhidden,), label_nc * 9)
    wg = uinit(k3, (C, nhidden, 3, 3), nhidden * 9)
    bg = uinit(k4, (C,), nhidden * 9)
    wb = uinit(k5, (C, nhidden, 3, 3), nhidden * 9)
    bb = uinit(k6, (C,), nhidden * 9)

    # hw_tile=128 -> two HW tiles per batch element: exercises the tiled path.
    out = spade(x, segmap, w1, b1, wg, bg, wb, bb, hw_tile=128)
    out = jax.block_until_ready(out)

    ref = spade_ref(x, segmap, w1, b1, wg, bg, wb, bb)
    assert out.shape == (B, C, H, W)
    assert jnp.allclose(out, ref, atol=3e-2, rtol=3e-2), (
        f"max abs err = {jnp.max(jnp.abs(out - ref))}")

    print("KERNEL_OK")
</pallas_src>

<mosaic_0001>
module attributes {stable_mosaic.version = 11 : i64} {
  func.func @_mlp_stats_kernel(%arg0: i32, %arg1: memref<1x3x324xf32, #tpu.memory_space<vmem>>, %arg2: memref<3x290xf32, #tpu.memory_space<vmem>>, %arg3: memref<9x128x3xf32, #tpu.memory_space<vmem>>, %arg4: memref<128x1xf32, #tpu.memory_space<vmem>>, %arg5: memref<1x4x256xf32, #tpu.memory_space<vmem>>, %arg6: memref<1x2x128x162xf32, #tpu.memory_space<vmem>>, %arg7: memref<1x4x1xf32, #tpu.memory_space<vmem>>, %arg8: memref<1x4x1xf32, #tpu.memory_space<vmem>>) attributes {dimension_semantics = [#tpu.dimension_semantics<parallel>], iteration_bounds = array<i64: 2>, scalar_prefetch = 0 : i64, scratch_operands = 0 : i64, tpu.core_type = #tpu.core_type<tc>, window_params = [{transform_indices = @transform_0, window_bounds = array<i64: 1, 3, 324>}, {pipeline_mode = #tpu.pipeline_mode<synchronous>, transform_indices = @transform_1, window_bounds = array<i64: 3, 290>}, {pipeline_mode = #tpu.pipeline_mode<synchronous>, transform_indices = @transform_2, window_bounds = array<i64: 9, 128, 3>}, {pipeline_mode = #tpu.pipeline_mode<synchronous>, transform_indices = @transform_3, window_bounds = array<i64: 128, 1>}, {transform_indices = @transform_4, window_bounds = array<i64: 1, 4, 256>}, {transform_indices = @transform_5, window_bounds = array<i64: 1, 2, 128, 162>}, {transform_indices = @transform_6, window_bounds = array<i64: 1, 4, 1>}, {transform_indices = @transform_7, window_bounds = array<i64: 1, 4, 1>}]} {
    %c0 = arith.constant 0 : index
    %c0_0 = arith.constant 0 : index
    %0 = vector.load %arg2[%c0, %c0_0] : memref<3x290xf32, #tpu.memory_space<vmem>>, vector<3x290xf32>
    %1 = vector.extract_strided_slice %0 {offsets = [0, 0], sizes = [1, 290], strides = [1, 1]} : vector<3x290xf32> to vector<1x290xf32>
    %2 = vector.extract_strided_slice %0 {offsets = [1, 0], sizes = [1, 290], strides = [1, 1]} : vector<3x290xf32> to vector<1x290xf32>
    %3 = vector.extract_strided_slice %0 {offsets = [2, 0], sizes = [1, 290], strides = [1, 1]} : vector<3x290xf32> to vector<1x290xf32>
    %cst = arith.constant 0.000000e+00 : f32
    %4 = vector.broadcast %cst : f32 to vector<128x290xf32>
    %c0_1 = arith.constant 0 : index
    %c0_2 = arith.constant 0 : index
    %c0_3 = arith.constant 0 : index
    %5 = vector.load %arg1[%c0_1, %c0_2, %c0_3] : memref<1x3x324xf32, #tpu.memory_space<vmem>>, vector<1x3x290xf32>
    %6 = vector.shape_cast %5 : vector<1x3x290xf32> to vector<3x290xf32>
    %7 = vector.broadcast %2 : vector<1x290xf32> to vector<3x290xf32>
    %8 = arith.mulf %6, %7 : vector<3x290xf32>
    %c0_4 = arith.constant 0 : index
    %c0_5 = arith.constant 0 : index
    %c0_6 = arith.constant 0 : index
    %9 = vector.load %arg3[%c0_4, %c0_5, %c0_6] : memref<9x128x3xf32, #tpu.memory_space<vmem>>, vector<1x128x3xf32>
    %10 = vector.shape_cast %9 : vector<1x128x3xf32> to vector<128x3xf32>
    %cst_7 = arith.constant dense<0.000000e+00> : vector<128x290xf32>
    %11 = tpu.matmul %10, %8, %cst_7 {dimension_numbers = #tpu.dot_dimension_numbers<[1], [0], [0], [1], [0, 0, 1, 1], [], []>} : vector<128x3xf32>, vector<3x290xf32>, vector<128x290xf32> -> vector<128x290xf32>
    %12 = arith.addf %4, %11 : vector<128x290xf32>
    %c0_8 = arith.constant 0 : index
    %c0_9 = arith.constant 0 : index
    %c1 = arith.constant 1 : index
    %13 = vector.load %arg1[%c0_8, %c0_9, %c1] : memref<1x3x324xf32, #tpu.memory_space<vmem>>, vector<1x3x290xf32>
    %14 = vector.shape_cast %13 : vector<1x3x290xf32> to vector<3x290xf32>
    %c1_10 = arith.constant 1 : index
    %c0_11 = arith.constant 0 : index
    %c0_12 = arith.constant 0 : index
    %15 = vector.load %arg3[%c1_10, %c0_11, %c0_12] : memref<9x128x3xf32, #tpu.memory_space<vmem>>, vector<1x128x3xf32>
    %16 = vector.shape_cast %15 : vector<1x128x3xf32> to vector<128x3xf32>
    %cst_13 = arith.constant dense<0.000000e+00> : vector<128x290xf32>
    %17 = tpu.matmul %16, %14, %cst_13 {dimension_numbers = #tpu.dot_dimension_numbers<[1], [0], [0], [1], [0, 0, 1, 1], [], []>} : vector<128x3xf32>, vector<3x290xf32>, vector<128x290xf32> -> vector<128x290xf32>
    %18 = arith.addf %12, %17 : vector<128x290xf32>
    %c0_14 = arith.constant 0 : index
    %c0_15 = arith.constant 0 : index
    %c2 = arith.constant 2 : index
    %19 = vector.load %arg1[%c0_14, %c0_15, %c2] : memref<1x3x324xf32, #tpu.memory_space<vmem>>, vector<1x3x290xf32>
    %20 = vector.shape_cast %19 : vector<1x3x290xf32> to vector<3x290xf32>
    %21 = vector.broadcast %3 : vector<1x290xf32> to vector<3x290xf32>
    %22 = arith.mulf %20, %21 : vector<3x290xf32>
    %c2_16 = arith.constant 2 : index
    %c0_17 = arith.constant 0 : index
    %c0_18 = arith.constant 0 : index
    %23 = vector.load %arg3[%c2_16, %c0_17, %c0_18] : memref<9x128x3xf32, #tpu.memory_space<vmem>>, vector<1x128x3xf32>
    %24 = vector.shape_cast %23 : vector<1x128x3xf32> to vector<128x3xf32>
    %cst_19 = arith.constant dense<0.000000e+00> : vector<128x290xf32>
    %25 = tpu.matmul %24, %22, %cst_19 {dimension_numbers = #tpu.dot_dimension_numbers<[1], [0], [0], [1], [0, 0, 1, 1], [], []>} : vector<128x3xf32>, vector<3x290xf32>, vector<128x290xf32> -> vector<128x290xf32>
    %26 = arith.addf %18, %25 : vector<128x290xf32>
    %c0_20 = arith.constant 0 : index
    %c0_21 = arith.constant 0 : index
    %c16 = arith.constant 16 : index
    %27 = vector.load %arg1[%c0_20, %c0_21, %c16] : memref<1x3x324xf32, #tpu.memory_space<vmem>>, vector<1x3x290xf32>
    %28 = vector.shape_cast %27 : vector<1x3x290xf32> to vector<3x290xf32>
    %29 = vector.broadcast %2 : vector<1x290xf32> to vector<3x290xf32>
    %30 = arith.mulf %28, %29 : vector<3x290xf32>
    %c3 = arith.constant 3 : index
    %c0_22 = arith.constant 0 : index
    %c0_23 = arith.constant 0 : index
    %31 = vector.load %arg3[%c3, %c0_22, %c0_23] : memref<9x128x3xf32, #tpu.memory_space<vmem>>, vector<1x128x3xf32>
    %32 = vector.shape_cast %31 : vector<1x128x3xf32> to vector<128x3xf32>
    %cst_24 = arith.constant dense<0.000000e+00> : vector<128x290xf32>
    %33 = tpu.matmul %32, %30, %cst_24 {dimension_numbers = #tpu.dot_dimension_numbers<[1], [0], [0], [1], [0, 0, 1, 1], [], []>} : vector<128x3xf32>, vector<3x290xf32>, vector<128x290xf32> -> vector<128x290xf32>
    %34 = arith.addf %26, %33 : vector<128x290xf32>
    %c0_25 = arith.constant 0 : index
    %c0_26 = arith.constant 0 : index
    %c17 = arith.constant 17 : index
    %35 = vector.load %arg1[%c0_25, %c0_26, %c17] : memref<1x3x324xf32, #tpu.memory_space<vmem>>, vector<1x3x290xf32>
    %36 = vector.shape_cast %35 : vector<1x3x290xf32> to vector<3x290xf32>
    %c4 = arith.constant 4 : index
    %c0_27 = arith.constant 0 : index
    %c0_28 = arith.constant 0 : index
    %37 = vector.load %arg3[%c4, %c0_27, %c0_28] : memref<9x128x3xf32, #tpu.memory_space<vmem>>, vector<1x128x3xf32>
    %38 = vector.shape_cast %37 : vector<1x128x3xf32> to vector<128x3xf32>
    %cst_29 = arith.constant dense<0.000000e+00> : vector<128x290xf32>
    %39 = tpu.matmul %38, %36, %cst_29 {dimension_numbers = #tpu.dot_dimension_numbers<[1], [0], [0], [1], [0, 0, 1, 1], [], []>} : vector<128x3xf32>, vector<3x290xf32>, vector<128x290xf32> -> vector<128x290xf32>
    %40 = arith.addf %34, %39 : vector<128x290xf32>
    %c0_30 = arith.constant 0 : index
    %c0_31 = arith.constant 0 : index
    %c18 = arith.constant 18 : index
    %41 = vector.load %arg1[%c0_30, %c0_31, %c18] : memref<1x3x324xf32, #tpu.memory_space<vmem>>, vector<1x3x290xf32>
    %42 = vector.shape_cast %41 : vector<1x3x290xf32> to vector<3x290xf32>
    %43 = vector.broadcast %3 : vector<1x290xf32> to vector<3x290xf32>
    %44 = arith.mulf %42, %43 : vector<3x290xf32>
    %c5 = arith.constant 5 : index
    %c0_32 = arith.constant 0 : index
    %c0_33 = arith.constant 0 : index
    %45 = vector.load %arg3[%c5, %c0_32, %c0_33] : memref<9x128x3xf32, #tpu.memory_space<vmem>>, vector<1x128x3xf32>
    %46 = vector.shape_cast %45 : vector<1x128x3xf32> to vector<128x3xf32>
    %cst_34 = arith.constant dense<0.000000e+00> : vector<128x290xf32>
    %47 = tpu.matmul %46, %44, %cst_34 {dimension_numbers = #tpu.dot_dimension_numbers<[1], [0], [0], [1], [0, 0, 1, 1], [], []>} : vector<128x3xf32>, vector<3x290xf32>, vector<128x290xf32> -> vector<128x290xf32>
    %48 = arith.addf %40, %47 : vector<128x290xf32>
    %c0_35 = arith.constant 0 : index
    %c0_36 = arith.constant 0 : index
    %c32 = arith.constant 32 : index
    %49 = vector.load %arg1[%c0_35, %c0_36, %c32] : memref<1x3x324xf32, #tpu.memory_space<vmem>>, vector<1x3x290xf32>
    %50 = vector.shape_cast %49 : vector<1x3x290xf32> to vector<3x290xf32>
    %51 = vector.broadcast %2 : vector<1x290xf32> to vector<3x290xf32>
    %52 = arith.mulf %50, %51 : vector<3x290xf32>
    %c6 = arith.constant 6 : index
    %c0_37 = arith.constant 0 : index
    %c0_38 = arith.constant 0 : index
    %53 = vector.load %arg3[%c6, %c0_37, %c0_38] : memref<9x128x3xf32, #tpu.memory_space<vmem>>, vector<1x128x3xf32>
    %54 = vector.shape_cast %53 : vector<1x128x3xf32> to vector<128x3xf32>
    %cst_39 = arith.constant dense<0.000000e+00> : vector<128x290xf32>
    %55 = tpu.matmul %54, %52, %cst_39 {dimension_numbers = #tpu.dot_dimension_numbers<[1], [0], [0], [1], [0, 0, 1, 1], [], []>} : vector<128x3xf32>, vector<3x290xf32>, vector<128x290xf32> -> vector<128x290xf32>
    %56 = arith.addf %48, %55 : vector<128x290xf32>
    %c0_40 = arith.constant 0 : index
    %c0_41 = arith.constant 0 : index
    %c33 = arith.constant 33 : index
    %57 = vector.load %arg1[%c0_40, %c0_41, %c33] : memref<1x3x324xf32, #tpu.memory_space<vmem>>, vector<1x3x290xf32>
    %58 = vector.shape_cast %57 : vector<1x3x290xf32> to vector<3x290xf32>
    %c7 = arith.constant 7 : index
    %c0_42 = arith.constant 0 : index
    %c0_43 = arith.constant 0 : index
    %59 = vector.load %arg3[%c7, %c0_42, %c0_43] : memref<9x128x3xf32, #tpu.memory_space<vmem>>, vector<1x128x3xf32>
    %60 = vector.shape_cast %59 : vector<1x128x3xf32> to vector<128x3xf32>
    %cst_44 = arith.constant dense<0.000000e+00> : vector<128x290xf32>
    %61 = tpu.matmul %60, %58, %cst_44 {dimension_numbers = #tpu.dot_dimension_numbers<[1], [0], [0], [1], [0, 0, 1, 1], [], []>} : vector<128x3xf32>, vector<3x290xf32>, vector<128x290xf32> -> vector<128x290xf32>
    %62 = arith.addf %56, %61 : vector<128x290xf32>
    %c0_45 = arith.constant 0 : index
    %c0_46 = arith.constant 0 : index
    %c34 = arith.constant 34 : index
    %63 = vector.load %arg1[%c0_45, %c0_46, %c34] : memref<1x3x324xf32, #tpu.memory_space<vmem>>, vector<1x3x290xf32>
    %64 = vector.shape_cast %63 : vector<1x3x290xf32> to vector<3x290xf32>
    %65 = vector.broadcast %3 : vector<1x290xf32> to vector<3x290xf32>
    %66 = arith.mulf %64, %65 : vector<3x290xf32>
    %c8 = arith.constant 8 : index
    %c0_47 = arith.constant 0 : index
    %c0_48 = arith.constant 0 : index
    %67 = vector.load %arg3[%c8, %c0_47, %c0_48] : memref<9x128x3xf32, #tpu.memory_space<vmem>>, vector<1x128x3xf32>
    %68 = vector.shape_cast %67 : vector<1x128x3xf32> to vector<128x3xf32>
    %cst_49 = arith.constant dense<0.000000e+00> : vector<128x290xf32>
    %69 = tpu.matmul %68, %66, %cst_49 {dimension_numbers = #tpu.dot_dimension_numbers<[1], [0], [0], [1], [0, 0, 1, 1], [], []>} : vector<128x3xf32>, vector<3x290xf32>, vector<128x290xf32> -> vector<128x290xf32>
    %70 = arith.addf %62, %69 : vector<128x290xf32>
    %c0_50 = arith.constant 0 : index
    %c0_51 = arith.constant 0 : index
    %71 = vector.load %arg4[%c0_50, %c0_51] : memref<128x1xf32, #tpu.memory_space<vmem>>, vector<128x1xf32>
    %72 = vector.broadcast %71 : vector<128x1xf32> to vector<128x290xf32>
    %73 = arith.addf %70, %72 : vector<128x290xf32>
    %cst_52 = arith.constant 0.000000e+00 : f32
    %74 = vector.broadcast %cst_52 : f32 to vector<128x290xf32>
    %75 = arith.maximumf %73, %74 : vector<128x290xf32>
    %76 = vector.broadcast %1 : vector<1x290xf32> to vector<128x290xf32>
    %77 = arith.mulf %75, %76 : vector<128x290xf32>
    %78 = vector.extract_strided_slice %77 {offsets = [0, 0], sizes = [128, 162], strides = [1, 1]} : vector<128x290xf32> to vector<128x162xf32>
    %c0_53 = arith.constant 0 : index
    %c0_54 = arith.constant 0 : index
    %c0_55 = arith.constant 0 : index
    %c0_56 = arith.constant 0 : index
    %79 = vector.load %arg6[%c0_53, %c0_54, %c0_55, %c0_56] : memref<1x2x128x162xf32, #tpu.memory_space<vmem>>, vector<1x1x128x162xf32>
    %80 = vector.shape_cast %79 : vector<1x1x128x162xf32> to vector<128x162xf32>
    %81 = vector.shape_cast %78 : vector<128x162xf32> to vector<1x1x128x162xf32>
    tpu.vector_store %arg6[%c0_53, %c0_54, %c0_55, %c0_56], %81 {strides = array<i32>} : memref<1x2x128x162xf32, #tpu.memory_space<vmem>>, vector<1x1x128x162xf32>,
    %82 = vector.extract_strided_slice %77 {offsets = [0, 128], sizes = [128, 162], strides = [1, 1]} : vector<128x290xf32> to vector<128x162xf32>
    %c0_57 = arith.constant 0 : index
    %c1_58 = arith.constant 1 : index
    %c0_59 = arith.constant 0 : index
    %c0_60 = arith.constant 0 : index
    %83 = vector.load %arg6[%c0_57, %c1_58, %c0_59, %c0_60] : memref<1x2x128x162xf32, #tpu.memory_space<vmem>>, vector<1x1x128x162xf32>
    %84 = vector.shape_cast %83 : vector<1x1x128x162xf32> to vector<128x162xf32>
    %85 = vector.shape_cast %82 : vector<128x162xf32> to vector<1x1x128x162xf32>
    tpu.vector_store %arg6[%c0_57, %c1_58, %c0_59, %c0_60], %85 {strides = array<i32>} : memref<1x2x128x162xf32, #tpu.memory_space<vmem>>, vector<1x1x128x162xf32>,
    %c0_61 = arith.constant 0 : index
    %c0_62 = arith.constant 0 : index
    %c0_63 = arith.constant 0 : index
    %86 = vector.load %arg5[%c0_61, %c0_62, %c0_63] : memref<1x4x256xf32, #tpu.memory_space<vmem>>, vector<1x4x256xf32>
    %87 = vector.shape_cast %86 : vector<1x4x256xf32> to vector<4x256xf32>
    %cst_64 = arith.constant dense<0.000000e+00> : vector<4xf32>
    %88 = vector.multi_reduction <add>, %87, %cst_64 [1] : vector<4x256xf32> to vector<4xf32>
    %89 = vector.shape_cast %88 : vector<4xf32> to vector<4x1xf32>
    %cst_65 = arith.constant 2.560000e+02 : f32
    %90 = vector.broadcast %cst_65 : f32 to vector<4x1xf32>
    %91 = arith.divf %89, %90 : vector<4x1xf32>
    %92 = vector.broadcast %91 : vector<4x1xf32> to vector<4x256xf32>
    %93 = arith.subf %87, %92 : vector<4x256xf32>
    %94 = arith.mulf %93, %93 : vector<4x256xf32>
    %cst_66 = arith.constant dense<0.000000e+00> : vector<4xf32>
    %95 = vector.multi_reduction <add>, %94, %cst_66 [1] : vector<4x256xf32> to vector<4xf32>
    %96 = vector.shape_cast %95 : vector<4xf32> to vector<4x1xf32>
    %cst_67 = arith.constant 2.560000e+02 : f32
    %97 = vector.broadcast %cst_67 : f32 to vector<4x1xf32>
    %98 = arith.divf %96, %97 : vector<4x1xf32>
    %c0_68 = arith.constant 0 : index
    %c0_69 = arith.constant 0 : index
    %c0_70 = arith.constant 0 : index
    %99 = vector.load %arg7[%c0_68, %c0_69, %c0_70] : memref<1x4x1xf32, #tpu.memory_space<vmem>>, vector<1x4x1xf32>
    %100 = vector.shape_cast %99 : vector<1x4x1xf32> to vector<4x1xf32>
    %101 = vector.shape_cast %91 : vector<4x1xf32> to vector<1x4x1xf32>
    tpu.vector_store %arg7[%c0_68, %c0_69, %c0_70], %101 {strides = array<i32>} : memref<1x4x1xf32, #tpu.memory_space<vmem>>, vector<1x4x1xf32>,
    %cst_71 = arith.constant 9.99999974E-6 : f32
    %102 = vector.broadcast %cst_71 : f32 to vector<4x1xf32>
    %103 = arith.addf %98, %102 : vector<4x1xf32>
    %104 = math.rsqrt %103 : vector<4x1xf32>
    %c0_72 = arith.constant 0 : index
    %c0_73 = arith.constant 0 : index
    %c0_74 = arith.constant 0 : index
    %105 = vector.load %arg8[%c0_72, %c0_73, %c0_74] : memref<1x4x1xf32, #tpu.memory_space<vmem>>, vector<1x4x1xf32>
    %106 = vector.shape_cast %105 : vector<1x4x1xf32> to vector<4x1xf32>
    %107 = vector.shape_cast %104 : vector<4x1xf32> to vector<1x4x1xf32>
    tpu.vector_store %arg8[%c0_72, %c0_73, %c0_74], %107 {strides = array<i32>} : memref<1x4x1xf32, #tpu.memory_space<vmem>>, vector<1x4x1xf32>,
    return
  }
  func.func @transform_0(%arg0: i32) -> (i32, i32, i32) {
    %c0_i32 = arith.constant 0 : i32
    %c0_i32_0 = arith.constant 0 : i32
    %c0_i32_1 = arith.constant 0 : i32
    return %arg0, %c0_i32, %c0_i32_0 : i32, i32, i32
  }
  func.func @transform_1(%arg0: i32) -> (i32, i32) {
    %c0_i32 = arith.constant 0 : i32
    %c0_i32_0 = arith.constant 0 : i32
    %c0_i32_1 = arith.constant 0 : i32
    return %c0_i32, %c0_i32_0 : i32, i32
  }
  func.func @transform_2(%arg0: i32) -> (i32, i32, i32) {
    %c0_i32 = arith.constant 0 : i32
    %c0_i32_0 = arith.constant 0 : i32
    %c0_i32_1 = arith.constant 0 : i32
    %c0_i32_2 = arith.constant 0 : i32
    return %c0_i32, %c0_i32_0, %c0_i32_1 : i32, i32, i32
  }
  func.func @transform_3(%arg0: i32) -> (i32, i32) {
    %c0_i32 = arith.constant 0 : i32
    %c0_i32_0 = arith.constant 0 : i32
    %c0_i32_1 = arith.constant 0 : i32
    return %c0_i32, %c0_i32_0 : i32, i32
  }
  func.func @transform_4(%arg0: i32) -> (i32, i32, i32) {
    %c0_i32 = arith.constant 0 : i32
    %c0_i32_0 = arith.constant 0 : i32
    %c0_i32_1 = arith.constant 0 : i32
    return %arg0, %c0_i32, %c0_i32_0 : i32, i32, i32
  }
  func.func @transform_5(%arg0: i32) -> (i32, i32, i32, i32) {
    %c0_i32 = arith.constant 0 : i32
    %c0_i32_0 = arith.constant 0 : i32
    %c0_i32_1 = arith.constant 0 : i32
    %c0_i32_2 = arith.constant 0 : i32
    return %arg0, %c0_i32, %c0_i32_0, %c0_i32_1 : i32, i32, i32, i32
  }
  func.func @transform_6(%arg0: i32) -> (i32, i32, i32) {
    %c0_i32 = arith.constant 0 : i32
    %c0_i32_0 = arith.constant 0 : i32
    %c0_i32_1 = arith.constant 0 : i32
    return %arg0, %c0_i32, %c0_i32_0 : i32, i32, i32
  }
  func.func @transform_7(%arg0: i32) -> (i32, i32, i32) {
    %c0_i32 = arith.constant 0 : i32
    %c0_i32_0 = arith.constant 0 : i32
    %c0_i32_1 = arith.constant 0 : i32
    return %arg0, %c0_i32, %c0_i32_0 : i32, i32, i32
  }
}

</mosaic_0001>

<llo_original>
// kernel: tpu_custom_call.1
$region0: #{tpu_custom_call.1}
  #allocation0 [shape = 'u32[]', space=smem, size = 0x4, offset = 0x4, fixed_abs, tag = 'smem constant byte address 0x4 - core index']
  #allocation1 [shape = 'u32[144,128]{1,0:T(1,128)}', space=vmem, size = 0x12000, scoped, tag = 'internal scratch']
  %s0 = inlined_call_operand.vmem [shape: f32[2,3,324], index: 0, kind: input, shape index: {}]
  %s1 = inlined_call_operand.vmem [shape: f32[3,290], index: 1, kind: input, shape index: {}]
  %s2 = inlined_call_operand.vmem [shape: f32[9,128,3], index: 2, kind: input, shape index: {}]
  %s3 = inlined_call_operand.vmem [shape: f32[128,1], index: 3, kind: input, shape index: {}]
  %s4 = inlined_call_operand.vmem [shape: f32[2,4,256], index: 4, kind: input, shape index: {}]
  %s5 = inlined_call_operand.vmem [shape: f32[2,2,128,162], index: 5, kind: output, shape index: {0}]
  %s6 = inlined_call_operand.vmem [shape: f32[2,4,1], index: 6, kind: output, shape index: {1}]
  %s7 = inlined_call_operand.vmem [shape: f32[2,4,1], index: 7, kind: output, shape index: {2}]
  %8 = xla_tuple %s5, %s6, %s7
  %s9 = sld [smem:[#allocation0]]
  $region69: #{tpu_custom_call.1} parent=0
    _
  %s11 = ssub.s32 1, %s9
  %s12 = scalar_select 0, %s11, %s9
  loop: start=0, step=1, limit=4
  $region2: #{tpu_custom_call.1} parent=0 // loop_pre_header
    _
  $region3: #{tpu_custom_call.1} parent=0 // loop_header
    %s14 = sphi 0, %s18
    %p15 = scmp.ge.s32.totalorder %s14, 4
    %s24 = sphi 0, %s26
    %s27 = sphi 0, %s24
    %s28 = sphi 0, %s27
    %s44 = sphi 0, %s28
    %s48 = sphi 0, %s48
    %s50 = sphi 0, %s48
    %s51 = sphi 0, %s50
    %s65 = sphi 0, %s51
    %s69 = sphi 0, %s69
    %s71 = sphi 0, %s69
    %s72 = sphi 0, %s71
    %s86 = sphi 0, %s72
    %s90 = sphi 0, %s90
    %s92 = sphi 0, %s90
    %s93 = sphi 0, %s92
    %s107 = sphi 0, %s93
    %s113 = sphi 0, %s115
    %s116 = sphi 0, %s113
    %s117 = sphi 0, %s116
    %s133 = sphi 0, %s117
    %s139 = sphi 0, %s141
    %s142 = sphi 0, %s139
    %s143 = sphi 0, %s142
    %s159 = sphi 0, %s143
    %s165 = sphi 0, %s167
    %s168 = sphi 0, %s165
    %s169 = sphi 0, %s168
    %s185 = sphi 0, %s169
    %s191 = sphi 0, %s193
    %s194 = sphi 0, %s191
    %s195 = sphi 0, %s194
    %s211 = sphi 0, %s195
  $region4: #{tpu_custom_call.1} parent=0 // loop_header_branch
    %17 = sbr.rel (%p15) target = $region8
  $region5: #{tpu_custom_call.1} parent=0 // loop_body
    %s19 = ssub.s32 %s14, 1
    %s20 = ssub.s32 %s14, 2
    %s21 = sadd.s32 %s14, 1
    %s22 = ssub.s32 %s14, %s21
    %p23 = scmp.eq.s32.totalorder %s22, 0
    %s25 = sadd.s32 %s24, 1
    %s26 = scalar_select %p23, %s24, %s25
    %p29 = pneg %p23
    %p30 = scmp.eq.s32.totalorder %s14, 1
    %p31 = por %p29, %p30
    %p32 = scmp.ne.s32.totalorder %s24, %s27
    %p33 = scmp.eq.s32.totalorder %s14, 0
    %p34 = por %p32, %p33
    %p35 = scmp.ne.s32.totalorder %s24, %s27
    %p36 = scmp.eq.s32.totalorder %s19, 1
    %p37 = por %p35, %p36
    %p38 = scmp.ne.s32.totalorder %s27, %s28
    %p39 = scmp.eq.s32.totalorder %s19, 0
    %p40 = por %p38, %p39
    %p41 = scmp.ne.s32.totalorder %s27, %s28
    %p42 = scmp.eq.s32.totalorder %s20, 1
    %p43 = por %p41, %p42
    %p45 = scmp.ne.s32.totalorder %s28, %s44
    %p46 = scmp.eq.s32.totalorder %s20, 0
    %p47 = por %p45, %p46
    %s49 = sadd.s32 %s48, 1
    %p52 = scmp.eq.s32.totalorder %s14, 1
    %p53 = scmp.ne.s32.totalorder %s48, %s50
    %p54 = scmp.eq.s32.totalorder %s14, 0
    %p55 = por %p53, %p54
    %p56 = scmp.ne.s32.totalorder %s48, %s50
    %p57 = scmp.eq.s32.totalorder %s19, 1
    %p58 = por %p56, %p57
    %p59 = scmp.ne.s32.totalorder %s50, %s51
    %p60 = scmp.eq.s32.totalorder %s19, 0
    %p61 = por %p59, %p60
    %p62 = scmp.ne.s32.totalorder %s50, %s51
    %p63 = scmp.eq.s32.totalorder %s20, 1
    %p64 = por %p62, %p63
    %p66 = scmp.ne.s32.totalorder %s51, %s65
    %p67 = scmp.eq.s32.totalorder %s20, 0
    %p68 = por %p66, %p67
    %s70 = sadd.s32 %s69, 1
    %p73 = scmp.eq.s32.totalorder %s14, 1
    %p74 = scmp.ne.s32.totalorder %s69, %s71
    %p75 = scmp.eq.s32.totalorder %s14, 0
    %p76 = por %p74, %p75
    %p77 = scmp.ne.s32.totalorder %s69, %s71
    %p78 = scmp.eq.s32.totalorder %s19, 1
    %p79 = por %p77, %p78
    %p80 = scmp.ne.s32.totalorder %s71, %s72
    %p81 = scmp.eq.s32.totalorder %s19, 0
    %p82 = por %p80, %p81
    %p83 = scmp.ne.s32.totalorder %s71, %s72
    %p84 = scmp.eq.s32.totalorder %s20, 1
    %p85 = por %p83, %p84
    %p87 = scmp.ne.s32.totalorder %s72, %s86
    %p88 = scmp.eq.s32.totalorder %s20, 0
    %p89 = por %p87, %p88
    %s91 = sadd.s32 %s90, 1
    %p94 = scmp.eq.s32.totalorder %s14, 1
    %p95 = scmp.ne.s32.totalorder %s90, %s92
    %p96 = scmp.eq.s32.totalorder %s14, 0
    %p97 = por %p95, %p96
    %p98 = scmp.ne.s32.totalorder %s90, %s92
    %p99 = scmp.eq.s32.totalorder %s19, 1
    %p100 = por %p98, %p99
    %p101 = scmp.ne.s32.totalorder %s92, %s93
    %p102 = scmp.eq.s32.totalorder %s19, 0
    %p103 = por %p101, %p102
    %p104 = scmp.ne.s32.totalorder %s92, %s93
    %p105 = scmp.eq.s32.totalorder %s20, 1
    %p106 = por %p104, %p105
    %p108 = scmp.ne.s32.totalorder %s93, %s107
    %p109 = scmp.eq.s32.totalorder %s20, 0
    %p110 = por %p108, %p109
    %s111 = ssub.s32 %s14, %s21
    %p112 = scmp.eq.s32.totalorder %s111, 0
    %s114 = sadd.s32 %s113, 1
    %s115 = scalar_select %p112, %s113, %s114
    %p118 = pneg %p112
    %p119 = scmp.eq.s32.totalorder %s14, 1
    %p120 = por %p118, %p119
    %p121 = scmp.ne.s32.totalorder %s113, %s116
    %p122 = scmp.eq.s32.totalorder %s14, 0
    %p123 = por %p121, %p122
    %p124 = scmp.ne.s32.totalorder %s113, %s116
    %p125 = scmp.eq.s32.totalorder %s19, 1
    %p126 = por %p124, %p125
    %p127 = scmp.ne.s32.totalorder %s116, %s117
    %p128 = scmp.eq.s32.totalorder %s19, 0
    %p129 = por %p127, %p128
    %p130 = scmp.ne.s32.totalorder %s116, %s117
    %p131 = scmp.eq.s32.totalorder %s20, 1
    %p132 = por %p130, %p131
    %p134 = scmp.ne.s32.totalorder %s117, %s133
    %p135 = scmp.eq.s32.totalorder %s20, 0
    %p136 = por %p134, %p135
    %s137 = ssub.s32 %s14, %s21
    %p138 = scmp.eq.s32.totalorder %s137, 0
    %s140 = sadd.s32 %s139, 1
    %s141 = scalar_select %p138, %s139, %s140
    %p144 = pneg %p138
    %p145 = scmp.eq.s32.totalorder %s14, 1
    %p146 = por %p144, %p145
    %p147 = scmp.ne.s32.totalorder %s139, %s142
    %p148 = scmp.eq.s32.totalorder %s14, 0
    %p149 = por %p147, %p148
    %p150 = scmp.ne.s32.totalorder %s139, %s142
    %p151 = scmp.eq.s32.totalorder %s19, 1
    %p152 = por %p150, %p151
    %p153 = scmp.ne.s32.totalorder %s142, %s143
    %p154 = scmp.eq.s32.totalorder %s19, 0
    %p155 = por %p153, %p154
    %p156 = scmp.ne.s32.totalorder %s142, %s143
    %p157 = scmp.eq.s32.totalorder %s20, 1
    %p158 = por %p156, %p157
    %p160 = scmp.ne.s32.totalorder %s143, %s159
    %p161 = scmp.eq.s32.totalorder %s20, 0
    %p162 = por %p160, %p161
    %s163 = ssub.s32 %s14, %s21
    %p164 = scmp.eq.s32.totalorder %s163, 0
    %s166 = sadd.s32 %s165, 1
    %s167 = scalar_select %p164, %s165, %s166
    %p170 = pneg %p164
    %p171 = scmp.eq.s32.totalorder %s14, 1
    %p172 = por %p170, %p171
    %p173 = scmp.ne.s32.totalorder %s165, %s168
    %p174 = scmp.eq.s32.totalorder %s14, 0
    %p175 = por %p173, %p174
    %p176 = scmp.ne.s32.totalorder %s165, %s168
    %p177 = scmp.eq.s32.totalorder %s19, 1
    %p178 = por %p176, %p177
    %p179 = scmp.ne.s32.totalorder %s168, %s169
    %p180 = scmp.eq.s32.totalorder %s19, 0
    %p181 = por %p179, %p180
    %p182 = scmp.ne.s32.totalorder %s168, %s169
    %p183 = scmp.eq.s32.totalorder %s20, 1
    %p184 = por %p182, %p183
    %p186 = scmp.ne.s32.totalorder %s169, %s185
    %p187 = scmp.eq.s32.totalorder %s20, 0
    %p188 = por %p186, %p187
    %s189 = ssub.s32 %s14, %s21
    %p190 = scmp.eq.s32.totalorder %s189, 0
    %s192 = sadd.s32 %s191, 1
    %s193 = scalar_select %p190, %s191, %s192
    %p196 = pneg %p190
    %p197 = scmp.eq.s32.totalorder %s14, 1
    %p198 = por %p196, %p197
    %p199 = scmp.ne.s32.totalorder %s191, %s194
    %p200 = scmp.eq.s32.totalorder %s14, 0
    %p201 = por %p199, %p200
    %p202 = scmp.ne.s32.totalorder %s191, %s194
    %p203 = scmp.eq.s32.totalorder %s19, 1
    %p204 = por %p202, %p203
    %p205 = scmp.ne.s32.totalorder %s194, %s195
    %p206 = scmp.eq.s32.totalorder %s19, 0
    %p207 = por %p205, %p206
    %p208 = scmp.ne.s32.totalorder %s194, %s195
    %p209 = scmp.eq.s32.totalorder %s20, 1
    %p210 = por %p208, %p209
    %p212 = scmp.ne.s32.totalorder %s195, %s211
    %p213 = scmp.eq.s32.totalorder %s20, 0
    %p214 = por %p212, %p213
    %p215 = scmp.le.s32.totalorder 1, %s14
    %p216 = scmp.lt.s32.totalorder %s14, 3
    %p217 = pnand %p215, %p216
    %p218 = pneg %p217
    // Predicated region
    $region9: #{tpu_custom_call.1} parent=5 // pred_check
      _
    $region10: #{tpu_custom_call.1} parent=5 // pred_check_branch
      %220 = sbr.rel (%p217) target = $region12
    $region11: #{tpu_custom_call.1} parent=5 // pred_region
      %s221 = ssub.s32 %s14, 1
      // Predicated region
      $region13: #{tpu_custom_call.1} parent=11 // pred_check
        %p222 = pneg %p61
      $region14: #{tpu_custom_call.1} parent=11 // pred_check_branch
        %224 = sbr.rel (%p222) target = $region16
      $region15: #{tpu_custom_call.1} parent=11 // pred_region
        _
      $region16: #{tpu_custom_call.1} parent=11 // pred_fallthru
        _
      // Predicated region
      $region17: #{tpu_custom_call.1} parent=11 // pred_check
        %p225 = pneg %p82
      $region18: #{tpu_custom_call.1} parent=11 // pred_check_branch
        %227 = sbr.rel (%p225) target = $region20
      $region19: #{tpu_custom_call.1} parent=11 // pred_region
        _
      $region20: #{tpu_custom_call.1} parent=11 // pred_fallthru
        _
      // Predicated region
      $region21: #{tpu_custom_call.1} parent=11 // pred_check
        %p228 = pneg %p103
      $region22: #{tpu_custom_call.1} parent=11 // pred_check_branch
        %230 = sbr.rel (%p228) target = $region24
      $region23: #{tpu_custom_call.1} parent=11 // pred_region
        _
      $region24: #{tpu_custom_call.1} parent=11 // pred_fallthru
        _
    $region12: #{tpu_custom_call.1} parent=5 // pred_fallthru
      _
    %p231 = scmp.lt.s32.totalorder %s14, 2
    // Predicated region
    $region25: #{tpu_custom_call.1} parent=5 // pred_check
      %p232 = pneg %p231
    $region26: #{tpu_custom_call.1} parent=5 // pred_check_branch
      %234 = sbr.rel (%p232) target = $region28
    $region27: #{tpu_custom_call.1} parent=5 // pred_region
      // Predicated region
      $region29: #{tpu_custom_call.1} parent=27 // pred_check
        %p235 = pneg %p34
      $region30: #{tpu_custom_call.1} parent=27 // pred_check_branch
        %237 = sbr.rel (%p235) target = $region32
      $region31: #{tpu_custom_call.1} parent=27 // pred_region
        %p238 = scmp.lt.s32.totalorder %s14, 1
        %s239 = scalar_select %p238, %s14, 1
        %s240 = smul.addr %s239, 3
        %s241 = smul.addr %s240, 4
        %s242 = scalar_lea.vmem %s0, %s241
      $region32: #{tpu_custom_call.1} parent=27 // pred_fallthru
        _
      // Predicated region
      $region33: #{tpu_custom_call.1} parent=27 // pred_check
        %p243 = pneg %p123
      $region34: #{tpu_custom_call.1} parent=27 // pred_check_branch
        %245 = sbr.rel (%p243) target = $region36
      $region35: #{tpu_custom_call.1} parent=27 // pred_region
        %p246 = scmp.lt.s32.totalorder %s14, 1
        %s247 = scalar_select %p246, %s14, 1
        %s248 = smul.addr %s247, 2
        %s249 = smul.addr %s248, 4
        %s250 = scalar_lea.vmem %s4, %s249
      $region36: #{tpu_custom_call.1} parent=27 // pred_fallthru
        _
    $region28: #{tpu_custom_call.1} parent=5 // pred_fallthru
      _
    %p251 = scmp.le.s32.totalorder 1, %s14
    %p252 = scmp.lt.s32.totalorder %s14, 3
    %p253 = pnand %p251, %p252
    %p254 = pneg %p253
    // Predicated region
    $region37: #{tpu_custom_call.1} parent=5 // pred_check
      _
    $region38: #{tpu_custom_call.1} parent=5 // pred_check_branch
      %256 = sbr.rel (%p253) target = $region40
    $region39: #{tpu_custom_call.1} parent=5 // pred_region
      %s257 = ssub.s32 %s14, 1
      %p258 = scmp.lt.s32.totalorder %s19, 1
      %s259 = scalar_select %p258, %s19, 1
      %s260 = smul.addr %s259, 3
      %s261 = smul.addr %s260, 4
      %s262 = scalar_lea.vmem %s0, %s261
      %p263 = pneg %p40
      %p264 = pneg %p37
      %p265 = pneg %p61
      %p266 = pneg %p58
      %p267 = pneg %p82
      %p268 = pneg %p79
      %p269 = pneg %p103
      %p270 = pneg %p100
      %p271 = scmp.lt.s32.totalorder %s19, 1
      %s272 = scalar_select %p271, %s19, 1
      %s273 = smul.addr %s272, 2
      %s274 = smul.addr %s273, 4
      %s275 = scalar_lea.vmem %s4, %s274
      %p276 = pneg %p129
      %p277 = pneg %p126
      %p278 = pneg %p155
      %p279 = pneg %p152
      %p280 = scmp.lt.s32.totalorder %s19, 1
      %s281 = scalar_select %p280, %s19, 1
      %s282 = smul.addr %s281, 64
      %s283 = smul.addr %s282, 8
      %s284 = scalar_lea.vmem %s5, %s283
      %p285 = pneg %p181
      %p286 = pneg %p178
      %p287 = scmp.lt.s32.totalorder %s19, 1
      %s288 = scalar_select %p287, %s19, 1
      %s289 = smul.addr %s288, 4
      %s290 = scalar_lea.vmem %s6, %s289
      %p291 = pneg %p207
      %p292 = pneg %p204
      %p293 = scmp.lt.s32.totalorder %s19, 1
      %s294 = scalar_select %p293, %s19, 1
      %s295 = smul.addr %s294, 4
      %s296 = scalar_lea.vmem %s7, %s295
      %p297 = scmp.lt.s32.totalorder %s19, 1
      %s298 = scalar_select %p297, %s19, 1
      %s299 = smul.addr %s298, 3
      %s300 = smul.addr %s299, 4
      %s301 = scalar_lea.vmem %s0, %s300
      %p302 = scmp.lt.s32.totalorder %s19, 1
      %s303 = scalar_select %p302, %s19, 1
      %s304 = smul.addr %s303, 2
      %s305 = smul.addr %s304, 4
      %s306 = scalar_lea.vmem %s4, %s305
      %p307 = scmp.lt.s32.totalorder %s19, 1
      %s308 = scalar_select %p307, %s19, 1
      %s309 = smul.addr %s308, 64
      %s310 = smul.addr %s309, 8
      %s311 = scalar_lea.vmem %s5, %s310
      %p312 = scmp.lt.s32.totalorder %s19, 1
      %s313 = scalar_select %p312, %s19, 1
      %s314 = smul.addr %s313, 4
      %s315 = scalar_lea.vmem %s6, %s314
      %p316 = scmp.lt.s32.totalorder %s19, 1
      %s317 = scalar_select %p316, %s19, 1
      %s318 = smul.addr %s317, 4
      %s319 = scalar_lea.vmem %s7, %s318
      %v320 = vld [vmem:[%s1] sm:$0x77]
      %v321 = vld [vmem:[%s1 + $0x8] sm:$0x7]
      %v322 = vld [vmem:[%s301] sm:$0x77]
      %v323 = vld [vmem:[%s301 + $0x8] sm:$0x7]
      %v326 = vlaneseq
      %v327 = vshrl.u32 %v326, 7
      %v328 = vsub.s32 1, %v327
      %v329 = vrot.slane %v320, %v328
      %v330 = vlaneseq
      %v331 = vshrl.u32 %v330, 7
      %v332 = vsub.s32 5, %v331
      %v333 = vrot.slane %v320, %v332
      %v334 = vlaneseq
      %v335 = vshrl.u32 %v334, 7
      %v336 = vsub.s32 1, %v335
      %v337 = vrot.slane %v321, %v336
      %v341 = vlaneseq
      %v342 = vshrl.u32 %v341, 7
      %v343 = vsub.s32 1, %v342
      %v344 = vrot.slane %v329, %v343
      %v345 = vlaneseq
      %v346 = vshrl.u32 %v345, 7
      %v347 = vsub.s32 1, %v346
      %v348 = vrot.slane %v333, %v347
      %v349 = vlaneseq
      %v350 = vshrl.u32 %v349, 7
      %v351 = vsub.s32 1, %v350
      %v352 = vrot.slane %v337, %v351
      %v356 = vcombine.low %v344, %v348
      %v358 = vmul.f32 %v322, %v356
      %v359 = vmul.f32 %v323, %v352
      %v360 = vld [vmem:[%s2] sm:$0xff]
      %v361 = vld [vmem:[%s2 + $0x8] sm:$0xff]
      %v362 = vld [vmem:[%s2 + $0x10] sm:$0xff]
      %v363 = vld [vmem:[%s2 + $0x18] sm:$0xff]
      %v364 = vld [vmem:[%s2 + $0x20] sm:$0xff]
      %v365 = vld [vmem:[%s2 + $0x28] sm:$0xff]
      %v366 = vld [vmem:[%s2 + $0x30] sm:$0xff]
      %v367 = vld [vmem:[%s2 + $0x38] sm:$0xff]
      %v368 = vld [vmem:[%s2 + $0x40] sm:$0xff]
      %v369 = vld [vmem:[%s2 + $0x48] sm:$0xff]
      %v370 = vld [vmem:[%s2 + $0x50] sm:$0xff]
      %v371 = vld [vmem:[%s2 + $0x58] sm:$0xff]
      %v372 = vld [vmem:[%s2 + $0x60] sm:$0xff]
      %v373 = vld [vmem:[%s2 + $0x68] sm:$0xff]
      %v374 = vld [vmem:[%s2 + $0x70] sm:$0xff]
      %v375 = vld [vmem:[%s2 + $0x78] sm:$0xff]
      %s376 = scalar_lea.vmem %s2, 128
      %v377 = vld [vmem:[%s376] sm:$0xff]
      %v378 = vld [vmem:[%s376 + $0x8] sm:$0xff]
      %v379 = vld [vmem:[%s376 + $0x10] sm:$0xff]
      %v380 = vld [vmem:[%s376 + $0x18] sm:$0xff]
      %v381 = vld [vmem:[%s376 + $0x20] sm:$0xff]
      %v382 = vld [vmem:[%s376 + $0x28] sm:$0xff]
      %v383 = vld [vmem:[%s376 + $0x30] sm:$0xff]
      %v384 = vld [vmem:[%s376 + $0x38] sm:$0xff]
      %v385 = vld [vmem:[%s376 + $0x40] sm:$0xff]
      %v386 = vld [vmem:[%s376 + $0x48] sm:$0xff]
      %v387 = vld [vmem:[%s376 + $0x50] sm:$0xff]
      %v388 = vld [vmem:[%s376 + $0x58] sm:$0xff]
      %v389 = vld [vmem:[%s376 + $0x60] sm:$0xff]
      %v390 = vld [vmem:[%s376 + $0x68] sm:$0xff]
      %v391 = vld [vmem:[%s376 + $0x70] sm:$0xff]
      %v392 = vld [vmem:[%s376 + $0x78] sm:$0xff]
      %v395 = vcombine.high %v322, %v322
      %396 = vrot.lane.b32.xlu0 %v322, 127
      %v397 = vpop.permute.xlu0 %396
      %398 = vrot.lane.b32.xlu0 %v395, 127
      %v399 = vpop.permute.xlu0 %398
      %400 = vrot.lane.b32.xlu0 %v323, 127
      %v401 = vpop.permute.xlu0 %400
      %vm402 = vcmask 1039360
      %v403 = vsel %vm402, %v397, %v399
      %v404 = vsel %vm402, %v399, %v401
      %vm405 = vcmask 23552
      %v407 = vsel %vm405, %v377, 0
      %v410 = vsel %vm405, %v378, 0
      %v413 = vsel %vm405, %v379, 0
      %v416 = vsel %vm405, %v380, 0
      %v419 = vsel %vm405, %v381, 0
      %v422 = vsel %vm405, %v382, 0
      %v425 = vsel %vm405, %v383, 0
      %v428 = vsel %vm405, %v384, 0
      %v431 = vsel %vm405, %v385, 0
      %v434 = vsel %vm405, %v386, 0
      %v437 = vsel %vm405, %v387, 0
      %v440 = vsel %vm405, %v388, 0
      %v443 = vsel %vm405, %v389, 0
      %v446 = vsel %vm405, %v390, 0
      %v449 = vsel %vm405, %v391, 0
      %v452 = vsel %vm405, %v392, 0
      %vm454 = vcmask 1042432
      %v455 = vsel %vm454, %v403, 0
      %v457 = vsel %vm454, %v404, 0
      %v459 = vsel %vm454, %v401, 0
      %461 = vmatprep.subr.mxu0 %v457
      %462 = vmatpush1.msra.mxu0 %v455
      %463 = vmatprep.subr.mxu0 0.0
      %464 = vmatpush1.msra.mxu0 0.0
      %465 = vmatprep.subr.mxu0 0.0
      %466 = vmatpush1.msra.mxu0 0.0
      %467 = vmatprep.subr.mxu0 0.0
      %468 = vmatpush1.msra.mxu0 0.0
      %469 = vmatprep.subr.mxu0 0.0
      %470 = vmatpush1.msra.mxu0 0.0
      %471 = vmatprep.subr.mxu0 0.0
      %472 = vmatpush1.msra.mxu0 0.0
      %473 = vmatprep.subr.mxu0 0.0
      %474 = vmatpush1.msra.mxu0 0.0
      %475 = vmatprep.subr.mxu0 0.0
      %476 = vmatpush1.msra.mxu0 0.0
      %477 = vmatprep.subr.mxu0 0.0
      %478 = vmatpush1.msra.mxu0 0.0
      %479 = vmatprep.subr.mxu0 0.0
      %480 = vmatpush1.msra.mxu0 0.0
      %481 = vmatprep.subr.mxu0 0.0
      %482 = vmatpush1.msra.mxu0 0.0
      %483 = vmatprep.subr.mxu0 0.0
      %484 = vmatpush1.msra.mxu0 0.0
      %485 = vmatprep.subr.mxu0 0.0
      %486 = vmatpush1.msra.mxu0 0.0
      %487 = vmatprep.subr.mxu0 0.0
      %488 = vmatpush1.msra.mxu0 0.0
      %489 = vmatprep.subr.mxu0 0.0
      %490 = vmatpush1.msra.mxu0 0.0
      %491 = vmatprep.subr.mxu0 0.0
      %492 = vmatpush1.msra.mxu0 0.0
      %493 = vmatprep.subr.mxu0 0.0
      %494 = vmatpush1.msra.mxu0 0.0
      %495 = vmatprep.subr.mxu0 0.0
      %496 = vmatpush1.msra.mxu0 0.0
      %497 = vmatprep.subr.mxu0 0.0
      %498 = vmatpush1.msra.mxu0 0.0
      %499 = vmatprep.subr.mxu0 0.0
      %500 = vmatpush1.msra.mxu0 0.0
      %501 = vmatprep.subr.mxu0 0.0
      %502 = vmatpush1.msra.mxu0 0.0
      %503 = vmatprep.subr.mxu0 0.0
      %504 = vmatpush1.msra.mxu0 0.0
      %505 = vmatprep.subr.mxu0 0.0
      %506 = vmatpush1.msra.mxu0 0.0
      %507 = vmatprep.subr.mxu0 0.0
      %508 = vmatpush1.msra.mxu0 0.0
      %509 = vmatprep.subr.mxu0 0.0
      %510 = vmatpush1.msra.mxu0 0.0
      %511 = vmatprep.subr.mxu0 0.0
      %512 = vmatpush1.msra.mxu0 0.0
      %513 = vmatprep.subr.mxu0 0.0
      %514 = vmatpush1.msra.mxu0 0.0
      %515 = vmatprep.subr.mxu0 0.0
      %516 = vmatpush1.msra.mxu0 0.0
      %517 = vmatprep.subr.mxu0 0.0
      %518 = vmatpush1.msra.mxu0 0.0
      %519 = vmatprep.subr.mxu0 0.0
      %520 = vmatpush1.msra.mxu0 0.0
      %521 = vmatprep.subr.mxu0 0.0
      %522 = vmatpush1.msra.mxu0 0.0
      %523 = vmatprep.subr.mxu0 0.0
      %524 = vmatpush1.msra.mxu0 0.0
      %525 = vmatprep.mubr.f32.mxu0 0.0
      %526 = vmatmul.mubr.f32.gmra.mrb[0].mxu0 %v407
      %v527 = vpop.f32.mrb[0].mxu0
      %v528 = vadd.f32 0.0, %v527
      %v529 = vpop.f32.mrb[0].mxu0
      %v530 = vadd.f32 0.0, %v529
      %531 = vmatprep.mubr.f32.mxu0 0.0
      %532 = vmatmul.mubr.f32.gmra.mrb[0].mxu0 %v410
      %v533 = vpop.f32.mrb[0].mxu0
      %v534 = vadd.f32 0.0, %v533
      %v535 = vpop.f32.mrb[0].mxu0
      %v536 = vadd.f32 0.0, %v535
      %537 = vmatprep.mubr.f32.mxu0 0.0
      %538 = vmatmul.mubr.f32.gmra.mrb[0].mxu0 %v413
      %v539 = vpop.f32.mrb[0].mxu0
      %v540 = vadd.f32 0.0, %v539
      %v541 = vpop.f32.mrb[0].mxu0
      %v542 = vadd.f32 0.0, %v541
      %543 = vmatprep.mubr.f32.mxu0 0.0
      %544 = vmatmul.mubr.f32.gmra.mrb[0].mxu0 %v416
      %v545 = vpop.f32.mrb[0].mxu0
      %v546 = vadd.f32 0.0, %v545
      %v547 = vpop.f32.mrb[0].mxu0
      %v548 = vadd.f32 0.0, %v547
      %549 = vmatprep.mubr.f32.mxu0 0.0
      %550 = vmatmul.mubr.f32.gmra.mrb[0].mxu0 %v419
      %v551 = vpop.f32.mrb[0].mxu0
      %v552 = vadd.f32 0.0, %v551
      %v553 = vpop.f32.mrb[0].mxu0
      %v554 = vadd.f32 0.0, %v553
      %555 = vmatprep.mubr.f32.mxu0 0.0
      %556 = vmatmul.mubr.f32.gmra.mrb[0].mxu0 %v422
      %v557 = vpop.f32.mrb[0].mxu0
      %v558 = vadd.f32 0.0, %v557
      %v559 = vpop.f32.mrb[0].mxu0
      %v560 = vadd.f32 0.0, %v559
      %561 = vmatprep.mubr.f32.mxu0 0.0
      %562 = vmatmul.mubr.f32.gmra.mrb[0].mxu0 %v425
      %v563 = vpop.f32.mrb[0].mxu0
      %v564 = vadd.f32 0.0, %v563
      %v565 = vpop.f32.mrb[0].mxu0
      %v566 = vadd.f32 0.0, %v565
      %567 = vmatprep.mubr.f32.mxu0 0.0
      %568 = vmatmul.mubr.f32.gmra.mrb[0].mxu0 %v428
      %v569 = vpop.f32.mrb[0].mxu0
      %v570 = vadd.f32 0.0, %v569
      %v571 = vpop.f32.mrb[0].mxu0
      %v572 = vadd.f32 0.0, %v571
      %573 = vmatprep.mubr.f32.mxu0 0.0
      %574 = vmatmul.mubr.f32.gmra.mrb[0].mxu0 %v431
      %v575 = vpop.f32.mrb[0].mxu0
      %v576 = vadd.f32 0.0, %v575
      %v577 = vpop.f32.mrb[0].mxu0
      %v578 = vadd.f32 0.0, %v577
      %579 = vmatprep.mubr.f32.mxu0 0.0
      %580 = vmatmul.mubr.f32.gmra.mrb[0].mxu0 %v434
      %v581 = vpop.f32.mrb[0].mxu0
      %v582 = vadd.f32 0.0, %v581
      %v583 = vpop.f32.mrb[0].mxu0
      %v584 = vadd.f32 0.0, %v583
      %585 = vmatprep.mubr.f32.mxu0 0.0
      %586 = vmatmul.mubr.f32.gmra.mrb[0].mxu0 %v437
      %v587 = vpop.f32.mrb[0].mxu0
      %v588 = vadd.f32 0.0, %v587
      %v589 = vpop.f32.mrb[0].mxu0
      %v590 = vadd.f32 0.0, %v589
      %591 = vmatprep.mubr.f32.mxu0 0.0
      %592 = vmatmul.mubr.f32.gmra.mrb[0].mxu0 %v440
      %v593 = vpop.f32.mrb[0].mxu0
      %v594 = vadd.f32 0.0, %v593
      %v595 = vpop.f32.mrb[0].mxu0
      %v596 = vadd.f32 0.0, %v595
      %597 = vmatprep.mubr.f32.mxu0 0.0
      %598 = vmatmul.mubr.f32.gmra.mrb[0].mxu0 %v443
      %v599 = vpop.f32.mrb[0].mxu0
      %v600 = vadd.f32 0.0, %v599
      %v601 = vpop.f32.mrb[0].mxu0
      %v602 = vadd.f32 0.0, %v601
      %603 = vmatprep.mubr.f32.mxu0 0.0
      %604 = vmatmul.mubr.f32.gmra.mrb[0].mxu0 %v446
      %v605 = vpop.f32.mrb[0].mxu0
      %v606 = vadd.f32 0.0, %v605
      %v607 = vpop.f32.mrb[0].mxu0
      %v608 = vadd.f32 0.0, %v607
      %609 = vmatprep.mubr.f32.mxu0 0.0
      %610 = vmatmul.mubr.f32.gmra.mrb[0].mxu0 %v449
      %v611 = vpop.f32.mrb[0].mxu0
      %v612 = vadd.f32 0.0, %v611
      %v613 = vpop.f32.mrb[0].mxu0
      %v614 = vadd.f32 0.0, %v613
      %615 = vmatprep.mubr.f32.mxu0 0.0
      %616 = vmatmul.mubr.f32.gmra.mrb[0].mxu0 %v452
      %v617 = vpop.f32.mrb[0].mxu0
      %v618 = vadd.f32 0.0, %v617
      %v619 = vpop.f32.mrb[0].mxu0
      %v620 = vadd.f32 0.0, %v619
      %621 = vdwg.mxu0
      %622 = vmatprep.subr.mxu0 0.0
      %623 = vmatpush1.msra.mxu0 %v459
      %624 = vmatprep.subr.mxu0 0.0
      %625 = vmatpush1.msra.mxu0 0.0
      %626 = vmatprep.subr.mxu0 0.0
      %627 = vmatpush1.msra.mxu0 0.0
      %628 = vmatprep.subr.mxu0 0.0
      %629 = vmatpush1.msra.mxu0 0.0
      %630 = vmatprep.subr.mxu0 0.0
      %631 = vmatpush1.msra.mxu0 0.0
      %632 = vmatprep.subr.mxu0 0.0
      %633 = vmatpush1.msra.mxu0 0.0
      %634 = vmatprep.subr.mxu0 0.0
      %635 = vmatpush1.msra.mxu0 0.0
      %636 = vmatprep.subr.mxu0 0.0
      %637 = vmatpush1.msra.mxu0 0.0
      %638 = vmatprep.subr.mxu0 0.0
      %639 = vmatpush1.msra.mxu0 0.0
      %640 = vmatprep.subr.mxu0 0.0
      %641 = vmatpush1.msra.mxu0 0.0
      %642 = vmatprep.subr.mxu0 0.0
      %643 = vmatpush1.msra.mxu0 0.0
      %644 = vmatprep.subr.mxu0 0.0
      %645 = vmatpush1.msra.mxu0 0.0
      %646 = vmatprep.subr.mxu0 0.0
      %647 = vmatpush1.msra.mxu0 0.0
      %648 = vmatprep.subr.mxu0 0.0
      %649 = vmatpush1.msra.mxu0 0.0
      %650 = vmatprep.subr.mxu0 0.0
      %651 = vmatpush1.msra.mxu0 0.0
      %652 = vmatprep.subr.mxu0 0.0
      %653 = vmatpush1.msra.mxu0 0.0
      %654 = vmatprep.subr.mxu0 0.0
      %655 = vmatpush1.msra.mxu0 0.0
      %656 = vmatprep.subr.mxu0 0.0
      %657 = vmatpush1.msra.mxu0 0.0
      %658 = vmatprep.subr.mxu0 0.0
      %659 = vmatpush1.msra.mxu0 0.0
      %660 = vmatprep.subr.mxu0 0.0
      %661 = vmatpush1.msra.mxu0 0.0
      %662 = vmatprep.subr.mxu0 0.0
      %663 = vmatpush1.msra.mxu0 0.0
      %664 = vmatprep.subr.mxu0 0.0
      %665 = vmatpush1.msra.mxu0 0.0
      %666 = vmatprep.subr.mxu0 0.0
      %667 = vmatpush1.msra.mxu0 0.0
      %668 = vmatprep.subr.mxu0 0.0
      %669 = vmatpush1.msra.mxu0 0.0
      %670 = vmatprep.subr.mxu0 0.0
      %671 = vmatpush1.msra.mxu0 0.0
      %672 = vmatprep.subr.mxu0 0.0
      %673 = vmatpush1.msra.mxu0 0.0
      %674 = vmatprep.subr.mxu0 0.0
      %675 = vmatpush1.msra.mxu0 0.0
      %676 = vmatprep.subr.mxu0 0.0
      %677 = vmatpush1.msra.mxu0 0.0
      %678 = vmatprep.subr.mxu0 0.0
      %679 = vmatpush1.msra.mxu0 0.0
      %680 = vmatprep.subr.mxu0 0.0
      %681 = vmatpush1.msra.mxu0 0.0
      %682 = vmatprep.subr.mxu0 0.0
      %683 = vmatpush1.msra.mxu0 0.0
      %684 = vmatprep.subr.mxu0 0.0
      %685 = vmatpush1.msra.mxu0 0.0
      %686 = vmatprep.mubr.f32.mxu0 0.0
      %687 = vmatmul.mubr.f32.gmra.mrb[0].mxu0 %v407
      %v688 = vpop.f32.mrb[0].mxu0
      %v689 = vadd.f32 0.0, %v688
      %v690 = vpop.f32.mrb[0].mxu0
      %691 = vmatprep.mubr.f32.mxu0 0.0
      %692 = vmatmul.mubr.f32.gmra.mrb[0].mxu0 %v410
      %v693 = vpop.f32.mrb[0].mxu0
      %v694 = vadd.f32 0.0, %v693
      %v695 = vpop.f32.mrb[0].mxu0
      %696 = vmatprep.mubr.f32.mxu0 0.0
      %697 = vmatmul.mubr.f32.gmra.mrb[0].mxu0 %v413
      %v698 = vpop.f32.mrb[0].mxu0
      %v699 = vadd.f32 0.0, %v698
      %v700 = vpop.f32.mrb[0].mxu0
      %701 = vmatprep.mubr.f32.mxu0 0.0
      %702 = vmatmul.mubr.f32.gmra.mrb[0].mxu0 %v416
      %v703 = vpop.f32.mrb[0].mxu0
      %v704 = vadd.f32 0.0, %v703
      %v705 = vpop.f32.mrb[0].mxu0
      %706 = vmatprep.mubr.f32.mxu0 0.0
      %707 = vmatmul.mubr.f32.gmra.mrb[0].mxu0 %v419
      %v708 = vpop.f32.mrb[0].mxu0
      %v709 = vadd.f32 0.0, %v708
      %v710 = vpop.f32.mrb[0].mxu0
      %711 = vmatprep.mubr.f32.mxu0 0.0
      %712 = vmatmul.mubr.f32.gmra.mrb[0].mxu0 %v422
      %v713 = vpop.f32.mrb[0].mxu0
      %v714 = vadd.f32 0.0, %v713
      %v715 = vpop.f32.mrb[0].mxu0
      %716 = vmatprep.mubr.f32.mxu0 0.0
      %717 = vmatmul.mubr.f32.gmra.mrb[0].mxu0 %v425
      %v718 = vpop.f32.mrb[0].mxu0
      %v719 = vadd.f32 0.0, %v718
      %v720 = vpop.f32.mrb[0].mxu0
      %721 = vmatprep.mubr.f32.mxu0 0.0
      %722 = vmatmul.mubr.f32.gmra.mrb[0].mxu0 %v428
      %v723 = vpop.f32.mrb[0].mxu0
      %v724 = vadd.f32 0.0, %v723
      %v725 = vpop.f32.mrb[0].mxu0
      %726 = vmatprep.mubr.f32.mxu0 0.0
      %727 = vmatmul.mubr.f32.gmra.mrb[0].mxu0 %v431
      %v728 = vpop.f32.mrb[0].mxu0
      %v729 = vadd.f32 0.0, %v728
      %v730 = vpop.f32.mrb[0].mxu0
      %731 = vmatprep.mubr.f32.mxu0 0.0
      %732 = vmatmul.mubr.f32.gmra.mrb[0].mxu0 %v434
      %v733 = vpop.f32.mrb[0].mxu0
      %v734 = vadd.f32 0.0, %v733
      %v735 = vpop.f32.mrb[0].mxu0
      %736 = vmatprep.mubr.f32.mxu0 0.0
      %737 = vmatmul.mubr.f32.gmra.mrb[0].mxu0 %v437
      %v738 = vpop.f32.mrb[0].mxu0
      %v739 = vadd.f32 0.0, %v738
      %v740 = vpop.f32.mrb[0].mxu0
      %741 = vmatprep.mubr.f32.mxu0 0.0
      %742 = vmatmul.mubr.f32.gmra.mrb[0].mxu0 %v440
      %v743 = vpop.f32.mrb[0].mxu0
      %v744 = vadd.f32 0.0, %v743
      %v745 = vpop.f32.mrb[0].mxu0
      %746 = vmatprep.mubr.f32.mxu0 0.0
      %747 = vmatmul.mubr.f32.gmra.mrb[0].mxu0 %v443
      %v748 = vpop.f32.mrb[0].mxu0
      %v749 = vadd.f32 0.0, %v748
      %v750 = vpop.f32.mrb[0].mxu0
      %751 = vmatprep.mubr.f32.mxu0 0.0
      %752 = vmatmul.mubr.f32.gmra.mrb[0].mxu0 %v446
      %v753 = vpop.f32.mrb[0].mxu0
      %v754 = vadd.f32 0.0, %v753
      %v755 = vpop.f32.mrb[0].mxu0
      %756 = vmatprep.mubr.f32.mxu0 0.0
      %757 = vmatmul.mubr.f32.gmra.mrb[0].mxu0 %v449
      %v758 = vpop.f32.mrb[0].mxu0
      %v759 = vadd.f32 0.0, %v758
      %v760 = vpop.f32.mrb[0].mxu0
      %761 = vmatprep.mubr.f32.mxu0 0.0
      %762 = vmatmul.mubr.f32.gmra.mrb[0].mxu0 %v452
      %v763 = vpop.f32.mrb[0].mxu0
      %v764 = vadd.f32 0.0, %v763
      %v765 = vpop.f32.mrb[0].mxu0
      %766 = vdwg.mxu0
      %v769 = vcombine.high %v358, %v358
      %v771 = vsel %vm405, %v360, 0
      %v774 = vsel %vm405, %v361, 0
      %v777 = vsel %vm405, %v362, 0
      %v780 = vsel %vm405, %v363, 0
      %v783 = vsel %vm405, %v364, 0
      %v786 = vsel %vm405, %v365, 0
      %v789 = vsel %vm405, %v366, 0
      %v792 = vsel %vm405, %v367, 0
      %v795 = vsel %vm405, %v368, 0
      %v798 = vsel %vm405, %v369, 0
      %v801 = vsel %vm405, %v370, 0
      %v804 = vsel %vm405, %v371, 0
      %v807 = vsel %vm405, %v372, 0
      %v810 = vsel %vm405, %v373, 0
      %v813 = vsel %vm405, %v374, 0
      %v816 = vsel %vm405, %v375, 0
      %v818 = vsel %vm454, %v358, 0
      %v820 = vsel %vm454, %v769, 0
      %v822 = vsel %vm454, %v359, 0
      %824 = vmatprep.subr.mxu0 %v820
      %825 = vmatpush1.msra.mxu0 %v818
      %826 = vmatprep.subr.mxu0 0.0
      %827 = vmatpush1.msra.mxu0 0.0
      %828 = vmatprep.subr.mxu0 0.0
      %829 = vmatpush1.msra.mxu0 0.0
      %830 = vmatprep.subr.mxu0 0.0
      %831 = vmatpush1.msra.mxu0 0.0
      %832 = vmatprep.subr.mxu0 0.0
      %833 = vmatpush1.msra.mxu0 0.0
      %834 = vmatprep.subr.mxu0 0.0
      %835 = vmatpush1.msra.mxu0 0.0
      %836 = vmatprep.subr.mxu0 0.0
      %837 = vmatpush1.msra.mxu0 0.0
      %838 = vmatprep.subr.mxu0 0.0
      %839 = vmatpush1.msra.mxu0 0.0
      %840 = vmatprep.subr.mxu0 0.0
      %841 = vmatpush1.msra.mxu0 0.0
      %842 = vmatprep.subr.mxu0 0.0
      %843 = vmatpush1.msra.mxu0 0.0
      %844 = vmatprep.subr.mxu0 0.0
      %845 = vmatpush1.msra.mxu0 0.0
      %846 = vmatprep.subr.mxu0 0.0
      %847 = vmatpush1.msra.mxu0 0.0
      %848 = vmatprep.subr.mxu0 0.0
      %849 = vmatpush1.msra.mxu0 0.0
      %850 = vmatprep.subr.mxu0 0.0
      %851 = vmatpush1.msra.mxu0 0.0
      %852 = vmatprep.subr.mxu0 0.0
      %853 = vmatpush1.msra.mxu0 0.0
      %854 = vmatprep.subr.mxu0 0.0
      %855 = vmatpush1.msra.mxu0 0.0
      %856 = vmatprep.subr.mxu0 0.0
      %857 = vmatpush1.msra.mxu0 0.0
      %858 = vmatprep.subr.mxu0 0.0
      %859 = vmatpush1.msra.mxu0 0.0
      %860 = vmatprep.subr.mxu0 0.0
      %861 = vmatpush1.msra.mxu0 0.0
      %862 = vmatprep.subr.mxu0 0.0
      %863 = vmatpush1.msra.mxu0 0.0
      %864 = vmatprep.subr.mxu0 0.0
      %865 = vmatpush1.msra.mxu0 0.0
      %866 = vmatprep.subr.mxu0 0.0
      %867 = vmatpush1.msra.mxu0 0.0
      %868 = vmatprep.subr.mxu0 0.0
      %869 = vmatpush1.msra.mxu0 0.0
      %870 = vmatprep.subr.mxu0 0.0
      %871 = vmatpush1.msra.mxu0 0.0
      %872 = vmatprep.subr.mxu0 0.0
      %873 = vmatpush1.msra.mxu0 0.0
      %874 = vmatprep.subr.mxu0 0.0
      %875 = vmatpush1.msra.mxu0 0.0
      %876 = vmatprep.subr.mxu0 0.0
      %877 = vmatpush1.msra.mxu0 0.0
      %878 = vmatprep.subr.mxu0 0.0
      %879 = vmatpush1.msra.mxu0 0.0
      %880 = vmatprep.subr.mxu0 0.0
      %881 = vmatpush1.msra.mxu0 0.0
      %882 = vmatprep.subr.mxu0 0.0
      %883 = vmatpush1.msra.mxu0 0.0
      %884 = vmatprep.subr.mxu0 0.0
      %885 = vmatpush1.msra.mxu0 0.0
      %886 = vmatprep.subr.mxu0 0.0
      %887 = vmatpush1.msra.mxu0 0.0
      %888 = vmatprep.mubr.f32.mxu0 0.0
      %889 = vmatmul.mubr.f32.gmra.mrb[0].mxu0 %v771
      %v890 = vpop.f32.mrb[0].mxu0
      %v891 = vadd.f32 %v528, %v890
      %v892 = vpop.f32.mrb[0].mxu0
      %v893 = vadd.f32 %v530, %v892
      %894 = vmatprep.mubr.f32.mxu0 0.0
      %895 = vmatmul.mubr.f32.gmra.mrb[0].mxu0 %v774
      %v896 = vpop.f32.mrb[0].mxu0
      %v897 = vadd.f32 %v534, %v896
      %v898 = vpop.f32.mrb[0].mxu0
      %v899 = vadd.f32 %v536, %v898
      %900 = vmatprep.mubr.f32.mxu0 0.0
      %901 = vmatmul.mubr.f32.gmra.mrb[0].mxu0 %v777
      %v902 = vpop.f32.mrb[0].mxu0
      %v903 = vadd.f32 %v540, %v902
      %v904 = vpop.f32.mrb[0].mxu0
      %v905 = vadd.f32 %v542, %v904
      %906 = vmatprep.mubr.f32.mxu0 0.0
      %907 = vmatmul.mubr.f32.gmra.mrb[0].mxu0 %v780
      %v908 = vpop.f32.mrb[0].mxu0
      %v909 = vadd.f32 %v546, %v908
      %v910 = vpop.f32.mrb[0].mxu0
      %v911 = vadd.f32 %v548, %v910
      %912 = vmatprep.mubr.f32.mxu0 0.0
      %913 = vmatmul.mubr.f32.gmra.mrb[0].mxu0 %v783
      %v914 = vpop.f32.mrb[0].mxu0
      %v915 = vadd.f32 %v552, %v914
      %v916 = vpop.f32.mrb[0].mxu0
      %v917 = vadd.f32 %v554, %v916
      %918 = vmatprep.mubr.f32.mxu0 0.0
      %919 = vmatmul.mubr.f32.gmra.mrb[0].mxu0 %v786
      %v920 = vpop.f32.mrb[0].mxu0
      %v921 = vadd.f32 %v558, %v920
      %v922 = vpop.f32.mrb[0].mxu0
      %v923 = vadd.f32 %v560, %v922
      %924 = vmatprep.mubr.f32.mxu0 0.0
      %925 = vmatmul.mubr.f32.gmra.mrb[0].mxu0 %v789
      %v926 = vpop.f32.mrb[0].mxu0
      %v927 = vadd.f32 %v564, %v926
      %v928 = vpop.f32.mrb[0].mxu0
      %v929 = vadd.f32 %v566, %v928
      %930 = vmatprep.mubr.f32.mxu0 0.0
      %931 = vmatmul.mubr.f32.gmra.mrb[0].mxu0 %v792
      %v932 = vpop.f32.mrb[0].mxu0
      %v933 = vadd.f32 %v570, %v932
      %v934 = vpop.f32.mrb[0].mxu0
      %v935 = vadd.f32 %v572, %v934
      %936 = vmatprep.mubr.f32.mxu0 0.0
      %937 = vmatmul.mubr.f32.gmra.mrb[0].mxu0 %v795
      %v938 = vpop.f32.mrb[0].mxu0
      %v939 = vadd.f32 %v576, %v938
      %v940 = vpop.f32.mrb[0].mxu0
      %v941 = vadd.f32 %v578, %v940
      %942 = vmatprep.mubr.f32.mxu0 0.0
      %943 = vmatmul.mubr.f32.gmra.mrb[0].mxu0 %v798
      %v944 = vpop.f32.mrb[0].mxu0
      %v945 = vadd.f32 %v582, %v944
      %v946 = vpop.f32.mrb[0].mxu0
      %v947 = vadd.f32 %v584, %v946
      %948 = vmatprep.mubr.f32.mxu0 0.0
      %949 = vmatmul.mubr.f32.gmra.mrb[0].mxu0 %v801
      %v950 = vpop.f32.mrb[0].mxu0
      %v951 = vadd.f32 %v588, %v950
      %v952 = vpop.f32.mrb[0].mxu0
      %v953 = vadd.f32 %v590, %v952
      %954 = vmatprep.mubr.f32.mxu0 0.0
      %955 = vmatmul.mubr.f32.gmra.mrb[0].mxu0 %v804
      %v956 = vpop.f32.mrb[0].mxu0
      %v957 = vadd.f32 %v594, %v956
      %v958 = vpop.f32.mrb[0].mxu0
      %v959 = vadd.f32 %v596, %v958
      %960 = vmatprep.mubr.f32.mxu0 0.0
      %961 = vmatmul.mubr.f32.gmra.mrb[0].mxu0 %v807
      %v962 = vpop.f32.mrb[0].mxu0
      %v963 = vadd.f32 %v600, %v962
      %v964 = vpop.f32.mrb[0].mxu0
      %v965 = vadd.f32 %v602, %v964
      %966 = vmatprep.mubr.f32.mxu0 0.0
      %967 = vmatmul.mubr.f32.gmra.mrb[0].mxu0 %v810
      %v968 = vpop.f32.mrb[0].mxu0
      %v969 = vadd.f32 %v606, %v968
      %v970 = vpop.f32.mrb[0].mxu0
      %v971 = vadd.f32 %v608, %v970
      %972 = vmatprep.mubr.f32.mxu0 0.0
      %973 = vmatmul.mubr.f32.gmra.mrb[0].mxu0 %v813
      %v974 = vpop.f32.mrb[0].mxu0
      %v975 = vadd.f32 %v612, %v974
      %v976 = vpop.f32.mrb[0].mxu0
      %v977 = vadd.f32 %v614, %v976
      %978 = vmatprep.mubr.f32.mxu0 0.0
      %979 = vmatmul.mubr.f32.gmra.mrb[0].mxu0 %v816
      %v980 = vpop.f32.mrb[0].mxu0
      %v981 = vadd.f32 %v618, %v980
      %v982 = vpop.f32.mrb[0].mxu0
      %v983 = vadd.f32 %v620, %v982
      %984 = vdwg.mxu0
      %985 = vmatprep.subr.mxu0 0.0
      %986 = vmatpush1.msra.mxu0 %v822
      %987 = vmatprep.subr.mxu0 0.0
      %988 = vmatpush1.msra.mxu0 0.0
      %989 = vmatprep.subr.mxu0 0.0
      %990 = vmatpush1.msra.mxu0 0.0
      %991 = vmatprep.subr.mxu0 0.0
      %992 = vmatpush1.msra.mxu0 0.0
      %993 = vmatprep.subr.mxu0 0.0
      %994 = vmatpush1.msra.mxu0 0.0
      %995 = vmatprep.subr.mxu0 0.0
      %996 = vmatpush1.msra.mxu0 0.0
      %997 = vmatprep.subr.mxu0 0.0
      %998 = vmatpush1.msra.mxu0 0.0
      %999 = vmatprep.subr.mxu0 0.0
      %1000 = vmatpush1.msra.mxu0 0.0
      %1001 = vmatprep.subr.mxu0 0.0
      %1002 = vmatpush1.msra.mxu0 0.0
      %1003 = vmatprep.subr.mxu0 0.0
      %1004 = vmatpush1.msra.mxu0 0.0
      %1005 = vmatprep.subr.mxu0 0.0
      %1006 = vmatpush1.msra.mxu0 0.0
      %1007 = vmatprep.subr.mxu0 0.0
      %1008 = vmatpush1.msra.mxu0 0.0
      %1009 = vmatprep.subr.mxu0 0.0
      %1010 = vmatpush1.msra.mxu0 0.0
      %1011 = vmatprep.subr.mxu0 0.0
      %1012 = vmatpush1.msra.mxu0 0.0
      %1013 = vmatprep.subr.mxu0 0.0
      %1014 = vmatpush1.msra.mxu0 0.0
      %1015 = vmatprep.subr.mxu0 0.0
      %1016 = vmatpush1.msra.mxu0 0.0
      %1017 = vmatprep.subr.mxu0 0.0
      %1018 = vmatpush1.msra.mxu0 0.0
      %1019 = vmatprep.subr.mxu0 0.0
      %1020 = vmatpush1.msra.mxu0 0.0
      %1021 = vmatprep.subr.mxu0 0.0
      %1022 = vmatpush1.msra.mxu0 0.0
      %1023 = vmatprep.subr.mxu0 0.0
      %1024 = vmatpush1.msra.mxu0 0.0
      %1025 = vmatprep.subr.mxu0 0.0
      %1026 = vmatpush1.msra.mxu0 0.0
      %1027 = vmatprep.subr.mxu0 0.0
      %1028 = vmatpush1.msra.mxu0 0.0
      %1029 = vmatprep.subr.mxu0 0.0
      %1030 = vmatpush1.msra.mxu0 0.0
      %1031 = vmatprep.subr.mxu0 0.0
      %1032 = vmatpush1.msra.mxu0 0.0
      %1033 = vmatprep.subr.mxu0 0.0
      %1034 = vmatpush1.msra.mxu0 0.0
      %1035 = vmatprep.subr.mxu0 0.0
      %1036 = vmatpush1.msra.mxu0 0.0
      %1037 = vmatprep.subr.mxu0 0.0
      %1038 = vmatpush1.msra.mxu0 0.0
      %1039 = vmatprep.subr.mxu0 0.0
      %1040 = vmatpush1.msra.mxu0 0.0
      %1041 = vmatprep.subr.mxu0 0.0
      %1042 = vmatpush1.msra.mxu0 0.0
      %1043 = vmatprep.subr.mxu0 0.0
      %1044 = vmatpush1.msra.mxu0 0.0
      %1045 = vmatprep.subr.mxu0 0.0
      %1046 = vmatpush1.msra.mxu0 0.0
      %1047 = vmatprep.subr.mxu0 0.0
      %1048 = vmatpush1.msra.mxu0 0.0
      %1049 = vmatprep.mubr.f32.mxu0 0.0
      %1050 = vmatmul.mubr.f32.gmra.mrb[0].mxu0 %v771
      %v1051 = vpop.f32.mrb[0].mxu0
      %v1052 = vadd.f32 %v689, %v1051
      %v1053 = vpop.f32.mrb[0].mxu0
      %1054 = vmatprep.mubr.f32.mxu0 0.0
      %1055 = vmatmul.mubr.f32.gmra.mrb[0].mxu0 %v774
      %v1056 = vpop.f32.mrb[0].mxu0
      %v1057 = vadd.f32 %v694, %v1056
      %v1058 = vpop.f32.mrb[0].mxu0
      %1059 = vmatprep.mubr.f32.mxu0 0.0
      %1060 = vmatmul.mubr.f32.gmra.mrb[0].mxu0 %v777
      %v1061 = vpop.f32.mrb[0].mxu0
      %v1062 = vadd.f32 %v699, %v1061
      %v1063 = vpop.f32.mrb[0].mxu0
      %1064 = vmatprep.mubr.f32.mxu0 0.0
      %1065 = vmatmul.mubr.f32.gmra.mrb[0].mxu0 %v780
      %v1066 = vpop.f32.mrb[0].mxu0
      %v1067 = vadd.f32 %v704, %v1066
      %v1068 = vpop.f32.mrb[0].mxu0
      %1069 = vmatprep.mubr.f32.mxu0 0.0
      %1070 = vmatmul.mubr.f32.gmra.mrb[0].mxu0 %v783
      %v1071 = vpop.f32.mrb[0].mxu0
      %v1072 = vadd.f32 %v709, %v1071
      %v1073 = vpop.f32.mrb[0].mxu0
      %1074 = vmatprep.mubr.f32.mxu0 0.0
      %1075 = vmatmul.mubr.f32.gmra.mrb[0].mxu0 %v786
      %v1076 = vpop.f32.mrb[0].mxu0
      %v1077 = vadd.f32 %v714, %v1076
      %v1078 = vpop.f32.mrb[0].mxu0
      %1079 = vmatprep.mubr.f32.mxu0 0.0
      %1080 = vmatmul.mubr.f32.gmra.mrb[0].mxu0 %v789
      %v1081 = vpop.f32.mrb[0].mxu0
      %v1082 = vadd.f32 %v719, %v1081
      %v1083 = vpop.f32.mrb[0].mxu0
      %1084 = vmatprep.mubr.f32.mxu0 0.0
      %1085 = vmatmul.mubr.f32.gmra.mrb[0].mxu0 %v792
      %v1086 = vpop.f32.mrb[0].mxu0
      %v1087 = vadd.f32 %v724, %v1086
      %v1088 = vpop.f32.mrb[0].mxu0
      %1089 = vmatprep.mubr.f32.mxu0 0.0
      %1090 = vmatmul.mubr.f32.gmra.mrb[0].mxu0 %v795
      %v1091 = vpop.f32.mrb[0].mxu0
      %v1092 = vadd.f32 %v729, %v1091
      %v1093 = vpop.f32.mrb[0].mxu0
      %1094 = vmatprep.mubr.f32.mxu0 0.0
      %1095 = vmatmul.mubr.f32.gmra.mrb[0].mxu0 %v798
      %v1096 = vpop.f32.mrb[0].mxu0
      %v1097 = vadd.f32 %v734, %v1096
      %v1098 = vpop.f32.mrb[0].mxu0
      %1099 = vmatprep.mubr.f32.mxu0 0.0
      %1100 = vmatmul.mubr.f32.gmra.mrb[0].mxu0 %v801
      %v1101 = vpop.f32.mrb[0].mxu0
      %v1102 = vadd.f32 %v739, %v1101
      %v1103 = vpop.f32.mrb[0].mxu0
      %1104 = vmatprep.mubr.f32.mxu0 0.0
      %1105 = vmatmul.mubr.f32.gmra.mrb[0].mxu0 %v804
      %v1106 = vpop.f32.mrb[0].mxu0
      %v1107 = vadd.f32 %v744, %v1106
      %v1108 = vpop.f32.mrb[0].mxu0
      %1109 = vmatprep.mubr.f32.mxu0 0.0
      %1110 = vmatmul.mubr.f32.gmra.mrb[0].mxu0 %v807
      %v1111 = vpop.f32.mrb[0].mxu0
      %v1112 = vadd.f32 %v749, %v1111
      %v1113 = vpop.f32.mrb[0].mxu0
      %1114 = vmatprep.mubr.f32.mxu0 0.0
      %1115 = vmatmul.mubr.f32.gmra.mrb[0].mxu0 %v810
      %v1116 = vpop.f32.mrb[0].mxu0
      %v1117 = vadd.f32 %v754, %v1116
      %v1118 = vpop.f32.mrb[0].mxu0
      %1119 = vmatprep.mubr.f32.mxu0 0.0
      %1120 = vmatmul.mubr.f32.gmra.mrb[0].mxu0 %v813
      %v1121 = vpop.f32.mrb[0].mxu0
      %v1122 = vadd.f32 %v759, %v1121
      %v1123 = vpop.f32.mrb[0].mxu0
      %1124 = vmatprep.mubr.f32.mxu0 0.0
      %1125 = vmatmul.mubr.f32.gmra.mrb[0].mxu0 %v816
      %v1126 = vpop.f32.mrb[0].mxu0
      %v1127 = vadd.f32 %v764, %v1126
      %v1128 = vpop.f32.mrb[0].mxu0
      %1129 = vdwg.mxu0
      %v1130 = vld [vmem:[%s301] sm:$0x77]
      %v1131 = vld [vmem:[%s301 + $0x8] sm:$0x7]
      %v1132 = vlaneseq
      %v1133 = vshrl.u32 %v1132, 7
      %v1134 = vsub.s32 2, %v1133
      %v1135 = vrot.slane %v320, %v1134
      %v1136 = vlaneseq
      %v1137 = vshrl.u32 %v1136, 7
      %v1138 = vsub.s32 6, %v1137
      %v1139 = vrot.slane %v320, %v1138
      %v1140 = vlaneseq
      %v1141 = vshrl.u32 %v1140, 7
      %v1142 = vsub.s32 2, %v1141
      %v1143 = vrot.slane %v321, %v1142
      %v1147 = vlaneseq
      %v1148 = vshrl.u32 %v1147, 7
      %v1149 = vsub.s32 2, %v1148
      %v1150 = vrot.slane %v1135, %v1149
      %v1151 = vlaneseq
      %v1152 = vshrl.u32 %v1151, 7
      %v1153 = vsub.s32 2, %v1152
      %v1154 = vrot.slane %v1139, %v1153
      %v1155 = vlaneseq
      %v1156 = vshrl.u32 %v1155, 7
      %v1157 = vsub.s32 2, %v1156
      %v1158 = vrot.slane %v1143, %v1157
      %v1162 = vcombine.low %v1150, %v1154
      %1163 = vrot.lane.b32.xlu0 %v1162, 2
      %v1164 = vpop.permute.xlu0 %1163
      %1165 = vrot.lane.b32.xlu0 %v1158, 2
      %v1166 = vpop.permute.xlu0 %1165
      %v1167 = vrot.slane %v1164, 4
      %vm1168 = vcmask 15360
      %v1169 = vsel %vm1168, %v1167, %v1164
      %v1170 = vsel %vm1168, %v1167, %v1166
      %v1173 = vmul.f32 %v1130, %v1169
      %v1174 = vmul.f32 %v1131, %v1170
      %s1175 = scalar_lea.vmem %s2, 256
      %v1176 = vld [vmem:[%s1175] sm:$0xff]
      %v1177 = vld [vmem:[%s1175 + $0x8] sm:$0xff]
      %v1178 = vld [vmem:[%s1175 + $0x10] sm:$0xff]
      %v1179 = vld [vmem:[%s1175 + $0x18] sm:$0xff]
      %v1180 = vld [vmem:[%s1175 + $0x20] sm:$0xff]
      %v1181 = vld [vmem:[%s1175 + $0x28] sm:$0xff]
      %v1182 = vld [vmem:[%s1175 + $0x30] sm:$0xff]
      %v1183 = vld [vmem:[%s1175 + $0x38] sm:$0xff]
      %v1184 = vld [vmem:[%s1175 + $0x40] sm:$0xff]
      %v1185 = vld [vmem:[%s1175 + $0x48] sm:$0xff]
      %v1186 = vld [vmem:[%s1175 + $0x50] sm:$0xff]
      %v1187 = vld [vmem:[%s1175 + $0x58] sm:$0xff]
      %v1188 = vld [vmem:[%s1175 + $0x60] sm:$0xff]
      %v1189 = vld [vmem:[%s1175 + $0x68] sm:$0xff]
      %v1190 = vld [vmem:[%s1175 + $0x70] sm:$0xff]
      %v1191 = vld [vmem:[%s1175 + $0x78] sm:$0xff]
      %v1194 = vcombine.high %v1173, %v1173
      %1195 = vrot.lane.b32.xlu0 %v1173, 126
      %v1196 = vpop.permute.xlu0 %1195
      %1197 = vrot.lane.b32.xlu0 %v1194, 126
      %v1198 = vpop.permute.xlu0 %1197
      %1199 = vrot.lane.b32.xlu0 %v1174, 126
      %v1200 = vpop.permute.xlu0 %1199
      %vm1201 = vcmask 1031168
      %v1202 = vsel %vm1201, %v1196, %v1198
      %v1203 = vsel %vm1201, %v1198, %v1200
      %v1205 = vsel %vm405, %v1176, 0
      %v1208 = vsel %vm405, %v1177, 0
      %v1211 = vsel %vm405, %v1178, 0
      %v1214 = vsel %vm405, %v1179, 0
      %v1217 = vsel %vm405, %v1180, 0
      %v1220 = vsel %vm405, %v1181, 0
      %v1223 = vsel %vm405, %v1182, 0
      %v1226 = vsel %vm405, %v1183, 0
      %v1229 = vsel %vm405, %v1184, 0
      %v1232 = vsel %vm405, %v1185, 0
      %v1235 = vsel %vm405, %v1186, 0
      %v1238 = vsel %vm405, %v1187, 0
      %v1241 = vsel %vm405, %v1188, 0
      %v1244 = vsel %vm405, %v1189, 0
      %v1247 = vsel %vm405, %v1190, 0
      %v1250 = vsel %vm405, %v1191, 0
      %v1252 = vsel %vm454, %v1202, 0
      %v1254 = vsel %vm454, %v1203, 0
      %v1256 = vsel %vm454, %v1200, 0
      %1258 = vmatprep.subr.mxu0 %v1254
      %1259 = vmatpush1.msra.mxu0 %v1252
      %1260 = vmatprep.subr.mxu0 0.0
      %1261 = vmatpush1.msra.mxu0 0.0
      %1262 = vmatprep.subr.mxu0 0.0
      %1263 = vmatpush1.msra.mxu0 0.0
      %1264 = vmatprep.subr.mxu0 0.0
      %1265 = vmatpush1.msra.mxu0 0.0
      %1266 = vmatprep.subr.mxu0 0.0
      %1267 = vmatpush1.msra.mxu0 0.0
      %1268 = vmatprep.subr.mxu0 0.0
      %1269 = vmatpush1.msra.mxu0 0.0
      %1270 = vmatprep.subr.mxu0 0.0
      %1271 = vmatpush1.msra.mxu0 0.0
      %1272 = vmatprep.subr.mxu0 0.0
      %1273 = vmatpush1.msra.mxu0 0.0
      %1274 = vmatprep.subr.mxu0 0.0
      %1275 = vmatpush1.msra.mxu0 0.0
      %1276 = vmatprep.subr.mxu0 0.0
      %1277 = vmatpush1.msra.mxu0 0.0
      %1278 = vmatprep.subr.mxu0 0.0
      %1279 = vmatpush1.msra.mxu0 0.0
      %1280 = vmatprep.subr.mxu0 0.0
      %1281 = vmatpush1.msra.mxu0 0.0
      %1282 = vmatprep.subr.mxu0 0.0
      %1283 = vmatpush1.msra.mxu0 0.0
      %1284 = vmatprep.subr.mxu0 0.0
      %1285 = vmatpush1.msra.mxu0 0.0
      %1286 = vmatprep.subr.mxu0 0.0
      %1287 = vmatpush1.msra.mxu0 0.0
      %1288 = vmatprep.subr.mxu0 0.0
      %1289 = vmatpush1.msra.mxu0 0.0
      %1290 = vmatprep.subr.mxu0 0.0
      %1291 = vmatpush1.msra.mxu0 0.0
      %1292 = vmatprep.subr.mxu0 0.0
      %1293 = vmatpush1.msra.mxu0 0.0
      %1294 = vmatprep.subr.mxu0 0.0
      %1295 = vmatpush1.msra.mxu0 0.0
      %1296 = vmatprep.subr.mxu0 0.0
      %1297 = vmatpush1.msra.mxu0 0.0
      %1298 = vmatprep.subr.mxu0 0.0
      %1299 = vmatpush1.msra.mxu0 0.0
      %1300 = vmatprep.subr.mxu0 0.0
      %1301 = vmatpush1.msra.mxu0 0.0
      %1302 = vmatprep.subr.mxu0 0.0
      %1303 = vmatpush1.msra.mxu0 0.0
      %1304 = vmatprep.subr.mxu0 0.0
      %1305 = vmatpush1.msra.mxu0 0.0
      %1306 = vmatprep.subr.mxu0 0.0
      %1307 = vmatpush1.msra.mxu0 0.0
      %1308 = vmatprep.subr.mxu0 0.0
      %1309 = vmatpush1.msra.mxu0 0.0
      %1310 = vmatprep.subr.mxu0 0.0
      %1311 = vmatpush1.msra.mxu0 0.0
      %1312 = vmatprep.subr.mxu0 0.0
      %1313 = vmatpush1.msra.mxu0 0.0
      %1314 = vmatprep.subr.mxu0 0.0
      %1315 = vmatpush1.msra.mxu0 0.0
      %1316 = vmatprep.subr.mxu0 0.0
      %1317 = vmatpush1.msra.mxu0 0.0
      %1318 = vmatprep.subr.mxu0 0.0
      %1319 = vmatpush1.msra.mxu0 0.0
      %1320 = vmatprep.subr.mxu0 0.0
      %1321 = vmatpush1.msra.mxu0 0.0
      %1322 = vmatprep.mubr.f32.mxu0 0.0
      %1323 = vmatmul.mubr.f32.gmra.mrb[0].mxu0 %v1205
      %v1324 = vpop.f32.mrb[0].mxu0
      %v1325 = vadd.f32 0.0, %v1324
      %v1326 = vpop.f32.mrb[0].mxu0
      %v1327 = vadd.f32 0.0, %v1326
      %1328 = vmatprep.mubr.f32.mxu0 0.0
      %1329 = vmatmul.mubr.f32.gmra.mrb[0].mxu0 %v1208
      %v1330 = vpop.f32.mrb[0].mxu0
      %v1331 = vadd.f32 0.0, %v1330
      %v1332 = vpop.f32.mrb[0].mxu0
      %v1333 = vadd.f32 0.0, %v1332
      %1334 = vmatprep.mubr.f32.mxu0 0.0
      %1335 = vmatmul.mubr.f32.gmra.mrb[0].mxu0 %v1211
      %v1336 = vpop.f32.mrb[0].mxu0
      %v1337 = vadd.f32 0.0, %v1336
      %v1338 = vpop.f32.mrb[0].mxu0
      %v1339 = vadd.f32 0.0, %v1338
      %1340 = vmatprep.mubr.f32.mxu0 0.0
      %1341 = vmatmul.mubr.f32.gmra.mrb[0].mxu0 %v1214
      %v1342 = vpop.f32.mrb[0].mxu0
      %v1343 = vadd.f32 0.0, %v1342
      %v1344 = vpop.f32.mrb[0].mxu0
      %v1345 = vadd.f32 0.0, %v1344
      %1346 = vmatprep.mubr.f32.mxu0 0.0
      %1347 = vmatmul.mubr.f32.gmra.mrb[0].mxu0 %v1217
      %v1348 = vpop.f32.mrb[0].mxu0
      %v1349 = vadd.f32 0.0, %v1348
      %v1350 = vpop.f32.mrb[0].mxu0
      %v1351 = vadd.f32 0.0, %v1350
      %1352 = vmatprep.mubr.f32.mxu0 0.0
      %1353 = vmatmul.mubr.f32.gmra.mrb[0].mxu0 %v1220
      %v1354 = vpop.f32.mrb[0].mxu0
      %v1355 = vadd.f32 0.0, %v1354
      %v1356 = vpop.f32.mrb[0].mxu0
      %v1357 = vadd.f32 0.0, %v1356
      %1358 = vmatprep.mubr.f32.mxu0 0.0
      %1359 = vmatmul.mubr.f32.gmra.mrb[0].mxu0 %v1223
      %v1360 = vpop.f32.mrb[0].mxu0
      %v1361 = vadd.f32 0.0, %v1360
      %v1362 = vpop.f32.mrb[0].mxu0
      %v1363 = vadd.f32 0.0, %v1362
      %1364 = vmatprep.mubr.f32.mxu0 0.0
      %1365 = vmatmul.mubr.f32.gmra.mrb[0].mxu0 %v1226
      %v1366 = vpop.f32.mrb[0].mxu0
      %v1367 = vadd.f32 0.0, %v1366
      %v1368 = vpop.f32.mrb[0].mxu0
      %v1369 = vadd.f32 0.0, %v1368
      %1370 = vmatprep.mubr.f32.mxu0 0.0
      %1371 = vmatmul.mubr.f32.gmra.mrb[0].mxu0 %v1229
      %v1372 = vpop.f32.mrb[0].mxu0
      %v1373 = vadd.f32 0.0, %v1372
      %v1374 = vpop.f32.mrb[0].mxu0
      %v1375 = vadd.f32 0.0, %v1374
      %1376 = vmatprep.mubr.f32.mxu0 0.0
      %1377 = vmatmul.mubr.f32.gmra.mrb[0].mxu0 %v1232
      %v1378 = vpop.f32.mrb[0].mxu0
      %v1379 = vadd.f32 0.0, %v1378
      %v1380 = vpop.f32.mrb[0].mxu0
      %v1381 = vadd.f32 0.0, %v1380
      %1382 = vmatprep.mubr.f32.mxu0 0.0
      %1383 = vmatmul.mubr.f32.gmra.mrb[0].mxu0 %v1235
      %v1384 = vpop.f32.mrb[0].mxu0
      %v1385 = vadd.f32 0.0, %v1384
      %v1386 = vpop.f32.mrb[0].mxu0
      %v1387 = vadd.f32 0.0, %v1386
      %1388 = vmatprep.mubr.f32.mxu0 0.0
      %1389 = vmatmul.mubr.f32.gmra.mrb[0].mxu0 %v1238
      %v1390 = vpop.f32.mrb[0].mxu0
      %v1391 = vadd.f32 0.0, %v1390
      %v1392 = vpop.f32.mrb[0].mxu0
      %v1393 = vadd.f32 0.0, %v1392
      %1394 = vmatprep.mubr.f32.mxu0 0.0
      %1395 = vmatmul.mubr.f32.gmra.mrb[0].mxu0 %v1241
      %v1396 = vpop.f32.mrb[0].mxu0
      %v1397 = vadd.f32 0.0, %v1396
      %v1398 = vpop.f32.mrb[0].mxu0
      %v1399 = vadd.f32 0.0, %v1398
      %1400 = vmatprep.mubr.f32.mxu0 0.0
      %1401 = vmatmul.mubr.f32.gmra.mrb[0].mxu0 %v1244
      %v1402 = vpop.f32.mrb[0].mxu0
      %v1403 = vadd.f32 0.0, %v1402
      %v1404 = vpop.f32.mrb[0].mxu0
      %v1405 = vadd.f32 0.0, %v1404
      %1406 = vmatprep.mubr.f32.mxu0 0.0
      %1407 = vmatmul.mubr.f32.gmra.mrb[0].mxu0 %v1247
      %v1408 = vpop.f32.mrb[0].mxu0
      %v1409 = vadd.f32 0.0, %v1408
      %v1410 = vpop.f32.mrb[0].mxu0
      %v1411 = vadd.f32 0.0, %v1410
      %1412 = vmatprep.mubr.f32.mxu0 0.0
      %1413 = vmatmul.mubr.f32.gmra.mrb[0].mxu0 %v1250
      %v1414 = vpop.f32.mrb[0].mxu0
      %v1415 = vadd.f32 0.0, %v1414
      %v1416 = vpop.f32.mrb[0].mxu0
      %v1417 = vadd.f32 0.0, %v1416
      %1418 = vdwg.mxu0
      %1419 = vmatprep.subr.mxu0 0.0
      %1420 = vmatpush1.msra.mxu0 %v1256
      %1421 = vmatprep.subr.mxu0 0.0
      %1422 = vmatpush1.msra.mxu0 0.0
      %1423 = vmatprep.subr.mxu0 0.0
      %1424 = vmatpush1.msra.mxu0 0.0
      %1425 = vmatprep.subr.mxu0 0.0
      %1426 = vmatpush1.msra.mxu0 0.0
      %1427 = vmatprep.subr.mxu0 0.0
      %1428 = vmatpush1.msra.mxu0 0.0
      %1429 = vmatprep.subr.mxu0 0.0
      %1430 = vmatpush1.msra.mxu0 0.0
      %1431 = vmatprep.subr.mxu0 0.0
      %1432 = vmatpush1.msra.mxu0 0.0
      %1433 = vmatprep.subr.mxu0 0.0
      %1434 = vmatpush1.msra.mxu0 0.0
      %1435 = vmatprep.subr.mxu0 0.0
      %1436 = vmatpush1.msra.mxu0 0.0
      %1437 = vmatprep.subr.mxu0 0.0
      %1438 = vmatpush1.msra.mxu0 0.0
      %1439 = vmatprep.subr.mxu0 0.0
      %1440 = vmatpush1.msra.mxu0 0.0
      %1441 = vmatprep.subr.mxu0 0.0
      %1442 = vmatpush1.msra.mxu0 0.0
      %1443 = vmatprep.subr.mxu0 0.0
      %1444 = vmatpush1.msra.mxu0 0.0
      %1445 = vmatprep.subr.mxu0 0.0
      %1446 = vmatpush1.msra.mxu0 0.0
      %1447 = vmatprep.subr.mxu0 0.0
      %1448 = vmatpush1.msra.mxu0 0.0
      %1449 = vmatprep.subr.mxu0 0.0
      %1450 = vmatpush1.msra.mxu0 0.0
      %1451 = vmatprep.subr.mxu0 0.0
      %1452 = vmatpush1.msra.mxu0 0.0
      %1453 = vmatprep.subr.mxu0 0.0
      %1454 = vmatpush1.msra.mxu0 0.0
      %1455 = vmatprep.subr.mxu0 0.0
      %1456 = vmatpush1.msra.mxu0 0.0
      %1457 = vmatprep.subr.mxu0 0.0
      %1458 = vmatpush1.msra.mxu0 0.0
      %1459 = vmatprep.subr.mxu0 0.0
      %1460 = vmatpush1.msra.mxu0 0.0
      %1461 = vmatprep.subr.mxu0 0.0
      %1462 = vmatpush1.msra.mxu0 0.0
      %1463 = vmatprep.subr.mxu0 0.0
      %1464 = vmatpush1.msra.mxu0 0.0
      %1465 = vmatprep.subr.mxu0 0.0
      %1466 = vmatpush1.msra.mxu0 0.0
      %1467 = vmatprep.subr.mxu0 0.0
      %1468 = vmatpush1.msra.mxu0 0.0
      %1469 = vmatprep.subr.mxu0 0.0
      %1470 = vmatpush1.msra.mxu0 0.0
      %1471 = vmatprep.subr.mxu0 0.0
      %1472 = vmatpush1.msra.mxu0 0.0
      %1473 = vmatprep.subr.mxu0 0.0
      %1474 = vmatpush1.msra.mxu0 0.0
      %1475 = vmatprep.subr.mxu0 0.0
      %1476 = vmatpush1.msra.mxu0 0.0
      %1477 = vmatprep.subr.mxu0 0.0
      %1478 = vmatpush1.msra.mxu0 0.0
      %1479 = vmatprep.subr.mxu0 0.0
      %1480 = vmatpush1.msra.mxu0 0.0
      %1481 = vmatprep.subr.mxu0 0.0
      %1482 = vmatpush1.msra.mxu0 0.0
      %1483 = vmatprep.mubr.f32.mxu0 0.0
      %1484 = vmatmul.mubr.f32.gmra.mrb[0].mxu0 %v1205
      %v1485 = vpop.f32.mrb[0].mxu0
      %v1486 = vadd.f32 0.0, %v1485
      %v1487 = vpop.f32.mrb[0].mxu0
      %1488 = vmatprep.mubr.f32.mxu0 0.0
      %1489 = vmatmul.mubr.f32.gmra.mrb[0].mxu0 %v1208
      %v1490 = vpop.f32.mrb[0].mxu0
      %v1491 = vadd.f32 0.0, %v1490
      %v1492 = vpop.f32.mrb[0].mxu0
      %1493 = vmatprep.mubr.f32.mxu0 0.0
      %1494 = vmatmul.mubr.f32.gmra.mrb[0].mxu0 %v1211
      %v1495 = vpop.f32.mrb[0].mxu0
      %v1496 = vadd.f32 0.0, %v1495
      %v1497 = vpop.f32.mrb[0].mxu0
      %1498 = vmatprep.mubr.f32.mxu0 0.0
      %1499 = vmatmul.mubr.f32.gmra.mrb[0].mxu0 %v1214
      %v1500 = vpop.f32.mrb[0].mxu0
      %v1501 = vadd.f32 0.0, %v1500
      %v1502 = vpop.f32.mrb[0].mxu0
      %1503 = vmatprep.mubr.f32.mxu0 0.0
      %1504 = vmatmul.mubr.f32.gmra.mrb[0].mxu0 %v1217
      %v1505 = vpop.f32.mrb[0].mxu0
      %v1506 = vadd.f32 0.0, %v1505
      %v1507 = vpop.f32.mrb[0].mxu0
      %1508 = vmatprep.mubr.f32.mxu0 0.0
      %1509 = vmatmul.mubr.f32.gmra.mrb[0].mxu0 %v1220
      %v1510 = vpop.f32.mrb[0].mxu0
      %v1511 = vadd.f32 0.0, %v1510
      %v1512 = vpop.f32.mrb[0].mxu0
      %1513 = vmatprep.mubr.f32.mxu0 0.0
      %1514 = vmatmul.mubr.f32.gmra.mrb[0].mxu0 %v1223
      %v1515 = vpop.f32.mrb[0].mxu0
      %v1516 = vadd.f32 0.0, %v1515
      %v1517 = vpop.f32.mrb[0].mxu0
      %1518 = vmatprep.mubr.f32.mxu0 0.0
      %1519 = vmatmul.mubr.f32.gmra.mrb[0].mxu0 %v1226
      %v1520 = vpop.f32.mrb[0].mxu0
      %v1521 = vadd.f32 0.0, %v1520
      %v1522 = vpop.f32.mrb[0].mxu0
      %1523 = vmatprep.mubr.f32.mxu0 0.0
      %1524 = vmatmul.mubr.f32.gmra.mrb[0].mxu0 %v1229
      %v1525 = vpop.f32.mrb[0].mxu0
      %v1526 = vadd.f32 0.0, %v1525
      %v1527 = vpop.f32.mrb[0].mxu0
      %1528 = vmatprep.mubr.f32.mxu0 0.0
      %1529 = vmatmul.mubr.f32.gmra.mrb[0].mxu0 %v1232
      %v1530 = vpop.f32.mrb[0].mxu0
      %v1531 = vadd.f32 0.0, %v1530
      %v1532 = vpop.f32.mrb[0].mxu0
      %1533 = vmatprep.mubr.f32.mxu0 0.0
      %1534 = vmatmul.mubr.f32.gmra.mrb[0].mxu0 %v1235
      %v1535 = vpop.f32.mrb[0].mxu0
      %v1536 = vadd.f32 0.0, %v1535
      %v1537 = vpop.f32.mrb[0].mxu0
      %1538 = vmatprep.mubr.f32.mxu0 0.0
      %1539 = vmatmul.mubr.f32.gmra.mrb[0].mxu0 %v1238
      %v1540 = vpop.f32.mrb[0].mxu0
      %v1541 = vadd.f32 0.0, %v1540
      %v1542 = vpop.f32.mrb[0].mxu0
      %1543 = vmatprep.mubr.f32.mxu0 0.0
      %1544 = vmatmul.mubr.f32.gmra.mrb[0].mxu0 %v1241
      %v1545 = vpop.f32.mrb[0].mxu0
      %v1546 = vadd.f32 0.0, %v1545
      %v1547 = vpop.f32.mrb[0].mxu0
      %1548 = vmatprep.mubr.f32.mxu0 0.0
      %1549 = vmatmul.mubr.f32.gmra.mrb[0].mxu0 %v1244
      %v1550 = vpop.f32.mrb[0].mxu0
      %v1551 = vadd.f32 0.0, %v1550
      %v1552 = vpop.f32.mrb[0].mxu0
      %1553 = vmatprep.mubr.f32.mxu0 0.0
      %1554 = vmatmul.mubr.f32.gmra.mrb[0].mxu0 %v1247
      %v1555 = vpop.f32.mrb[0].mxu0
      %v1556 = vadd.f32 0.0, %v1555
      %v1557 = vpop.f32.mrb[0].mxu0
      %1558 = vmatprep.mubr.f32.mxu0 0.0
      %1559 = vmatmul.mubr.f32.gmra.mrb[0].mxu0 %v1250
      %v1560 = vpop.f32.mrb[0].mxu0
      %v1561 = vadd.f32 0.0, %v1560
      %v1562 = vpop.f32.mrb[0].mxu0
      %1563 = vdwg.mxu0
      %v1564 = vadd.f32 %v891, %v1325
      %v1565 = vadd.f32 %v893, %v1327
      %v1566 = vadd.f32 %v1052, %v1486
      %v1567 = vadd.f32 %v897, %v1331
      %v1568 = vadd.f32 %v899, %v1333
      %v1569 = vadd.f32 %v1057, %v1491
      %v1570 = vadd.f32 %v903, %v1337
      %v1571 = vadd.f32 %v905, %v1339
      %v1572 = vadd.f32 %v1062, %v1496
      %v1573 = vadd.f32 %v909, %v1343
      %v1574 = vadd.f32 %v911, %v1345
      %v1575 = vadd.f32 %v1067, %v1501
      %v1576 = vadd.f32 %v915, %v1349
      %v1577 = vadd.f32 %v917, %v1351
      %v1578 = vadd.f32 %v1072, %v1506
      %v1579 = vadd.f32 %v921, %v1355
      %v1580 = vadd.f32 %v923, %v1357
      %v1581 = vadd.f32 %v1077, %v1511
      %v1582 = vadd.f32 %v927, %v1361
      %v1583 = vadd.f32 %v929, %v1363
      %v1584 = vadd.f32 %v1082, %v1516
      %v1585 = vadd.f32 %v933, %v1367
      %v1586 = vadd.f32 %v935, %v1369
      %v1587 = vadd.f32 %v1087, %v1521
      %v1588 = vadd.f32 %v939, %v1373
      %v1589 = vadd.f32 %v941, %v1375
      %v1590 = vadd.f32 %v1092, %v1526
      %v1591 = vadd.f32 %v945, %v1379
      %v1592 = vadd.f32 %v947, %v1381
      %v1593 = vadd.f32 %v1097, %v1531
      %v1594 = vadd.f32 %v951, %v1385
      %v1595 = vadd.f32 %v953, %v1387
      %v1596 = vadd.f32 %v1102, %v1536
      %v1597 = vadd.f32 %v957, %v1391
      %v1598 = vadd.f32 %v959, %v1393
      %v1599 = vadd.f32 %v1107, %v1541
      %v1600 = vadd.f32 %v963, %v1397
      %v1601 = vadd.f32 %v965, %v1399
      %v1602 = vadd.f32 %v1112, %v1546
      %v1603 = vadd.f32 %v969, %v1403
      %v1604 = vadd.f32 %v971, %v1405
      %v1605 = vadd.f32 %v1117, %v1551
      %v1606 = vadd.f32 %v975, %v1409
      %v1607 = vadd.f32 %v977, %v1411
      %v1608 = vadd.f32 %v1122, %v1556
      %v1609 = vadd.f32 %v981, %v1415
      %v1610 = vadd.f32 %v983, %v1417
      %v1611 = vadd.f32 %v1127, %v1561
      %v1612 = vld [vmem:[%s301] sm:$0x77]
      %v1613 = vld [vmem:[%s301 + $0x8] sm:$0x7]
      %1614 = vrot.lane.b32.xlu0 %v356, 16
      %v1615 = vpop.permute.xlu0 %1614
      %1616 = vrot.lane.b32.xlu0 %v352, 16
      %v1617 = vpop.permute.xlu0 %1616
      %v1618 = vrot.slane %v1615, 4
      %vm1619 = vcmask 130048
      %v1620 = vsel %vm1619, %v1618, %v1615
      %v1621 = vsel %vm1619, %v1618, %v1617
      %v1624 = vmul.f32 %v1612, %v1620
      %v1625 = vmul.f32 %v1613, %v1621
      %s1626 = scalar_lea.vmem %s2, 384
      %v1627 = vld [vmem:[%s1626] sm:$0xff]
      %v1628 = vld [vmem:[%s1626 + $0x8] sm:$0xff]
      %v1629 = vld [vmem:[%s1626 + $0x10] sm:$0xff]
      %v1630 = vld [vmem:[%s1626 + $0x18] sm:$0xff]
      %v1631 = vld [vmem:[%s1626 + $0x20] sm:$0xff]
      %v1632 = vld [vmem:[%s1626 + $0x28] sm:$0xff]
      %v1633 = vld [vmem:[%s1626 + $0x30] sm:$0xff]
      %v1634 = vld [vmem:[%s1626 + $0x38] sm:$0xff]
      %v1635 = vld [vmem:[%s1626 + $0x40] sm:$0xff]
      %v1636 = vld [vmem:[%s1626 + $0x48] sm:$0xff]
      %v1637 = vld [vmem:[%s1626 + $0x50] sm:$0xff]
      %v1638 = vld [vmem:[%s1626 + $0x58] sm:$0xff]
      %v1639 = vld [vmem:[%s1626 + $0x60] sm:$0xff]
      %v1640 = vld [vmem:[%s1626 + $0x68] sm:$0xff]
      %v1641 = vld [vmem:[%s1626 + $0x70] sm:$0xff]
      %v1642 = vld [vmem:[%s1626 + $0x78] sm:$0xff]
      %v1645 = vcombine.high %v1624, %v1624
      %1646 = vrot.lane.b32.xlu0 %v1624, 112
      %v1647 = vpop.permute.xlu0 %1646
      %1648 = vrot.lane.b32.xlu0 %v1645, 112
      %v1649 = vpop.permute.xlu0 %1648
      %1650 = vrot.lane.b32.xlu0 %v1625, 112
      %v1651 = vpop.permute.xlu0 %1650
      %vm1652 = vcmask 916480
      %v1653 = vsel %vm1652, %v1647, %v1649
      %v1654 = vsel %vm1652, %v1649, %v1651
      %v1656 = vsel %vm405, %v1627, 0
      %v1659 = vsel %vm405, %v1628, 0
      %v1662 = vsel %vm405, %v1629, 0
      %v1665 = vsel %vm405, %v1630, 0
      %v1668 = vsel %vm405, %v1631, 0
      %v1671 = vsel %vm405, %v1632, 0
      %v1674 = vsel %vm405, %v1633, 0
      %v1677 = vsel %vm405, %v1634, 0
      %v1680 = vsel %vm405, %v1635, 0
      %v1683 = vsel %vm405, %v1636, 0
      %v1686 = vsel %vm405, %v1637, 0
      %v1689 = vsel %vm405, %v1638, 0
      %v1692 = vsel %vm405, %v1639, 0
      %v1695 = vsel %vm405, %v1640, 0
      %v1698 = vsel %vm405, %v1641, 0
      %v1701 = vsel %vm405, %v1642, 0
      %v1703 = vsel %vm454, %v1653, 0
      %v1705 = vsel %vm454, %v1654, 0
      %v1707 = vsel %vm454, %v1651, 0
      %1709 = vmatprep.subr.mxu0 %v1705
      %1710 = vmatpush1.msra.mxu0 %v1703
      %1711 = vmatprep.subr.mxu0 0.0
      %1712 = vmatpush1.msra.mxu0 0.0
      %1713 = vmatprep.subr.mxu0 0.0
      %1714 = vmatpush1.msra.mxu0 0.0
      %1715 = vmatprep.subr.mxu0 0.0
      %1716 = vmatpush1.msra.mxu0 0.0
      %1717 = vmatprep.subr.mxu0 0.0
      %1718 = vmatpush1.msra.mxu0 0.0
      %1719 = vmatprep.subr.mxu0 0.0
      %1720 = vmatpush1.msra.mxu0 0.0
      %1721 = vmatprep.subr.mxu0 0.0
      %1722 = vmatpush1.msra.mxu0 0.0
      %1723 = vmatprep.subr.mxu0 0.0
      %1724 = vmatpush1.msra.mxu0 0.0
      %1725 = vmatprep.subr.mxu0 0.0
      %1726 = vmatpush1.msra.mxu0 0.0
      %1727 = vmatprep.subr.mxu0 0.0
      %1728 = vmatpush1.msra.mxu0 0.0
      %1729 = vmatprep.subr.mxu0 0.0
      %1730 = vmatpush1.msra.mxu0 0.0
      %1731 = vmatprep.subr.mxu0 0.0
      %1732 = vmatpush1.msra.mxu0 0.0
      %1733 = vmatprep.subr.mxu0 0.0
      %1734 = vmatpush1.msra.mxu0 0.0
      %1735 = vmatprep.subr.mxu0 0.0
      %1736 = vmatpush1.msra.mxu0 0.0
      %1737 = vmatprep.subr.mxu0 0.0
      %1738 = vmatpush1.msra.mxu0 0.0
      %1739 = vmatprep.subr.mxu0 0.0
      %1740 = vmatpush1.msra.mxu0 0.0
      %1741 = vmatprep.subr.mxu0 0.0
      %1742 = vmatpush1.msra.mxu0 0.0
      %1743 = vmatprep.subr.mxu0 0.0
      %1744 = vmatpush1.msra.mxu0 0.0
      %1745 = vmatprep.subr.mxu0 0.0
      %1746 = vmatpush1.msra.mxu0 0.0
      %1747 = vmatprep.subr.mxu0 0.0
      %1748 = vmatpush1.msra.mxu0 0.0
      %1749 = vmatprep.subr.mxu0 0.0
      %1750 = vmatpush1.msra.mxu0 0.0
      %1751 = vmatprep.subr.mxu0 0.0
      %1752 = vmatpush1.msra.mxu0 0.0
      %1753 = vmatprep.subr.mxu0 0.0
      %1754 = vmatpush1.msra.mxu0 0.0
      %1755 = vmatprep.subr.mxu0 0.0
      %1756 = vmatpush1.msra.mxu0 0.0
      %1757 = vmatprep.subr.mxu0 0.0
      %1758 = vmatpush1.msra.mxu0 0.0
      %1759 = vmatprep.subr.mxu0 0.0
      %1760 = vmatpush1.msra.mxu0 0.0
      %1761 = vmatprep.subr.mxu0 0.0
      %1762 = vmatpush1.msra.mxu0 0.0
      %1763 = vmatprep.subr.mxu0 0.0
      %1764 = vmatpush1.msra.mxu0 0.0
      %1765 = vmatprep.subr.mxu0 0.0
      %1766 = vmatpush1.msra.mxu0 0.0
      %1767 = vmatprep.subr.mxu0 0.0
      %1768 = vmatpush1.msra.mxu0 0.0
      %1769 = vmatprep.subr.mxu0 0.0
      %1770 = vmatpush1.msra.mxu0 0.0
      %1771 = vmatprep.subr.mxu0 0.0
      %1772 = vmatpush1.msra.mxu0 0.0
      %1773 = vmatprep.mubr.f32.mxu0 0.0
      %1774 = vmatmul.mubr.f32.gmra.mrb[0].mxu0 %v1656
      %v1775 = vpop.f32.mrb[0].mxu0
      %v1776 = vadd.f32 0.0, %v1775
      %v1777 = vpop.f32.mrb[0].mxu0
      %v1778 = vadd.f32 0.0, %v1777
      %1779 = vmatprep.mubr.f32.mxu0 0.0
      %1780 = vmatmul.mubr.f32.gmra.mrb[0].mxu0 %v1659
      %v1781 = vpop.f32.mrb[0].mxu0
      %v1782 = vadd.f32 0.0, %v1781
      %v1783 = vpop.f32.mrb[0].mxu0
      %v1784 = vadd.f32 0.0, %v1783
      %1785 = vmatprep.mubr.f32.mxu0 0.0
      %1786 = vmatmul.mubr.f32.gmra.mrb[0].mxu0 %v1662
      %v1787 = vpop.f32.mrb[0].mxu0
      %v1788 = vadd.f32 0.0, %v1787
      %v1789 = vpop.f32.mrb[0].mxu0
      %v1790 = vadd.f32 0.0, %v1789
      %1791 = vmatprep.mubr.f32.mxu0 0.0
      %1792 = vmatmul.mubr.f32.gmra.mrb[0].mxu0 %v1665
      %v1793 = vpop.f32.mrb[0].mxu0
      %v1794 = vadd.f32 0.0, %v1793
      %v1795 = vpop.f32.mrb[0].mxu0
      %v1796 = vadd.f32 0.0, %v1795
      %1797 = vmatprep.mubr.f32.mxu0 0.0
      %1798 = vmatmul.mubr.f32.gmra.mrb[0].mxu0 %v1668
      %v1799 = vpop.f32.mrb[0].mxu0
      %v1800 = vadd.f32 0.0, %v1799
      %v1801 = vpop.f32.mrb[0].mxu0
      %v1802 = vadd.f32 0.0, %v1801
      %1803 = vmatprep.mubr.f32.mxu0 0.0
      %1804 = vmatmul.mubr.f32.gmra.mrb[0].mxu0 %v1671
      %v1805 = vpop.f32.mrb[0].mxu0
      %v1806 = vadd.f32 0.0, %v1805
      %v1807 = vpop.f32.mrb[0].mxu0
      %v1808 = vadd.f32 0.0, %v1807
      %1809 = vmatprep.mubr.f32.mxu0 0.0
      %1810 = vmatmul.mubr.f32.gmra.mrb[0].mxu0 %v1674
      %v1811 = vpop.f32.mrb[0].mxu0
      %v1812 = vadd.f32 0.0, %v1811
      %v1813 = vpop.f32.mrb[0].mxu0
      %v1814 = vadd.f32 0.0, %v1813
      %1815 = vmatprep.mubr.f32.mxu0 0.0
      %1816 = vmatmul.mubr.f32.gmra.mrb[0].mxu0 %v1677
      %v1817 = vpop.f32.mrb[0].mxu0
      %v1818 = vadd.f32 0.0, %v1817
      %v1819 = vpop.f32.mrb[0].mxu0
      %v1820 = vadd.f32 0.0, %v1819
      %1821 = vmatprep.mubr.f32.mxu0 0.0
      %1822 = vmatmul.mubr.f32.gmra.mrb[0].mxu0 %v1680
      %v1823 = vpop.f32.mrb[0].mxu0
      %v1824 = vadd.f32 0.0, %v1823
      %v1825 = vpop.f32.mrb[0].mxu0
      %v1826 = vadd.f32 0.0, %v1825
      %1827 = vmatprep.mubr.f32.mxu0 0.0
      %1828 = vmatmul.mubr.f32.gmra.mrb[0].mxu0 %v1683
      %v1829 = vpop.f32.mrb[0].mxu0
      %v1830 = vadd.f32 0.0, %v1829
      %v1831 = vpop.f32.mrb[0].mxu0
      %v1832 = vadd.f32 0.0, %v1831
      %1833 = vmatprep.mubr.f32.mxu0 0.0
      %1834 = vmatmul.mubr.f32.gmra.mrb[0].mxu0 %v1686
      %v1835 = vpop.f32.mrb[0].mxu0
      %v1836 = vadd.f32 0.0, %v1835
      %v1837 = vpop.f32.mrb[0].mxu0
      %v1838 = vadd.f32 0.0, %v1837
      %1839 = vmatprep.mubr.f32.mxu0 0.0
      %1840 = vmatmul.mubr.f32.gmra.mrb[0].mxu0 %v1689
      %v1841 = vpop.f32.mrb[0].mxu0
      %v1842 = vadd.f32 0.0, %v1841
      %v1843 = vpop.f32.mrb[0].mxu0
      %v1844 = vadd.f32 0.0, %v1843
      %1845 = vmatprep.mubr.f32.mxu0 0.0
      %1846 = vmatmul.mubr.f32.gmra.mrb[0].mxu0 %v1692
      %v1847 = vpop.f32.mrb[0].mxu0
      %v1848 = vadd.f32 0.0, %v1847
      %v1849 = vpop.f32.mrb[0].mxu0
      %v1850 = vadd.f32 0.0, %v1849
      %1851 = vmatprep.mubr.f32.mxu0 0.0
      %1852 = vmatmul.mubr.f32.gmra.mrb[0].mxu0 %v1695
      %v1853 = vpop.f32.mrb[0].mxu0
      %v1854 = vadd.f32 0.0, %v1853
      %v1855 = vpop.f32.mrb[0].mxu0
      %v1856 = vadd.f32 0.0, %v1855
      %1857 = vmatprep.mubr.f32.mxu0 0.0
      %1858 = vmatmul.mubr.f32.gmra.mrb[0].mxu0 %v1698
      %v1859 = vpop.f32.mrb[0].mxu0
      %v1860 = vadd.f32 0.0, %v1859
      %v1861 = vpop.f32.mrb[0].mxu0
      %v1862 = vadd.f32 0.0, %v1861
      %1863 = vmatprep.mubr.f32.mxu0 0.0
      %1864 = vmatmul.mubr.f32.gmra.mrb[0].mxu0 %v1701
      %v1865 = vpop.f32.mrb[0].mxu0
      %v1866 = vadd.f32 0.0, %v1865
      %v1867 = vpop.f32.mrb[0].mxu0
      %v1868 = vadd.f32 0.0, %v1867
      %1869 = vdwg.mxu0
      %1870 = vmatprep.subr.mxu0 0.0
      %1871 = vmatpush1.msra.mxu0 %v1707
      %1872 = vmatprep.subr.mxu0 0.0
      %1873 = vmatpush1.msra.mxu0 0.0
      %1874 = vmatprep.subr.mxu0 0.0
      %1875 = vmatpush1.msra.mxu0 0.0
      %1876 = vmatprep.subr.mxu0 0.0
      %1877 = vmatpush1.msra.mxu0 0.0
      %1878 = vmatprep.subr.mxu0 0.0
      %1879 = vmatpush1.msra.mxu0 0.0
      %1880 = vmatprep.subr.mxu0 0.0
      %1881 = vmatpush1.msra.mxu0 0.0
      %1882 = vmatprep.subr.mxu0 0.0
      %1883 = vmatpush1.msra.mxu0 0.0
      %1884 = vmatprep.subr.mxu0 0.0
      %1885 = vmatpush1.msra.mxu0 0.0
      %1886 = vmatprep.subr.mxu0 0.0
      %1887 = vmatpush1.msra.mxu0 0.0
      %1888 = vmatprep.subr.mxu0 0.0
      %1889 = vmatpush1.msra.mxu0 0.0
      %1890 = vmatprep.subr.mxu0 0.0
      %1891 = vmatpush1.msra.mxu0 0.0
      %1892 = vmatprep.subr.mxu0 0.0
      %1893 = vmatpush1.msra.mxu0 0.0
      %1894 = vmatprep.subr.mxu0 0.0
      %1895 = vmatpush1.msra.mxu0 0.0
      %1896 = vmatprep.subr.mxu0 0.0
      %1897 = vmatpush1.msra.mxu0 0.0
      %1898 = vmatprep.subr.mxu0 0.0
      %1899 = vmatpush1.msra.mxu0 0.0
      %1900 = vmatprep.subr.mxu0 0.0
      %1901 = vmatpush1.msra.mxu0 0.0
      %1902 = vmatprep.subr.mxu0 0.0
      %1903 = vmatpush1.msra.mxu0 0.0
      %1904 = vmatprep.subr.mxu0 0.0
      %1905 = vmatpush1.msra.mxu0 0.0
      %1906 = vmatprep.subr.mxu0 0.0
      %1907 = vmatpush1.msra.mxu0 0.0
      %1908 = vmatprep.subr.mxu0 0.0
      %1909 = vmatpush1.msra.mxu0 0.0
      %1910 = vmatprep.subr.mxu0 0.0
      %1911 = vmatpush1.msra.mxu0 0.0
      %1912 = vmatprep.subr.mxu0 0.0
      %1913 = vmatpush1.msra.mxu0 0.0
      %1914 = vmatprep.subr.mxu0 0.0
      %1915 = vmatpush1.msra.mxu0 0.0
      %1916 = vmatprep.subr.mxu0 0.0
      %1917 = vmatpush1.msra.mxu0 0.0
      %1918 = vmatprep.subr.mxu0 0.0
      %1919 = vmatpush1.msra.mxu0 0.0
      %1920 = vmatprep.subr.mxu0 0.0
      %1921 = vmatpush1.msra.mxu0 0.0
      %1922 = vmatprep.subr.mxu0 0.0
      %1923 = vmatpush1.msra.mxu0 0.0
      %1924 = vmatprep.subr.mxu0 0.0
      %1925 = vmatpush1.msra.mxu0 0.0
      %1926 = vmatprep.subr.mxu0 0.0
      %1927 = vmatpush1.msra.mxu0 0.0
      %1928 = vmatprep.subr.mxu0 0.0
      %1929 = vmatpush1.msra.mxu0 0.0
      %1930 = vmatprep.subr.mxu0 0.0
      %1931 = vmatpush1.msra.mxu0 0.0
      %1932 = vmatprep.subr.mxu0 0.0
      %1933 = vmatpush1.msra.mxu0 0.0
      %1934 = vmatprep.mubr.f32.mxu0 0.0
      %1935 = vmatmul.mubr.f32.gmra.mrb[0].mxu0 %v1656
      %v1936 = vpop.f32.mrb[0].mxu0
      %v1937 = vadd.f32 0.0, %v1936
      %v1938 = vpop.f32.mrb[0].mxu0
      %1939 = vmatprep.mubr.f32.mxu0 0.0
      %1940 = vmatmul.mubr.f32.gmra.mrb[0].mxu0 %v1659
      %v1941 = vpop.f32.mrb[0].mxu0
      %v1942 = vadd.f32 0.0, %v1941
      %v1943 = vpop.f32.mrb[0].mxu0
      %1944 = vmatprep.mubr.f32.mxu0 0.0
      %1945 = vmatmul.mubr.f32.gmra.mrb[0].mxu0 %v1662
      %v1946 = vpop.f32.mrb[0].mxu0
      %v1947 = vadd.f32 0.0, %v1946
      %v1948 = vpop.f32.mrb[0].mxu0
      %1949 = vmatprep.mubr.f32.mxu0 0.0
      %1950 = vmatmul.mubr.f32.gmra.mrb[0].mxu0 %v1665
      %v1951 = vpop.f32.mrb[0].mxu0
      %v1952 = vadd.f32 0.0, %v1951
      %v1953 = vpop.f32.mrb[0].mxu0
      %1954 = vmatprep.mubr.f32.mxu0 0.0
      %1955 = vmatmul.mubr.f32.gmra.mrb[0].mxu0 %v1668
      %v1956 = vpop.f32.mrb[0].mxu0
      %v1957 = vadd.f32 0.0, %v1956
      %v1958 = vpop.f32.mrb[0].mxu0
      %1959 = vmatprep.mubr.f32.mxu0 0.0
      %1960 = vmatmul.mubr.f32.gmra.mrb[0].mxu0 %v1671
      %v1961 = vpop.f32.mrb[0].mxu0
      %v1962 = vadd.f32 0.0, %v1961
      %v1963 = vpop.f32.mrb[0].mxu0
      %1964 = vmatprep.mubr.f32.mxu0 0.0
      %1965 = vmatmul.mubr.f32.gmra.mrb[0].mxu0 %v1674
      %v1966 = vpop.f32.mrb[0].mxu0
      %v1967 = vadd.f32 0.0, %v1966
      %v1968 = vpop.f32.mrb[0].mxu0
      %1969 = vmatprep.mubr.f32.mxu0 0.0
      %1970 = vmatmul.mubr.f32.gmra.mrb[0].mxu0 %v1677
      %v1971 = vpop.f32.mrb[0].mxu0
      %v1972 = vadd.f32 0.0, %v1971
      %v1973 = vpop.f32.mrb[0].mxu0
      %1974 = vmatprep.mubr.f32.mxu0 0.0
      %1975 = vmatmul.mubr.f32.gmra.mrb[0].mxu0 %v1680
      %v1976 = vpop.f32.mrb[0].mxu0
      %v1977 = vadd.f32 0.0, %v1976
      %v1978 = vpop.f32.mrb[0].mxu0
      %1979 = vmatprep.mubr.f32.mxu0 0.0
      %1980 = vmatmul.mubr.f32.gmra.mrb[0].mxu0 %v1683
      %v1981 = vpop.f32.mrb[0].mxu0
      %v1982 = vadd.f32 0.0, %v1981
      %v1983 = vpop.f32.mrb[0].mxu0
      %1984 = vmatprep.mubr.f32.mxu0 0.0
      %1985 = vmatmul.mubr.f32.gmra.mrb[0].mxu0 %v1686
      %v1986 = vpop.f32.mrb[0].mxu0
      %v1987 = vadd.f32 0.0, %v1986
      %v1988 = vpop.f32.mrb[0].mxu0
      %1989 = vmatprep.mubr.f32.mxu0 0.0
      %1990 = vmatmul.mubr.f32.gmra.mrb[0].mxu0 %v1689
      %v1991 = vpop.f32.mrb[0].mxu0
      %v1992 = vadd.f32 0.0, %v1991
      %v1993 = vpop.f32.mrb[0].mxu0
      %1994 = vmatprep.mubr.f32.mxu0 0.0
      %1995 = vmatmul.mubr.f32.gmra.mrb[0].mxu0 %v1692
      %v1996 = vpop.f32.mrb[0].mxu0
      %v1997 = vadd.f32 0.0, %v1996
      %v1998 = vpop.f32.mrb[0].mxu0
      %1999 = vmatprep.mubr.f32.mxu0 0.0
      %2000 = vmatmul.mubr.f32.gmra.mrb[0].mxu0 %v1695
      %v2001 = vpop.f32.mrb[0].mxu0
      %v2002 = vadd.f32 0.0, %v2001
      %v2003 = vpop.f32.mrb[0].mxu0
      %2004 = vmatprep.mubr.f32.mxu0 0.0
      %2005 = vmatmul.mubr.f32.gmra.mrb[0].mxu0 %v1698
      %v2006 = vpop.f32.mrb[0].mxu0
      %v2007 = vadd.f32 0.0, %v2006
      %v2008 = vpop.f32.mrb[0].mxu0
      %2009 = vmatprep.mubr.f32.mxu0 0.0
      %2010 = vmatmul.mubr.f32.gmra.mrb[0].mxu0 %v1701
      %v2011 = vpop.f32.mrb[0].mxu0
      %v2012 = vadd.f32 0.0, %v2011
      %v2013 = vpop.f32.mrb[0].mxu0
      %2014 = vdwg.mxu0
      %v2015 = vadd.f32 %v1564, %v1776
      %v2016 = vadd.f32 %v1565, %v1778
      %v2017 = vadd.f32 %v1566, %v1937
      %v2018 = vadd.f32 %v1567, %v1782
      %v2019 = vadd.f32 %v1568, %v1784
      %v2020 = vadd.f32 %v1569, %v1942
      %v2021 = vadd.f32 %v1570, %v1788
      %v2022 = vadd.f32 %v1571, %v1790
      %v2023 = vadd.f32 %v1572, %v1947
      %v2024 = vadd.f32 %v1573, %v1794
      %v2025 = vadd.f32 %v1574, %v1796
      %v2026 = vadd.f32 %v1575, %v1952
      %v2027 = vadd.f32 %v1576, %v1800
      %v2028 = vadd.f32 %v1577, %v1802
      %v2029 = vadd.f32 %v1578, %v1957
      %v2030 = vadd.f32 %v1579, %v1806
      %v2031 = vadd.f32 %v1580, %v1808
      %v2032 = vadd.f32 %v1581, %v1962
      %v2033 = vadd.f32 %v1582, %v1812
      %v2034 = vadd.f32 %v1583, %v1814
      %v2035 = vadd.f32 %v1584, %v1967
      %v2036 = vadd.f32 %v1585, %v1818
      %v2037 = vadd.f32 %v1586, %v1820
      %v2038 = vadd.f32 %v1587, %v1972
      %v2039 = vadd.f32 %v1588, %v1824
      %v2040 = vadd.f32 %v1589, %v1826
      %v2041 = vadd.f32 %v1590, %v1977
      %v2042 = vadd.f32 %v1591, %v1830
      %v2043 = vadd.f32 %v1592, %v1832
      %v2044 = vadd.f32 %v1593, %v1982
      %v2045 = vadd.f32 %v1594, %v1836
      %v2046 = vadd.f32 %v1595, %v1838
      %v2047 = vadd.f32 %v1596, %v1987
      %v2048 = vadd.f32 %v1597, %v1842
      %v2049 = vadd.f32 %v1598, %v1844
      %v2050 = vadd.f32 %v1599, %v1992
      %v2051 = vadd.f32 %v1600, %v1848
      %v2052 = vadd.f32 %v1601, %v1850
      %v2053 = vadd.f32 %v1602, %v1997
      %v2054 = vadd.f32 %v1603, %v1854
      %v2055 = vadd.f32 %v1604, %v1856
      %v2056 = vadd.f32 %v1605, %v2002
      %v2057 = vadd.f32 %v1606, %v1860
      %v2058 = vadd.f32 %v1607, %v1862
      %v2059 = vadd.f32 %v1608, %v2007
      %v2060 = vadd.f32 %v1609, %v1866
      %v2061 = vadd.f32 %v1610, %v1868
      %v2062 = vadd.f32 %v1611, %v2012
      %v2063 = vld [vmem:[%s301] sm:$0x77]
      %v2064 = vld [vmem:[%s301 + $0x8] sm:$0x7]
      %s2065 = scalar_lea.vmem %s2, 512
      %v2066 = vld [vmem:[%s2065] sm:$0xff]
      %v2067 = vld [vmem:[%s2065 + $0x8] sm:$0xff]
      %v2068 = vld [vmem:[%s2065 + $0x10] sm:$0xff]
      %v2069 = vld [vmem:[%s2065 + $0x18] sm:$0xff]
      %v2070 = vld [vmem:[%s2065 + $0x20] sm:$0xff]
      %v2071 = vld [vmem:[%s2065 + $0x28] sm:$0xff]
      %v2072 = vld [vmem:[%s2065 + $0x30] sm:$0xff]
      %v2073 = vld [vmem:[%s2065 + $0x38] sm:$0xff]
      %v2074 = vld [vmem:[%s2065 + $0x40] sm:$0xff]
      %v2075 = vld [vmem:[%s2065 + $0x48] sm:$0xff]
      %v2076 = vld [vmem:[%s2065 + $0x50] sm:$0xff]
      %v2077 = vld [vmem:[%s2065 + $0x58] sm:$0xff]
      %v2078 = vld [vmem:[%s2065 + $0x60] sm:$0xff]
      %v2079 = vld [vmem:[%s2065 + $0x68] sm:$0xff]
      %v2080 = vld [vmem:[%s2065 + $0x70] sm:$0xff]
      %v2081 = vld [vmem:[%s2065 + $0x78] sm:$0xff]
      %v2084 = vcombine.high %v2063, %v2063
      %2085 = vrot.lane.b32.xlu0 %v2063, 111
      %v2086 = vpop.permute.xlu0 %2085
      %2087 = vrot.lane.b32.xlu0 %v2084, 111
      %v2088 = vpop.permute.xlu0 %2087
      %2089 = vrot.lane.b32.xlu0 %v2064, 111
      %v2090 = vpop.permute.xlu0 %2089
      %vm2091 = vcmask 908288
      %v2092 = vsel %vm2091, %v2086, %v2088
      %v2093 = vsel %vm2091, %v2088, %v2090
      %v2095 = vsel %vm405, %v2066, 0
      %v2098 = vsel %vm405, %v2067, 0
      %v2101 = vsel %vm405, %v2068, 0
      %v2104 = vsel %vm405, %v2069, 0
      %v2107 = vsel %vm405, %v2070, 0
      %v2110 = vsel %vm405, %v2071, 0
      %v2113 = vsel %vm405, %v2072, 0
      %v2116 = vsel %vm405, %v2073, 0
      %v2119 = vsel %vm405, %v2074, 0
      %v2122 = vsel %vm405, %v2075, 0
      %v2125 = vsel %vm405, %v2076, 0
      %v2128 = vsel %vm405, %v2077, 0
      %v2131 = vsel %vm405, %v2078, 0
      %v2134 = vsel %vm405, %v2079, 0
      %v2137 = vsel %vm405, %v2080, 0
      %v2140 = vsel %vm405, %v2081, 0
      %v2142 = vsel %vm454, %v2092, 0
      %v2144 = vsel %vm454, %v2093, 0
      %v2146 = vsel %vm454, %v2090, 0
      %2148 = vmatprep.subr.mxu0 %v2144
      %2149 = vmatpush1.msra.mxu0 %v2142
      %2150 = vmatprep.subr.mxu0 0.0
      %2151 = vmatpush1.msra.mxu0 0.0
      %2152 = vmatprep.subr.mxu0 0.0
      %2153 = vmatpush1.msra.mxu0 0.0
      %2154 = vmatprep.subr.mxu0 0.0
      %2155 = vmatpush1.msra.mxu0 0.0
      %2156 = vmatprep.subr.mxu0 0.0
      %2157 = vmatpush1.msra.mxu0 0.0
      %2158 = vmatprep.subr.mxu0 0.0
      %2159 = vmatpush1.msra.mxu0 0.0
      %2160 = vmatprep.subr.mxu0 0.0
      %2161 = vmatpush1.msra.mxu0 0.0
      %2162 = vmatprep.subr.mxu0 0.0
      %2163 = vmatpush1.msra.mxu0 0.0
      %2164 = vmatprep.subr.mxu0 0.0
      %2165 = vmatpush1.msra.mxu0 0.0
      %2166 = vmatprep.subr.mxu0 0.0
      %2167 = vmatpush1.msra.mxu0 0.0
      %2168 = vmatprep.subr.mxu0 0.0
      %2169 = vmatpush1.msra.mxu0 0.0
      %2170 = vmatprep.subr.mxu0 0.0
      %2171 = vmatpush1.msra.mxu0 0.0
      %2172 = vmatprep.subr.mxu0 0.0
      %2173 = vmatpush1.msra.mxu0 0.0
      %2174 = vmatprep.subr.mxu0 0.0
      %2175 = vmatpush1.msra.mxu0 0.0
      %2176 = vmatprep.subr.mxu0 0.0
      %2177 = vmatpush1.msra.mxu0 0.0
      %2178 = vmatprep.subr.mxu0 0.0
      %2179 = vmatpush1.msra.mxu0 0.0
      %2180 = vmatprep.subr.mxu0 0.0
      %2181 = vmatpush1.msra.mxu0 0.0
      %2182 = vmatprep.subr.mxu0 0.0
      %2183 = vmatpush1.msra.mxu0 0.0
      %2184 = vmatprep.subr.mxu0 0.0
      %2185 = vmatpush1.msra.mxu0 0.0
      %2186 = vmatprep.subr.mxu0 0.0
      %2187 = vmatpush1.msra.mxu0 0.0
      %2188 = vmatprep.subr.mxu0 0.0
      %2189 = vmatpush1.msra.mxu0 0.0
      %2190 = vmatprep.subr.mxu0 0.0
      %2191 = vmatpush1.msra.mxu0 0.0
      %2192 = vmatprep.subr.mxu0 0.0
      %2193 = vmatpush1.msra.mxu0 0.0
      %2194 = vmatprep.subr.mxu0 0.0
      %2195 = vmatpush1.msra.mxu0 0.0
      %2196 = vmatprep.subr.mxu0 0.0
      %2197 = vmatpush1.msra.mxu0 0.0
      %2198 = vmatprep.subr.mxu0 0.0
      %2199 = vmatpush1.msra.mxu0 0.0
      %2200 = vmatprep.subr.mxu0 0.0
      %2201 = vmatpush1.msra.mxu0 0.0
      %2202 = vmatprep.subr.mxu0 0.0
      %2203 = vmatpush1.msra.mxu0 0.0
      %2204 = vmatprep.subr.mxu0 0.0
      %2205 = vmatpush1.msra.mxu0 0.0
      %2206 = vmatprep.subr.mxu0 0.0
      %2207 = vmatpush1.msra.mxu0 0.0
      %2208 = vmatprep.subr.mxu0 0.0
      %2209 = vmatpush1.msra.mxu0 0.0
      %2210 = vmatprep.subr.mxu0 0.0
      %2211 = vmatpush1.msra.mxu0 0.0
      %2212 = vmatprep.mubr.f32.mxu0 0.0
      %2213 = vmatmul.mubr.f32.gmra.mrb[0].mxu0 %v2095
      %v2214 = vpop.f32.mrb[0].mxu0
      %v2215 = vadd.f32 0.0, %v2214
      %v2216 = vpop.f32.mrb[0].mxu0
      %v2217 = vadd.f32 0.0, %v2216
      %2218 = vmatprep.mubr.f32.mxu0 0.0
      %2219 = vmatmul.mubr.f32.gmra.mrb[0].mxu0 %v2098
      %v2220 = vpop.f32.mrb[0].mxu0
      %v2221 = vadd.f32 0.0, %v2220
      %v2222 = vpop.f32.mrb[0].mxu0
      %v2223 = vadd.f32 0.0, %v2222
      %2224 = vmatprep.mubr.f32.mxu0 0.0
      %2225 = vmatmul.mubr.f32.gmra.mrb[0].mxu0 %v2101
      %v2226 = vpop.f32.mrb[0].mxu0
      %v2227 = vadd.f32 0.0, %v2226
      %v2228 = vpop.f32.mrb[0].mxu0
      %v2229 = vadd.f32 0.0, %v2228
      %2230 = vmatprep.mubr.f32.mxu0 0.0
      %2231 = vmatmul.mubr.f32.gmra.mrb[0].mxu0 %v2104
      %v2232 = vpop.f32.mrb[0].mxu0
      %v2233 = vadd.f32 0.0, %v2232
      %v2234 = vpop.f32.mrb[0].mxu0
      %v2235 = vadd.f32 0.0, %v2234
      %2236 = vmatprep.mubr.f32.mxu0 0.0
      %2237 = vmatmul.mubr.f32.gmra.mrb[0].mxu0 %v2107
      %v2238 = vpop.f32.mrb[0].mxu0
      %v2239 = vadd.f32 0.0, %v2238
      %v2240 = vpop.f32.mrb[0].mxu0
      %v2241 = vadd.f32 0.0, %v2240
      %2242 = vmatprep.mubr.f32.mxu0 0.0
      %2243 = vmatmul.mubr.f32.gmra.mrb[0].mxu0 %v2110
      %v2244 = vpop.f32.mrb[0].mxu0
      %v2245 = vadd.f32 0.0, %v2244
      %v2246 = vpop.f32.mrb[0].mxu0
      %v2247 = vadd.f32 0.0, %v2246
      %2248 = vmatprep.mubr.f32.mxu0 0.0
      %2249 = vmatmul.mubr.f32.gmra.mrb[0].mxu0 %v2113
      %v2250 = vpop.f32.mrb[0].mxu0
      %v2251 = vadd.f32 0.0, %v2250
      %v2252 = vpop.f32.mrb[0].mxu0
      %v2253 = vadd.f32 0.0, %v2252
      %2254 = vmatprep.mubr.f32.mxu0 0.0
      %2255 = vmatmul.mubr.f32.gmra.mrb[0].mxu0 %v2116
      %v2256 = vpop.f32.mrb[0].mxu0
      %v2257 = vadd.f32 0.0, %v2256
      %v2258 = vpop.f32.mrb[0].mxu0
      %v2259 = vadd.f32 0.0, %v2258
      %2260 = vmatprep.mubr.f32.mxu0 0.0
      %2261 = vmatmul.mubr.f32.gmra.mrb[0].mxu0 %v2119
      %v2262 = vpop.f32.mrb[0].mxu0
      %v2263 = vadd.f32 0.0, %v2262
      %v2264 = vpop.f32.mrb[0].mxu0
      %v2265 = vadd.f32 0.0, %v2264
      %2266 = vmatprep.mubr.f32.mxu0 0.0
      %2267 = vmatmul.mubr.f32.gmra.mrb[0].mxu0 %v2122
      %v2268 = vpop.f32.mrb[0].mxu0
      %v2269 = vadd.f32 0.0, %v2268
      %v2270 = vpop.f32.mrb[0].mxu0
      %v2271 = vadd.f32 0.0, %v2270
      %2272 = vmatprep.mubr.f32.mxu0 0.0
      %2273 = vmatmul.mubr.f32.gmra.mrb[0].mxu0 %v2125
      %v2274 = vpop.f32.mrb[0].mxu0
      %v2275 = vadd.f32 0.0, %v2274
      %v2276 = vpop.f32.mrb[0].mxu0
      %v2277 = vadd.f32 0.0, %v2276
      %2278 = vmatprep.mubr.f32.mxu0 0.0
      %2279 = vmatmul.mubr.f32.gmra.mrb[0].mxu0 %v2128
      %v2280 = vpop.f32.mrb[0].mxu0
      %v2281 = vadd.f32 0.0, %v2280
      %v2282 = vpop.f32.mrb[0].mxu0
      %v2283 = vadd.f32 0.0, %v2282
      %2284 = vmatprep.mubr.f32.mxu0 0.0
      %2285 = vmatmul.mubr.f32.gmra.mrb[0].mxu0 %v2131
      %v2286 = vpop.f32.mrb[0].mxu0
      %v2287 = vadd.f32 0.0, %v2286
      %v2288 = vpop.f32.mrb[0].mxu0
      %v2289 = vadd.f32 0.0, %v2288
      %2290 = vmatprep.mubr.f32.mxu0 0.0
      %2291 = vmatmul.mubr.f32.gmra.mrb[0].mxu0 %v2134
      %v2292 = vpop.f32.mrb[0].mxu0
      %v2293 = vadd.f32 0.0, %v2292
      %v2294 = vpop.f32.mrb[0].mxu0
      %v2295 = vadd.f32 0.0, %v2294
      %2296 = vmatprep.mubr.f32.mxu0 0.0
      %2297 = vmatmul.mubr.f32.gmra.mrb[0].mxu0 %v2137
      %v2298 = vpop.f32.mrb[0].mxu0
      %v2299 = vadd.f32 0.0, %v2298
      %v2300 = vpop.f32.mrb[0].mxu0
      %v2301 = vadd.f32 0.0, %v2300
      %2302 = vmatprep.mubr.f32.mxu0 0.0
      %2303 = vmatmul.mubr.f32.gmra.mrb[0].mxu0 %v2140
      %v2304 = vpop.f32.mrb[0].mxu0
      %v2305 = vadd.f32 0.0, %v2304
      %v2306 = vpop.f32.mrb[0].mxu0
      %v2307 = vadd.f32 0.0, %v2306
      %2308 = vdwg.mxu0
      %2309 = vmatprep.subr.mxu0 0.0
      %2310 = vmatpush1.msra.mxu0 %v2146
      %2311 = vmatprep.subr.mxu0 0.0
      %2312 = vmatpush1.msra.mxu0 0.0
      %2313 = vmatprep.subr.mxu0 0.0
      %2314 = vmatpush1.msra.mxu0 0.0
      %2315 = vmatprep.subr.mxu0 0.0
      %2316 = vmatpush1.msra.mxu0 0.0
      %2317 = vmatprep.subr.mxu0 0.0
      %2318 = vmatpush1.msra.mxu0 0.0
      %2319 = vmatprep.subr.mxu0 0.0
      %2320 = vmatpush1.msra.mxu0 0.0
      %2321 = vmatprep.subr.mxu0 0.0
      %2322 = vmatpush1.msra.mxu0 0.0
      %2323 = vmatprep.subr.mxu0 0.0
      %2324 = vmatpush1.msra.mxu0 0.0
      %2325 = vmatprep.subr.mxu0 0.0
      %2326 = vmatpush1.msra.mxu0 0.0
      %2327 = vmatprep.subr.mxu0 0.0
      %2328 = vmatpush1.msra.mxu0 0.0
      %2329 = vmatprep.subr.mxu0 0.0
      %2330 = vmatpush1.msra.mxu0 0.0
      %2331 = vmatprep.subr.mxu0 0.0
      %2332 = vmatpush1.msra.mxu0 0.0
      %2333 = vmatprep.subr.mxu0 0.0
      %2334 = vmatpush1.msra.mxu0 0.0
      %2335 = vmatprep.subr.mxu0 0.0
      %2336 = vmatpush1.msra.mxu0 0.0
      %2337 = vmatprep.subr.mxu0 0.0
      %2338 = vmatpush1.msra.mxu0 0.0
      %2339 = vmatprep.subr.mxu0 0.0
      %2340 = vmatpush1.msra.mxu0 0.0
      %2341 = vmatprep.subr.mxu0 0.0
      %2342 = vmatpush1.msra.mxu0 0.0
      %2343 = vmatprep.subr.mxu0 0.0
      %2344 = vmatpush1.msra.mxu0 0.0
      %2345 = vmatprep.subr.mxu0 0.0
      %2346 = vmatpush1.msra.mxu0 0.0
      %2347 = vmatprep.subr.mxu0 0.0
      %2348 = vmatpush1.msra.mxu0 0.0
      %2349 = vmatprep.subr.mxu0 0.0
      %2350 = vmatpush1.msra.mxu0 0.0
      %2351 = vmatprep.subr.mxu0 0.0
      %2352 = vmatpush1.msra.mxu0 0.0
      %2353 = vmatprep.subr.mxu0 0.0
      %2354 = vmatpush1.msra.mxu0 0.0
      %2355 = vmatprep.subr.mxu0 0.0
      %2356 = vmatpush1.msra.mxu0 0.0
      %2357 = vmatprep.subr.mxu0 0.0
      %2358 = vmatpush1.msra.mxu0 0.0
      %2359 = vmatprep.subr.mxu0 0.0
      %2360 = vmatpush1.msra.mxu0 0.0
      %2361 = vmatprep.subr.mxu0 0.0
      %2362 = vmatpush1.msra.mxu0 0.0
      %2363 = vmatprep.subr.mxu0 0.0
      %2364 = vmatpush1.msra.mxu0 0.0
      %2365 = vmatprep.subr.mxu0 0.0
      %2366 = vmatpush1.msra.mxu0 0.0
      %2367 = vmatprep.subr.mxu0 0.0
      %2368 = vmatpush1.msra.mxu0 0.0
      %2369 = vmatprep.subr.mxu0 0.0
      %2370 = vmatpush1.msra.mxu0 0.0
      %2371 = vmatprep.subr.mxu0 0.0
      %2372 = vmatpush1.msra.mxu0 0.0
      %2373 = vmatprep.mubr.f32.mxu0 0.0
      %2374 = vmatmul.mubr.f32.gmra.mrb[0].mxu0 %v2095
      %v2375 = vpop.f32.mrb[0].mxu0
      %v2376 = vadd.f32 0.0, %v2375
      %v2377 = vpop.f32.mrb[0].mxu0
      %2378 = vmatprep.mubr.f32.mxu0 0.0
      %2379 = vmatmul.mubr.f32.gmra.mrb[0].mxu0 %v2098
      %v2380 = vpop.f32.mrb[0].mxu0
      %v2381 = vadd.f32 0.0, %v2380
      %v2382 = vpop.f32.mrb[0].mxu0
      %2383 = vmatprep.mubr.f32.mxu0 0.0
      %2384 = vmatmul.mubr.f32.gmra.mrb[0].mxu0 %v2101
      %v2385 = vpop.f32.mrb[0].mxu0
      %v2386 = vadd.f32 0.0, %v2385
      %v2387 = vpop.f32.mrb[0].mxu0
      %2388 = vmatprep.mubr.f32.mxu0 0.0
      %2389 = vmatmul.mubr.f32.gmra.mrb[0].mxu0 %v2104
      %v2390 = vpop.f32.mrb[0].mxu0
      %v2391 = vadd.f32 0.0, %v2390
      %v2392 = vpop.f32.mrb[0].mxu0
      %2393 = vmatprep.mubr.f32.mxu0 0.0
      %2394 = vmatmul.mubr.f32.gmra.mrb[0].mxu0 %v2107
      %v2395 = vpop.f32.mrb[0].mxu0
      %v2396 = vadd.f32 0.0, %v2395
      %v2397 = vpop.f32.mrb[0].mxu0
      %2398 = vmatprep.mubr.f32.mxu0 0.0
      %2399 = vmatmul.mubr.f32.gmra.mrb[0].mxu0 %v2110
      %v2400 = vpop.f32.mrb[0].mxu0
      %v2401 = vadd.f32 0.0, %v2400
      %v2402 = vpop.f32.mrb[0].mxu0
      %2403 = vmatprep.mubr.f32.mxu0 0.0
      %2404 = vmatmul.mubr.f32.gmra.mrb[0].mxu0 %v2113
      %v2405 = vpop.f32.mrb[0].mxu0
      %v2406 = vadd.f32 0.0, %v2405
      %v2407 = vpop.f32.mrb[0].mxu0
      %2408 = vmatprep.mubr.f32.mxu0 0.0
      %2409 = vmatmul.mubr.f32.gmra.mrb[0].mxu0 %v2116
      %v2410 = vpop.f32.mrb[0].mxu0
      %v2411 = vadd.f32 0.0, %v2410
      %v2412 = vpop.f32.mrb[0].mxu0
      %2413 = vmatprep.mubr.f32.mxu0 0.0
      %2414 = vmatmul.mubr.f32.gmra.mrb[0].mxu0 %v2119
      %v2415 = vpop.f32.mrb[0].mxu0
      %v2416 = vadd.f32 0.0, %v2415
      %v2417 = vpop.f32.mrb[0].mxu0
      %2418 = vmatprep.mubr.f32.mxu0 0.0
      %2419 = vmatmul.mubr.f32.gmra.mrb[0].mxu0 %v2122
      %v2420 = vpop.f32.mrb[0].mxu0
      %v2421 = vadd.f32 0.0, %v2420
      %v2422 = vpop.f32.mrb[0].mxu0
      %2423 = vmatprep.mubr.f32.mxu0 0.0
      %2424 = vmatmul.mubr.f32.gmra.mrb[0].mxu0 %v2125
      %v2425 = vpop.f32.mrb[0].mxu0
      %v2426 = vadd.f32 0.0, %v2425
      %v2427 = vpop.f32.mrb[0].mxu0
      %2428 = vmatprep.mubr.f32.mxu0 0.0
      %2429 = vmatmul.mubr.f32.gmra.mrb[0].mxu0 %v2128
      %v2430 = vpop.f32.mrb[0].mxu0
      %v2431 = vadd.f32 0.0, %v2430
      %v2432 = vpop.f32.mrb[0].mxu0
      %2433 = vmatprep.mubr.f32.mxu0 0.0
      %2434 = vmatmul.mubr.f32.gmra.mrb[0].mxu0 %v2131
      %v2435 = vpop.f32.mrb[0].mxu0
      %v2436 = vadd.f32 0.0, %v2435
      %v2437 = vpop.f32.mrb[0].mxu0
      %2438 = vmatprep.mubr.f32.mxu0 0.0
      %2439 = vmatmul.mubr.f32.gmra.mrb[0].mxu0 %v2134
      %v2440 = vpop.f32.mrb[0].mxu0
      %v2441 = vadd.f32 0.0, %v2440
      %v2442 = vpop.f32.mrb[0].mxu0
      %2443 = vmatprep.mubr.f32.mxu0 0.0
      %2444 = vmatmul.mubr.f32.gmra.mrb[0].mxu0 %v2137
      %v2445 = vpop.f32.mrb[0].mxu0
      %v2446 = vadd.f32 0.0, %v2445
      %v2447 = vpop.f32.mrb[0].mxu0
      %2448 = vmatprep.mubr.f32.mxu0 0.0
      %2449 = vmatmul.mubr.f32.gmra.mrb[0].mxu0 %v2140
      %v2450 = vpop.f32.mrb[0].mxu0
      %v2451 = vadd.f32 0.0, %v2450
      %v2452 = vpop.f32.mrb[0].mxu0
      %2453 = vdwg.mxu0
      %v2454 = vadd.f32 %v2015, %v2215
      %v2455 = vadd.f32 %v2016, %v2217
      %v2456 = vadd.f32 %v2017, %v2376
      %v2457 = vadd.f32 %v2018, %v2221
      %v2458 = vadd.f32 %v2019, %v2223
      %v2459 = vadd.f32 %v2020, %v2381
      %v2460 = vadd.f32 %v2021, %v2227
      %v2461 = vadd.f32 %v2022, %v2229
      %v2462 = vadd.f32 %v2023, %v2386
      %v2463 = vadd.f32 %v2024, %v2233
      %v2464 = vadd.f32 %v2025, %v2235
      %v2465 = vadd.f32 %v2026, %v2391
      %v2466 = vadd.f32 %v2027, %v2239
      %v2467 = vadd.f32 %v2028, %v2241
      %v2468 = vadd.f32 %v2029, %v2396
      %v2469 = vadd.f32 %v2030, %v2245
      %v2470 = vadd.f32 %v2031, %v2247
      %v2471 = vadd.f32 %v2032, %v2401
      %v2472 = vadd.f32 %v2033, %v2251
      %v2473 = vadd.f32 %v2034, %v2253
      %v2474 = vadd.f32 %v2035, %v2406
      %v2475 = vadd.f32 %v2036, %v2257
      %v2476 = vadd.f32 %v2037, %v2259
      %v2477 = vadd.f32 %v2038, %v2411
      %v2478 = vadd.f32 %v2039, %v2263
      %v2479 = vadd.f32 %v2040, %v2265
      %v2480 = vadd.f32 %v2041, %v2416
      %v2481 = vadd.f32 %v2042, %v2269
      %v2482 = vadd.f32 %v2043, %v2271
      %v2483 = vadd.f32 %v2044, %v2421
      %v2484 = vadd.f32 %v2045, %v2275
      %v2485 = vadd.f32 %v2046, %v2277
      %v2486 = vadd.f32 %v2047, %v2426
      %v2487 = vadd.f32 %v2048, %v2281
      %v2488 = vadd.f32 %v2049, %v2283
      %v2489 = vadd.f32 %v2050, %v2431
      %v2490 = vadd.f32 %v2051, %v2287
      %v2491 = vadd.f32 %v2052, %v2289
      %v2492 = vadd.f32 %v2053, %v2436
      %v2493 = vadd.f32 %v2054, %v2293
      %v2494 = vadd.f32 %v2055, %v2295
      %v2495 = vadd.f32 %v2056, %v2441
      %v2496 = vadd.f32 %v2057, %v2299
      %v2497 = vadd.f32 %v2058, %v2301
      %v2498 = vadd.f32 %v2059, %v2446
      %v2499 = vadd.f32 %v2060, %v2305
      %v2500 = vadd.f32 %v2061, %v2307
      %v2501 = vadd.f32 %v2062, %v2451
      %v2502 = vld [vmem:[%s301] sm:$0x77]
      %v2503 = vld [vmem:[%s301 + $0x8] sm:$0x7]
      %2504 = vrot.lane.b32.xlu0 %v1162, 18
      %v2505 = vpop.permute.xlu0 %2504
      %2506 = vrot.lane.b32.xlu0 %v1158, 18
      %v2507 = vpop.permute.xlu0 %2506
      %v2508 = vrot.slane %v2505, 4
      %vm2509 = vcmask 146432
      %v2510 = vsel %vm2509, %v2508, %v2505
      %v2511 = vsel %vm2509, %v2508, %v2507
      %v2514 = vmul.f32 %v2502, %v2510
      %v2515 = vmul.f32 %v2503, %v2511
      %s2516 = scalar_lea.vmem %s2, 640
      %v2517 = vld [vmem:[%s2516] sm:$0xff]
      %v2518 = vld [vmem:[%s2516 + $0x8] sm:$0xff]
      %v2519 = vld [vmem:[%s2516 + $0x10] sm:$0xff]
      %v2520 = vld [vmem:[%s2516 + $0x18] sm:$0xff]
      %v2521 = vld [vmem:[%s2516 + $0x20] sm:$0xff]
      %v2522 = vld [vmem:[%s2516 + $0x28] sm:$0xff]
      %v2523 = vld [vmem:[%s2516 + $0x30] sm:$0xff]
      %v2524 = vld [vmem:[%s2516 + $0x38] sm:$0xff]
      %v2525 = vld [vmem:[%s2516 + $0x40] sm:$0xff]
      %v2526 = vld [vmem:[%s2516 + $0x48] sm:$0xff]
      %v2527 = vld [vmem:[%s2516 + $0x50] sm:$0xff]
      %v2528 = vld [vmem:[%s2516 + $0x58] sm:$0xff]
      %v2529 = vld [vmem:[%s2516 + $0x60] sm:$0xff]
      %v2530 = vld [vmem:[%s2516 + $0x68] sm:$0xff]
      %v2531 = vld [vmem:[%s2516 + $0x70] sm:$0xff]
      %v2532 = vld [vmem:[%s2516 + $0x78] sm:$0xff]
      %v2535 = vcombine.high %v2514, %v2514
      %2536 = vrot.lane.b32.xlu0 %v2514, 110
      %v2537 = vpop.permute.xlu0 %2536
      %2538 = vrot.lane.b32.xlu0 %v2535, 110
      %v2539 = vpop.permute.xlu0 %2538
      %2540 = vrot.lane.b32.xlu0 %v2515, 110
      %v2541 = vpop.permute.xlu0 %2540
      %vm2542 = vcmask 900096
      %v2543 = vsel %vm2542, %v2537, %v2539
      %v2544 = vsel %vm2542, %v2539, %v2541
      %v2546 = vsel %vm405, %v2517, 0
      %v2549 = vsel %vm405, %v2518, 0
      %v2552 = vsel %vm405, %v2519, 0
      %v2555 = vsel %vm405, %v2520, 0
      %v2558 = vsel %vm405, %v2521, 0
      %v2561 = vsel %vm405, %v2522, 0
      %v2564 = vsel %vm405, %v2523, 0
      %v2567 = vsel %vm405, %v2524, 0
      %v2570 = vsel %vm405, %v2525, 0
      %v2573 = vsel %vm405, %v2526, 0
      %v2576 = vsel %vm405, %v2527, 0
      %v2579 = vsel %vm405, %v2528, 0
      %v2582 = vsel %vm405, %v2529, 0
      %v2585 = vsel %vm405, %v2530, 0
      %v2588 = vsel %vm405, %v2531, 0
      %v2591 = vsel %vm405, %v2532, 0
      %v2593 = vsel %vm454, %v2543, 0
      %v2595 = vsel %vm454, %v2544, 0
      %v2597 = vsel %vm454, %v2541, 0
      %2599 = vmatprep.subr.mxu0 %v2595
      %2600 = vmatpush1.msra.mxu0 %v2593
      %2601 = vmatprep.subr.mxu0 0.0
      %2602 = vmatpush1.msra.mxu0 0.0
      %2603 = vmatprep.subr.mxu0 0.0
      %2604 = vmatpush1.msra.mxu0 0.0
      %2605 = vmatprep.subr.mxu0 0.0
      %2606 = vmatpush1.msra.mxu0 0.0
      %2607 = vmatprep.subr.mxu0 0.0
      %2608 = vmatpush1.msra.mxu0 0.0
      %2609 = vmatprep.subr.mxu0 0.0
      %2610 = vmatpush1.msra.mxu0 0.0
      %2611 = vmatprep.subr.mxu0 0.0
      %2612 = vmatpush1.msra.mxu0 0.0
      %2613 = vmatprep.subr.mxu0 0.0
      %2614 = vmatpush1.msra.mxu0 0.0
      %2615 = vmatprep.subr.mxu0 0.0
      %2616 = vmatpush1.msra.mxu0 0.0
      %2617 = vmatprep.subr.mxu0 0.0
      %2618 = vmatpush1.msra.mxu0 0.0
      %2619 = vmatprep.subr.mxu0 0.0
      %2620 = vmatpush1.msra.mxu0 0.0
      %2621 = vmatprep.subr.mxu0 0.0
      %2622 = vmatpush1.msra.mxu0 0.0
      %2623 = vmatprep.subr.mxu0 0.0
      %2624 = vmatpush1.msra.mxu0 0.0
      %2625 = vmatprep.subr.mxu0 0.0
      %2626 = vmatpush1.msra.mxu0 0.0
      %2627 = vmatprep.subr.mxu0 0.0
      %2628 = vmatpush1.msra.mxu0 0.0
      %2629 = vmatprep.subr.mxu0 0.0
      %2630 = vmatpush1.msra.mxu0 0.0
      %2631 = vmatprep.subr.mxu0 0.0
      %2632 = vmatpush1.msra.mxu0 0.0
      %2633 = vmatprep.subr.mxu0 0.0
      %2634 = vmatpush1.msra.mxu0 0.0
      %2635 = vmatprep.subr.mxu0 0.0
      %2636 = vmatpush1.msra.mxu0 0.0
      %2637 = vmatprep.subr.mxu0 0.0
      %2638 = vmatpush1.msra.mxu0 0.0
      %2639 = vmatprep.subr.mxu0 0.0
      %2640 = vmatpush1.msra.mxu0 0.0
      %2641 = vmatprep.subr.mxu0 0.0
      %2642 = vmatpush1.msra.mxu0 0.0
      %2643 = vmatprep.subr.mxu0 0.0
      %2644 = vmatpush1.msra.mxu0 0.0
      %2645 = vmatprep.subr.mxu0 0.0
      %2646 = vmatpush1.msra.mxu0 0.0
      %2647 = vmatprep.subr.mxu0 0.0
      %2648 = vmatpush1.msra.mxu0 0.0
      %2649 = vmatprep.subr.mxu0 0.0
      %2650 = vmatpush1.msra.mxu0 0.0
      %2651 = vmatprep.subr.mxu0 0.0
      %2652 = vmatpush1.msra.mxu0 0.0
      %2653 = vmatprep.subr.mxu0 0.0
      %2654 = vmatpush1.msra.mxu0 0.0
      %2655 = vmatprep.subr.mxu0 0.0
      %2656 = vmatpush1.msra.mxu0 0.0
      %2657 = vmatprep.subr.mxu0 0.0
      %2658 = vmatpush1.msra.mxu0 0.0
      %2659 = vmatprep.subr.mxu0 0.0
      %2660 = vmatpush1.msra.mxu0 0.0
      %2661 = vmatprep.subr.mxu0 0.0
      %2662 = vmatpush1.msra.mxu0 0.0
      %2663 = vmatprep.mubr.f32.mxu0 0.0
      %2664 = vmatmul.mubr.f32.gmra.mrb[0].mxu0 %v2546
      %v2665 = vpop.f32.mrb[0].mxu0
      %v2666 = vadd.f32 0.0, %v2665
      %v2667 = vpop.f32.mrb[0].mxu0
      %v2668 = vadd.f32 0.0, %v2667
      %2669 = vmatprep.mubr.f32.mxu0 0.0
      %2670 = vmatmul.mubr.f32.gmra.mrb[0].mxu0 %v2549
      %v2671 = vpop.f32.mrb[0].mxu0
      %v2672 = vadd.f32 0.0, %v2671
      %v2673 = vpop.f32.mrb[0].mxu0
      %v2674 = vadd.f32 0.0, %v2673
      %2675 = vmatprep.mubr.f32.mxu0 0.0
      %2676 = vmatmul.mubr.f32.gmra.mrb[0].mxu0 %v2552
      %v2677 = vpop.f32.mrb[0].mxu0
      %v2678 = vadd.f32 0.0, %v2677
      %v2679 = vpop.f32.mrb[0].mxu0
      %v2680 = vadd.f32 0.0, %v2679
      %2681 = vmatprep.mubr.f32.mxu0 0.0
      %2682 = vmatmul.mubr.f32.gmra.mrb[0].mxu0 %v2555
      %v2683 = vpop.f32.mrb[0].mxu0
      %v2684 = vadd.f32 0.0, %v2683
      %v2685 = vpop.f32.mrb[0].mxu0
      %v2686 = vadd.f32 0.0, %v2685
      %2687 = vmatprep.mubr.f32.mxu0 0.0
      %2688 = vmatmul.mubr.f32.gmra.mrb[0].mxu0 %v2558
      %v2689 = vpop.f32.mrb[0].mxu0
      %v2690 = vadd.f32 0.0, %v2689
      %v2691 = vpop.f32.mrb[0].mxu0
      %v2692 = vadd.f32 0.0, %v2691
      %2693 = vmatprep.mubr.f32.mxu0 0.0
      %2694 = vmatmul.mubr.f32.gmra.mrb[0].mxu0 %v2561
      %v2695 = vpop.f32.mrb[0].mxu0
      %v2696 = vadd.f32 0.0, %v2695
      %v2697 = vpop.f32.mrb[0].mxu0
      %v2698 = vadd.f32 0.0, %v2697
      %2699 = vmatprep.mubr.f32.mxu0 0.0
      %2700 = vmatmul.mubr.f32.gmra.mrb[0].mxu0 %v2564
      %v2701 = vpop.f32.mrb[0].mxu0
      %v2702 = vadd.f32 0.0, %v2701
      %v2703 = vpop.f32.mrb[0].mxu0
      %v2704 = vadd.f32 0.0, %v2703
      %2705 = vmatprep.mubr.f32.mxu0 0.0
      %2706 = vmatmul.mubr.f32.gmra.mrb[0].mxu0 %v2567
      %v2707 = vpop.f32.mrb[0].mxu0
      %v2708 = vadd.f32 0.0, %v2707
      %v2709 = vpop.f32.mrb[0].mxu0
      %v2710 = vadd.f32 0.0, %v2709
      %2711 = vmatprep.mubr.f32.mxu0 0.0
      %2712 = vmatmul.mubr.f32.gmra.mrb[0].mxu0 %v2570
      %v2713 = vpop.f32.mrb[0].mxu0
      %v2714 = vadd.f32 0.0, %v2713
      %v2715 = vpop.f32.mrb[0].mxu0
      %v2716 = vadd.f32 0.0, %v2715
      %2717 = vmatprep.mubr.f32.mxu0 0.0
      %2718 = vmatmul.mubr.f32.gmra.mrb[0].mxu0 %v2573
      %v2719 = vpop.f32.mrb[0].mxu0
      %v2720 = vadd.f32 0.0, %v2719
      %v2721 = vpop.f32.mrb[0].mxu0
      %v2722 = vadd.f32 0.0, %v2721
      %2723 = vmatprep.mubr.f32.mxu0 0.0
      %2724 = vmatmul.mubr.f32.gmra.mrb[0].mxu0 %v2576
      %v2725 = vpop.f32.mrb[0].mxu0
      %v2726 = vadd.f32 0.0, %v2725
      %v2727 = vpop.f32.mrb[0].mxu0
      %v2728 = vadd.f32 0.0, %v2727
      %2729 = vmatprep.mubr.f32.mxu0 0.0
      %2730 = vmatmul.mubr.f32.gmra.mrb[0].mxu0 %v2579
      %v2731 = vpop.f32.mrb[0].mxu0
      %v2732 = vadd.f32 0.0, %v2731
      %v2733 = vpop.f32.mrb[0].mxu0
      %v2734 = vadd.f32 0.0, %v2733
      %2735 = vmatprep.mubr.f32.mxu0 0.0
      %2736 = vmatmul.mubr.f32.gmra.mrb[0].mxu0 %v2582
      %v2737 = vpop.f32.mrb[0].mxu0
      %v2738 = vadd.f32 0.0, %v2737
      %v2739 = vpop.f32.mrb[0].mxu0
      %v2740 = vadd.f32 0.0, %v2739
      %2741 = vmatprep.mubr.f32.mxu0 0.0
      %2742 = vmatmul.mubr.f32.gmra.mrb[0].mxu0 %v2585
      %v2743 = vpop.f32.mrb[0].mxu0
      %v2744 = vadd.f32 0.0, %v2743
      %v2745 = vpop.f32.mrb[0].mxu0
      %v2746 = vadd.f32 0.0, %v2745
      %2747 = vmatprep.mubr.f32.mxu0 0.0
      %2748 = vmatmul.mubr.f32.gmra.mrb[0].mxu0 %v2588
      %v2749 = vpop.f32.mrb[0].mxu0
      %v2750 = vadd.f32 0.0, %v2749
      %v2751 = vpop.f32.mrb[0].mxu0
      %v2752 = vadd.f32 0.0, %v2751
      %2753 = vmatprep.mubr.f32.mxu0 0.0
      %2754 = vmatmul.mubr.f32.gmra.mrb[0].mxu0 %v2591
      %v2755 = vpop.f32.mrb[0].mxu0
      %v2756 = vadd.f32 0.0, %v2755
      %v2757 = vpop.f32.mrb[0].mxu0
      %v2758 = vadd.f32 0.0, %v2757
      %2759 = vdwg.mxu0
      %2760 = vmatprep.subr.mxu0 0.0
      %2761 = vmatpush1.msra.mxu0 %v2597
      %2762 = vmatprep.subr.mxu0 0.0
      %2763 = vmatpush1.msra.mxu0 0.0
      %2764 = vmatprep.subr.mxu0 0.0
      %2765 = vmatpush1.msra.mxu0 0.0
      %2766 = vmatprep.subr.mxu0 0.0
      %2767 = vmatpush1.msra.mxu0 0.0
      %2768 = vmatprep.subr.mxu0 0.0
      %2769 = vmatpush1.msra.mxu0 0.0
      %2770 = vmatprep.subr.mxu0 0.0
      %2771 = vmatpush1.msra.mxu0 0.0
      %2772 = vmatprep.subr.mxu0 0.0
      %2773 = vmatpush1.msra.mxu0 0.0
      %2774 = vmatprep.subr.mxu0 0.0
      %2775 = vmatpush1.msra.mxu0 0.0
      %2776 = vmatprep.subr.mxu0 0.0
      %2777 = vmatpush1.msra.mxu0 0.0
      %2778 = vmatprep.subr.mxu0 0.0
      %2779 = vmatpush1.msra.mxu0 0.0
      %2780 = vmatprep.subr.mxu0 0.0
      %2781 = vmatpush1.msra.mxu0 0.0
      %2782 = vmatprep.subr.mxu0 0.0
      %2783 = vmatpush1.msra.mxu0 0.0
      %2784 = vmatprep.subr.mxu0 0.0
      %2785 = vmatpush1.msra.mxu0 0.0
      %2786 = vmatprep.subr.mxu0 0.0
      %2787 = vmatpush1.msra.mxu0 0.0
      %2788 = vmatprep.subr.mxu0 0.0
      %2789 = vmatpush1.msra.mxu0 0.0
      %2790 = vmatprep.subr.mxu0 0.0
      %2791 = vmatpush1.msra.mxu0 0.0
      %2792 = vmatprep.subr.mxu0 0.0
      %2793 = vmatpush1.msra.mxu0 0.0
      %2794 = vmatprep.subr.mxu0 0.0
      %2795 = vmatpush1.msra.mxu0 0.0
      %2796 = vmatprep.subr.mxu0 0.0
      %2797 = vmatpush1.msra.mxu0 0.0
      %2798 = vmatprep.subr.mxu0 0.0
      %2799 = vmatpush1.msra.mxu0 0.0
      %2800 = vmatprep.subr.mxu0 0.0
      %2801 = vmatpush1.msra.mxu0 0.0
      %2802 = vmatprep.subr.mxu0 0.0
      %2803 = vmatpush1.msra.mxu0 0.0
      %2804 = vmatprep.subr.mxu0 0.0
      %2805 = vmatpush1.msra.mxu0 0.0
      %2806 = vmatprep.subr.mxu0 0.0
      %2807 = vmatpush1.msra.mxu0 0.0
      %2808 = vmatprep.subr.mxu0 0.0
      %2809 = vmatpush1.msra.mxu0 0.0
      %2810 = vmatprep.subr.mxu0 0.0
      %2811 = vmatpush1.msra.mxu0 0.0
      %2812 = vmatprep.subr.mxu0 0.0
      %2813 = vmatpush1.msra.mxu0 0.0
      %2814 = vmatprep.subr.mxu0 0.0
      %2815 = vmatpush1.msra.mxu0 0.0
      %2816 = vmatprep.subr.mxu0 0.0
      %2817 = vmatpush1.msra.mxu0 0.0
      %2818 = vmatprep.subr.mxu0 0.0
      %2819 = vmatpush1.msra.mxu0 0.0
      %2820 = vmatprep.subr.mxu0 0.0
      %2821 = vmatpush1.msra.mxu0 0.0
      %2822 = vmatprep.subr.mxu0 0.0
      %2823 = vmatpush1.msra.mxu0 0.0
      %2824 = vmatprep.mubr.f32.mxu0 0.0
      %2825 = vmatmul.mubr.f32.gmra.mrb[0].mxu0 %v2546
      %v2826 = vpop.f32.mrb[0].mxu0
      %v2827 = vadd.f32 0.0, %v2826
      %v2828 = vpop.f32.mrb[0].mxu0
      %2829 = vmatprep.mubr.f32.mxu0 0.0
      %2830 = vmatmul.mubr.f32.gmra.mrb[0].mxu0 %v2549
      %v2831 = vpop.f32.mrb[0].mxu0
      %v2832 = vadd.f32 0.0, %v2831
      %v2833 = vpop.f32.mrb[0].mxu0
      %2834 = vmatprep.mubr.f32.mxu0 0.0
      %2835 = vmatmul.mubr.f32.gmra.mrb[0].mxu0 %v2552
      %v2836 = vpop.f32.mrb[0].mxu0
      %v2837 = vadd.f32 0.0, %v2836
      %v2838 = vpop.f32.mrb[0].mxu0
      %2839 = vmatprep.mubr.f32.mxu0 0.0
      %2840 = vmatmul.mubr.f32.gmra.mrb[0].mxu0 %v2555
      %v2841 = vpop.f32.mrb[0].mxu0
      %v2842 = vadd.f32 0.0, %v2841
      %v2843 = vpop.f32.mrb[0].mxu0
      %2844 = vmatprep.mubr.f32.mxu0 0.0
      %2845 = vmatmul.mubr.f32.gmra.mrb[0].mxu0 %v2558
      %v2846 = vpop.f32.mrb[0].mxu0
      %v2847 = vadd.f32 0.0, %v2846
      %v2848 = vpop.f32.mrb[0].mxu0
      %2849 = vmatprep.mubr.f32.mxu0 0.0
      %2850 = vmatmul.mubr.f32.gmra.mrb[0].mxu0 %v2561
      %v2851 = vpop.f32.mrb[0].mxu0
      %v2852 = vadd.f32 0.0, %v2851
      %v2853 = vpop.f32.mrb[0].mxu0
      %2854 = vmatprep.mubr.f32.mxu0 0.0
      %2855 = vmatmul.mubr.f32.gmra.mrb[0].mxu0 %v2564
      %v2856 = vpop.f32.mrb[0].mxu0
      %v2857 = vadd.f32 0.0, %v2856
      %v2858 = vpop.f32.mrb[0].mxu0
      %2859 = vmatprep.mubr.f32.mxu0 0.0
      %2860 = vmatmul.mubr.f32.gmra.mrb[0].mxu0 %v2567
      %v2861 = vpop.f32.mrb[0].mxu0
      %v2862 = vadd.f32 0.0, %v2861
      %v2863 = vpop.f32.mrb[0].mxu0
      %2864 = vmatprep.mubr.f32.mxu0 0.0
      %2865 = vmatmul.mubr.f32.gmra.mrb[0].mxu0 %v2570
      %v2866 = vpop.f32.mrb[0].mxu0
      %v2867 = vadd.f32 0.0, %v2866
      %v2868 = vpop.f32.mrb[0].mxu0
      %2869 = vmatprep.mubr.f32.mxu0 0.0
      %2870 = vmatmul.mubr.f32.gmra.mrb[0].mxu0 %v2573
      %v2871 = vpop.f32.mrb[0].mxu0
      %v2872 = vadd.f32 0.0, %v2871
      %v2873 = vpop.f32.mrb[0].mxu0
      %2874 = vmatprep.mubr.f32.mxu0 0.0
      %2875 = vmatmul.mubr.f32.gmra.mrb[0].mxu0 %v2576
      %v2876 = vpop.f32.mrb[0].mxu0
      %v2877 = vadd.f32 0.0, %v2876
      %v2878 = vpop.f32.mrb[0].mxu0
      %2879 = vmatprep.mubr.f32.mxu0 0.0
      %2880 = vmatmul.mubr.f32.gmra.mrb[0].mxu0 %v2579
      %v2881 = vpop.f32.mrb[0].mxu0
      %v2882 = vadd.f32 0.0, %v2881
      %v2883 = vpop.f32.mrb[0].mxu0
      %2884 = vmatprep.mubr.f32.mxu0 0.0
      %2885 = vmatmul.mubr.f32.gmra.mrb[0].mxu0 %v2582
      %v2886 = vpop.f32.mrb[0].mxu0
      %v2887 = vadd.f32 0.0, %v2886
      %v2888 = vpop.f32.mrb[0].mxu0
      %2889 = vmatprep.mubr.f32.mxu0 0.0
      %2890 = vmatmul.mubr.f32.gmra.mrb[0].mxu0 %v2585
      %v2891 = vpop.f32.mrb[0].mxu0
      %v2892 = vadd.f32 0.0, %v2891
      %v2893 = vpop.f32.mrb[0].mxu0
      %2894 = vmatprep.mubr.f32.mxu0 0.0
      %2895 = vmatmul.mubr.f32.gmra.mrb[0].mxu0 %v2588
      %v2896 = vpop.f32.mrb[0].mxu0
      %v2897 = vadd.f32 0.0, %v2896
      %v2898 = vpop.f32.mrb[0].mxu0
      %2899 = vmatprep.mubr.f32.mxu0 0.0
      %2900 = vmatmul.mubr.f32.gmra.mrb[0].mxu0 %v2591
      %v2901 = vpop.f32.mrb[0].mxu0
      %v2902 = vadd.f32 0.0, %v2901
      %v2903 = vpop.f32.mrb[0].mxu0
      %2904 = vdwg.mxu0
      %v2905 = vadd.f32 %v2454, %v2666
      %v2906 = vadd.f32 %v2455, %v2668
      %v2907 = vadd.f32 %v2456, %v2827
      %v2908 = vadd.f32 %v2457, %v2672
      %v2909 = vadd.f32 %v2458, %v2674
      %v2910 = vadd.f32 %v2459, %v2832
      %v2911 = vadd.f32 %v2460, %v2678
      %v2912 = vadd.f32 %v2461, %v2680
      %v2913 = vadd.f32 %v2462, %v2837
      %v2914 = vadd.f32 %v2463, %v2684
      %v2915 = vadd.f32 %v2464, %v2686
      %v2916 = vadd.f32 %v2465, %v2842
      %v2917 = vadd.f32 %v2466, %v2690
      %v2918 = vadd.f32 %v2467, %v2692
      %v2919 = vadd.f32 %v2468, %v2847
      %v2920 = vadd.f32 %v2469, %v2696
      %v2921 = vadd.f32 %v2470, %v2698
      %v2922 = vadd.f32 %v2471, %v2852
      %v2923 = vadd.f32 %v2472, %v2702
      %v2924 = vadd.f32 %v2473, %v2704
      %v2925 = vadd.f32 %v2474, %v2857
      %v2926 = vadd.f32 %v2475, %v2708
      %v2927 = vadd.f32 %v2476, %v2710
      %v2928 = vadd.f32 %v2477, %v2862
      %v2929 = vadd.f32 %v2478, %v2714
      %v2930 = vadd.f32 %v2479, %v2716
      %v2931 = vadd.f32 %v2480, %v2867
      %v2932 = vadd.f32 %v2481, %v2720
      %v2933 = vadd.f32 %v2482, %v2722
      %v2934 = vadd.f32 %v2483, %v2872
      %v2935 = vadd.f32 %v2484, %v2726
      %v2936 = vadd.f32 %v2485, %v2728
      %v2937 = vadd.f32 %v2486, %v2877
      %v2938 = vadd.f32 %v2487, %v2732
      %v2939 = vadd.f32 %v2488, %v2734
      %v2940 = vadd.f32 %v2489, %v2882
      %v2941 = vadd.f32 %v2490, %v2738
      %v2942 = vadd.f32 %v2491, %v2740
      %v2943 = vadd.f32 %v2492, %v2887
      %v2944 = vadd.f32 %v2493, %v2744
      %v2945 = vadd.f32 %v2494, %v2746
      %v2946 = vadd.f32 %v2495, %v2892
      %v2947 = vadd.f32 %v2496, %v2750
      %v2948 = vadd.f32 %v2497, %v2752
      %v2949 = vadd.f32 %v2498, %v2897
      %v2950 = vadd.f32 %v2499, %v2756
      %v2951 = vadd.f32 %v2500, %v2758
      %v2952 = vadd.f32 %v2501, %v2902
      %v2953 = vld [vmem:[%s301] sm:$0x77]
      %v2954 = vld [vmem:[%s301 + $0x8] sm:$0x7]
      %2955 = vrot.lane.b32.xlu0 %v356, 32
      %v2956 = vpop.permute.xlu0 %2955
      %2957 = vrot.lane.b32.xlu0 %v352, 32
      %v2958 = vpop.permute.xlu0 %2957
      %v2959 = vrot.slane %v2956, 4
      %vm2960 = vcmask 261120
      %v2961 = vsel %vm2960, %v2959, %v2956
      %v2962 = vsel %vm2960, %v2959, %v2958
      %v2965 = vmul.f32 %v2953, %v2961
      %v2966 = vmul.f32 %v2954, %v2962
      %s2967 = scalar_lea.vmem %s2, 768
      %v2968 = vld [vmem:[%s2967] sm:$0xff]
      %v2969 = vld [vmem:[%s2967 + $0x8] sm:$0xff]
      %v2970 = vld [vmem:[%s2967 + $0x10] sm:$0xff]
      %v2971 = vld [vmem:[%s2967 + $0x18] sm:$0xff]
      %v2972 = vld [vmem:[%s2967 + $0x20] sm:$0xff]
      %v2973 = vld [vmem:[%s2967 + $0x28] sm:$0xff]
      %v2974 = vld [vmem:[%s2967 + $0x30] sm:$0xff]
      %v2975 = vld [vmem:[%s2967 + $0x38] sm:$0xff]
      %v2976 = vld [vmem:[%s2967 + $0x40] sm:$0xff]
      %v2977 = vld [vmem:[%s2967 + $0x48] sm:$0xff]
      %v2978 = vld [vmem:[%s2967 + $0x50] sm:$0xff]
      %v2979 = vld [vmem:[%s2967 + $0x58] sm:$0xff]
      %v2980 = vld [vmem:[%s2967 + $0x60] sm:$0xff]
      %v2981 = vld [vmem:[%s2967 + $0x68] sm:$0xff]
      %v2982 = vld [vmem:[%s2967 + $0x70] sm:$0xff]
      %v2983 = vld [vmem:[%s2967 + $0x78] sm:$0xff]
      %v2986 = vcombine.high %v2965, %v2965
      %2987 = vrot.lane.b32.xlu0 %v2965, 96
      %v2988 = vpop.permute.xlu0 %2987
      %2989 = vrot.lane.b32.xlu0 %v2986, 96
      %v2990 = vpop.permute.xlu0 %2989
      %2991 = vrot.lane.b32.xlu0 %v2966, 96
      %v2992 = vpop.permute.xlu0 %2991
      %vm2993 = vcmask 785408
      %v2994 = vsel %vm2993, %v2988, %v2990
      %v2995 = vsel %vm2993, %v2990, %v2992
      %v2997 = vsel %vm405, %v2968, 0
      %v3000 = vsel %vm405, %v2969, 0
      %v3003 = vsel %vm405, %v2970, 0
      %v3006 = vsel %vm405, %v2971, 0
      %v3009 = vsel %vm405, %v2972, 0
      %v3012 = vsel %vm405, %v2973, 0
      %v3015 = vsel %vm405, %v2974, 0
      %v3018 = vsel %vm405, %v2975, 0
      %v3021 = vsel %vm405, %v2976, 0
      %v3024 = vsel %vm405, %v2977, 0
      %v3027 = vsel %vm405, %v2978, 0
      %v3030 = vsel %vm405, %v2979, 0
      %v3033 = vsel %vm405, %v2980, 0
      %v3036 = vsel %vm405, %v2981, 0
      %v3039 = vsel %vm405, %v2982, 0
      %v3042 = vsel %vm405, %v2983, 0
      %v3044 = vsel %vm454, %v2994, 0
      %v3046 = vsel %vm454, %v2995, 0
      %v3048 = vsel %vm454, %v2992, 0
      %3050 = vmatprep.subr.mxu0 %v3046
      %3051 = vmatpush1.msra.mxu0 %v3044
      %3052 = vmatprep.subr.mxu0 0.0
      %3053 = vmatpush1.msra.mxu0 0.0
      %3054 = vmatprep.subr.mxu0 0.0
      %3055 = vmatpush1.msra.mxu0 0.0
      %3056 = vmatprep.subr.mxu0 0.0
      %3057 = vmatpush1.msra.mxu0 0.0
      %3058 = vmatprep.subr.mxu0 0.0
      %3059 = vmatpush1.msra.mxu0 0.0
      %3060 = vmatprep.subr.mxu0 0.0
      %3061 = vmatpush1.msra.mxu0 0.0
      %3062 = vmatprep.subr.mxu0 0.0
      %3063 = vmatpush1.msra.mxu0 0.0
      %3064 = vmatprep.subr.mxu0 0.0
      %3065 = vmatpush1.msra.mxu0 0.0
      %3066 = vmatprep.subr.mxu0 0.0
      %3067 = vmatpush1.msra.mxu0 0.0
      %3068 = vmatprep.subr.mxu0 0.0
      %3069 = vmatpush1.msra.mxu0 0.0
      %3070 = vmatprep.subr.mxu0 0.0
      %3071 = vmatpush1.msra.mxu0 0.0
      %3072 = vmatprep.subr.mxu0 0.0
      %3073 = vmatpush1.msra.mxu0 0.0
      %3074 = vmatprep.subr.mxu0 0.0
      %3075 = vmatpush1.msra.mxu0 0.0
      %3076 = vmatprep.subr.mxu0 0.0
      %3077 = vmatpush1.msra.mxu0 0.0
      %3078 = vmatprep.subr.mxu0 0.0
      %3079 = vmatpush1.msra.mxu0 0.0
      %3080 = vmatprep.subr.mxu0 0.0
      %3081 = vmatpush1.msra.mxu0 0.0
      %3082 = vmatprep.subr.mxu0 0.0
      %3083 = vmatpush1.msra.mxu0 0.0
      %3084 = vmatprep.subr.mxu0 0.0
      %3085 = vmatpush1.msra.mxu0 0.0
      %3086 = vmatprep.subr.mxu0 0.0
      %3087 = vmatpush1.msra.mxu0 0.0
      %3088 = vmatprep.subr.mxu0 0.0
      %3089 = vmatpush1.msra.mxu0 0.0
      %3090 = vmatprep.subr.mxu0 0.0
      %3091 = vmatpush1.msra.mxu0 0.0
      %3092 = vmatprep.subr.mxu0 0.0
      %3093 = vmatpush1.msra.mxu0 0.0
      %3094 = vmatprep.subr.mxu0 0.0
      %3095 = vmatpush1.msra.mxu0 0.0
      %3096 = vmatprep.subr.mxu0 0.0
      %3097 = vmatpush1.msra.mxu0 0.0
      %3098 = vmatprep.subr.mxu0 0.0
      %3099 = vmatpush1.msra.mxu0 0.0
      %3100 = vmatprep.subr.mxu0 0.0
      %3101 = vmatpush1.msra.mxu0 0.0
      %3102 = vmatprep.subr.mxu0 0.0
      %3103 = vmatpush1.msra.mxu0 0.0
      %3104 = vmatprep.subr.mxu0 0.0
      %3105 = vmatpush1.msra.mxu0 0.0
      %3106 = vmatprep.subr.mxu0 0.0
      %3107 = vmatpush1.msra.mxu0 0.0
      %3108 = vmatprep.subr.mxu0 0.0
      %3109 = vmatpush1.msra.mxu0 0.0
      %3110 = vmatprep.subr.mxu0 0.0
      %3111 = vmatpush1.msra.mxu0 0.0
      %3112 = vmatprep.subr.mxu0 0.0
      %3113 = vmatpush1.msra.mxu0 0.0
      %3114 = vmatprep.mubr.f32.mxu0 0.0
      %3115 = vmatmul.mubr.f32.gmra.mrb[0].mxu0 %v2997
      %v3116 = vpop.f32.mrb[0].mxu0
      %v3117 = vadd.f32 0.0, %v3116
      %v3118 = vpop.f32.mrb[0].mxu0
      %v3119 = vadd.f32 0.0, %v3118
      %3120 = vmatprep.mubr.f32.mxu0 0.0
      %3121 = vmatmul.mubr.f32.gmra.mrb[0].mxu0 %v3000
      %v3122 = vpop.f32.mrb[0].mxu0
      %v3123 = vadd.f32 0.0, %v3122
      %v3124 = vpop.f32.mrb[0].mxu0
      %v3125 = vadd.f32 0.0, %v3124
      %3126 = vmatprep.mubr.f32.mxu0 0.0
      %3127 = vmatmul.mubr.f32.gmra.mrb[0].mxu0 %v3003
      %v3128 = vpop.f32.mrb[0].mxu0
      %v3129 = vadd.f32 0.0, %v3128
      %v3130 = vpop.f32.mrb[0].mxu0
      %v3131 = vadd.f32 0.0, %v3130
      %3132 = vmatprep.mubr.f32.mxu0 0.0
      %3133 = vmatmul.mubr.f32.gmra.mrb[0].mxu0 %v3006
      %v3134 = vpop.f32.mrb[0].mxu0
      %v3135 = vadd.f32 0.0, %v3134
      %v3136 = vpop.f32.mrb[0].mxu0
      %v3137 = vadd.f32 0.0, %v3136
      %3138 = vmatprep.mubr.f32.mxu0 0.0
      %3139 = vmatmul.mubr.f32.gmra.mrb[0].mxu0 %v3009
      %v3140 = vpop.f32.mrb[0].mxu0
      %v3141 = vadd.f32 0.0, %v3140
      %v3142 = vpop.f32.mrb[0].mxu0
      %v3143 = vadd.f32 0.0, %v3142
      %3144 = vmatprep.mubr.f32.mxu0 0.0
      %3145 = vmatmul.mubr.f32.gmra.mrb[0].mxu0 %v3012
      %v3146 = vpop.f32.mrb[0].mxu0
      %v3147 = vadd.f32 0.0, %v3146
      %v3148 = vpop.f32.mrb[0].mxu0
      %v3149 = vadd.f32 0.0, %v3148
      %3150 = vmatprep.mubr.f32.mxu0 0.0
      %3151 = vmatmul.mubr.f32.gmra.mrb[0].mxu0 %v3015
      %v3152 = vpop.f32.mrb[0].mxu0
      %v3153 = vadd.f32 0.0, %v3152
      %v3154 = vpop.f32.mrb[0].mxu0
      %v3155 = vadd.f32 0.0, %v3154
      %3156 = vmatprep.mubr.f32.mxu0 0.0
      %3157 = vmatmul.mubr.f32.gmra.mrb[0].mxu0 %v3018
      %v3158 = vpop.f32.mrb[0].mxu0
      %v3159 = vadd.f32 0.0, %v3158
      %v3160 = vpop.f32.mrb[0].mxu0
      %v3161 = vadd.f32 0.0, %v3160
      %3162 = vmatprep.mubr.f32.mxu0 0.0
      %3163 = vmatmul.mubr.f32.gmra.mrb[0].mxu0 %v3021
      %v3164 = vpop.f32.mrb[0].mxu0
      %v3165 = vadd.f32 0.0, %v3164
      %v3166 = vpop.f32.mrb[0].mxu0
      %v3167 = vadd.f32 0.0, %v3166
      %3168 = vmatprep.mubr.f32.mxu0 0.0
      %3169 = vmatmul.mubr.f32.gmra.mrb[0].mxu0 %v3024
      %v3170 = vpop.f32.mrb[0].mxu0
      %v3171 = vadd.f32 0.0, %v3170
      %v3172 = vpop.f32.mrb[0].mxu0
      %v3173 = vadd.f32 0.0, %v3172
      %3174 = vmatprep.mubr.f32.mxu0 0.0
      %3175 = vmatmul.mubr.f32.gmra.mrb[0].mxu0 %v3027
      %v3176 = vpop.f32.mrb[0].mxu0
      %v3177 = vadd.f32 0.0, %v3176
      %v3178 = vpop.f32.mrb[0].mxu0
      %v3179 = vadd.f32 0.0, %v3178
      %3180 = vmatprep.mubr.f32.mxu0 0.0
      %3181 = vmatmul.mubr.f32.gmra.mrb[0].mxu0 %v3030
      %v3182 = vpop.f32.mrb[0].mxu0
      %v3183 = vadd.f32 0.0, %v3182
      %v3184 = vpop.f32.mrb[0].mxu0
      %v3185 = vadd.f32 0.0, %v3184
      %3186 = vmatprep.mubr.f32.mxu0 0.0
      %3187 = vmatmul.mubr.f32.gmra.mrb[0].mxu0 %v3033
      %v3188 = vpop.f32.mrb[0].mxu0
      %v3189 = vadd.f32 0.0, %v3188
      %v3190 = vpop.f32.mrb[0].mxu0
      %v3191 = vadd.f32 0.0, %v3190
      %3192 = vmatprep.mubr.f32.mxu0 0.0
      %3193 = vmatmul.mubr.f32.gmra.mrb[0].mxu0 %v3036
      %v3194 = vpop.f32.mrb[0].mxu0
      %v3195 = vadd.f32 0.0, %v3194
      %v3196 = vpop.f32.mrb[0].mxu0
      %v3197 = vadd.f32 0.0, %v3196
      %3198 = vmatprep.mubr.f32.mxu0 0.0
      %3199 = vmatmul.mubr.f32.gmra.mrb[0].mxu0 %v3039
      %v3200 = vpop.f32.mrb[0].mxu0
      %v3201 = vadd.f32 0.0, %v3200
      %v3202 = vpop.f32.mrb[0].mxu0
      %v3203 = vadd.f32 0.0, %v3202
      %3204 = vmatprep.mubr.f32.mxu0 0.0
      %3205 = vmatmul.mubr.f32.gmra.mrb[0].mxu0 %v3042
      %v3206 = vpop.f32.mrb[0].mxu0
      %v3207 = vadd.f32 0.0, %v3206
      %v3208 = vpop.f32.mrb[0].mxu0
      %v3209 = vadd.f32 0.0, %v3208
      %3210 = vdwg.mxu0
      %3211 = vmatprep.subr.mxu0 0.0
      %3212 = vmatpush1.msra.mxu0 %v3048
      %3213 = vmatprep.subr.mxu0 0.0
      %3214 = vmatpush1.msra.mxu0 0.0
      %3215 = vmatprep.subr.mxu0 0.0
      %3216 = vmatpush1.msra.mxu0 0.0
      %3217 = vmatprep.subr.mxu0 0.0
      %3218 = vmatpush1.msra.mxu0 0.0
      %3219 = vmatprep.subr.mxu0 0.0
      %3220 = vmatpush1.msra.mxu0 0.0
      %3221 = vmatprep.subr.mxu0 0.0
      %3222 = vmatpush1.msra.mxu0 0.0
      %3223 = vmatprep.subr.mxu0 0.0
      %3224 = vmatpush1.msra.mxu0 0.0
      %3225 = vmatprep.subr.mxu0 0.0
      %3226 = vmatpush1.msra.mxu0 0.0
      %3227 = vmatprep.subr.mxu0 0.0
      %3228 = vmatpush1.msra.mxu0 0.0
      %3229 = vmatprep.subr.mxu0 0.0
      %3230 = vmatpush1.msra.mxu0 0.0
      %3231 = vmatprep.subr.mxu0 0.0
      %3232 = vmatpush1.msra.mxu0 0.0
      %3233 = vmatprep.subr.mxu0 0.0
      %3234 = vmatpush1.msra.mxu0 0.0
      %3235 = vmatprep.subr.mxu0 0.0
      %3236 = vmatpush1.msra.mxu0 0.0
      %3237 = vmatprep.subr.mxu0 0.0
      %3238 = vmatpush1.msra.mxu0 0.0
      %3239 = vmatprep.subr.mxu0 0.0
      %3240 = vmatpush1.msra.mxu0 0.0
      %3241 = vmatprep.subr.mxu0 0.0
      %3242 = vmatpush1.msra.mxu0 0.0
      %3243 = vmatprep.subr.mxu0 0.0
      %3244 = vmatpush1.msra.mxu0 0.0
      %3245 = vmatprep.subr.mxu0 0.0
      %3246 = vmatpush1.msra.mxu0 0.0
      %3247 = vmatprep.subr.mxu0 0.0
      %3248 = vmatpush1.msra.mxu0 0.0
      %3249 = vmatprep.subr.mxu0 0.0
      %3250 = vmatpush1.msra.mxu0 0.0
      %3251 = vmatprep.subr.mxu0 0.0
      %3252 = vmatpush1.msra.mxu0 0.0
      %3253 = vmatprep.subr.mxu0 0.0
      %3254 = vmatpush1.msra.mxu0 0.0
      %3255 = vmatprep.subr.mxu0 0.0
      %3256 = vmatpush1.msra.mxu0 0.0
      %3257 = vmatprep.subr.mxu0 0.0
      %3258 = vmatpush1.msra.mxu0 0.0
      %3259 = vmatprep.subr.mxu0 0.0
      %3260 = vmatpush1.msra.mxu0 0.0
      %3261 = vmatprep.subr.mxu0 0.0
      %3262 = vmatpush1.msra.mxu0 0.0
      %3263 = vmatprep.subr.mxu0 0.0
      %3264 = vmatpush1.msra.mxu0 0.0
      %3265 = vmatprep.subr.mxu0 0.0
      %3266 = vmatpush1.msra.mxu0 0.0
      %3267 = vmatprep.subr.mxu0 0.0
      %3268 = vmatpush1.msra.mxu0 0.0
      %3269 = vmatprep.subr.mxu0 0.0
      %3270 = vmatpush1.msra.mxu0 0.0
      %3271 = vmatprep.subr.mxu0 0.0
      %3272 = vmatpush1.msra.mxu0 0.0
      %3273 = vmatprep.subr.mxu0 0.0
      %3274 = vmatpush1.msra.mxu0 0.0
      %3275 = vmatprep.mubr.f32.mxu0 0.0
      %3276 = vmatmul.mubr.f32.gmra.mrb[0].mxu0 %v2997
      %v3277 = vpop.f32.mrb[0].mxu0
      %v3278 = vadd.f32 0.0, %v3277
      %v3279 = vpop.f32.mrb[0].mxu0
      %3280 = vmatprep.mubr.f32.mxu0 0.0
      %3281 = vmatmul.mubr.f32.gmra.mrb[0].mxu0 %v3000
      %v3282 = vpop.f32.mrb[0].mxu0
      %v3283 = vadd.f32 0.0, %v3282
      %v3284 = vpop.f32.mrb[0].mxu0
      %3285 = vmatprep.mubr.f32.mxu0 0.0
      %3286 = vmatmul.mubr.f32.gmra.mrb[0].mxu0 %v3003
      %v3287 = vpop.f32.mrb[0].mxu0
      %v3288 = vadd.f32 0.0, %v3287
      %v3289 = vpop.f32.mrb[0].mxu0
      %3290 = vmatprep.mubr.f32.mxu0 0.0
      %3291 = vmatmul.mubr.f32.gmra.mrb[0].mxu0 %v3006
      %v3292 = vpop.f32.mrb[0].mxu0
      %v3293 = vadd.f32 0.0, %v3292
      %v3294 = vpop.f32.mrb[0].mxu0
      %3295 = vmatprep.mubr.f32.mxu0 0.0
      %3296 = vmatmul.mubr.f32.gmra.mrb[0].mxu0 %v3009
      %v3297 = vpop.f32.mrb[0].mxu0
      %v3298 = vadd.f32 0.0, %v3297
      %v3299 = vpop.f32.mrb[0].mxu0
      %3300 = vmatprep.mubr.f32.mxu0 0.0
      %3301 = vmatmul.mubr.f32.gmra.mrb[0].mxu0 %v3012
      %v3302 = vpop.f32.mrb[0].mxu0
      %v3303 = vadd.f32 0.0, %v3302
      %v3304 = vpop.f32.mrb[0].mxu0
      %3305 = vmatprep.mubr.f32.mxu0 0.0
      %3306 = vmatmul.mubr.f32.gmra.mrb[0].mxu0 %v3015
      %v3307 = vpop.f32.mrb[0].mxu0
      %v3308 = vadd.f32 0.0, %v3307
      %v3309 = vpop.f32.mrb[0].mxu0
      %3310 = vmatprep.mubr.f32.mxu0 0.0
      %3311 = vmatmul.mubr.f32.gmra.mrb[0].mxu0 %v3018
      %v3312 = vpop.f32.mrb[0].mxu0
      %v3313 = vadd.f32 0.0, %v3312
      %v3314 = vpop.f32.mrb[0].mxu0
      %3315 = vmatprep.mubr.f32.mxu0 0.0
      %3316 = vmatmul.mubr.f32.gmra.mrb[0].mxu0 %v3021
      %v3317 = vpop.f32.mrb[0].mxu0
      %v3318 = vadd.f32 0.0, %v3317
      %v3319 = vpop.f32.mrb[0].mxu0
      %3320 = vmatprep.mubr.f32.mxu0 0.0
      %3321 = vmatmul.mubr.f32.gmra.mrb[0].mxu0 %v3024
      %v3322 = vpop.f32.mrb[0].mxu0
      %v3323 = vadd.f32 0.0, %v3322
      %v3324 = vpop.f32.mrb[0].mxu0
      %3325 = vmatprep.mubr.f32.mxu0 0.0
      %3326 = vmatmul.mubr.f32.gmra.mrb[0].mxu0 %v3027
      %v3327 = vpop.f32.mrb[0].mxu0
      %v3328 = vadd.f32 0.0, %v3327
      %v3329 = vpop.f32.mrb[0].mxu0
      %3330 = vmatprep.mubr.f32.mxu0 0.0
      %3331 = vmatmul.mubr.f32.gmra.mrb[0].mxu0 %v3030
      %v3332 = vpop.f32.mrb[0].mxu0
      %v3333 = vadd.f32 0.0, %v3332
      %v3334 = vpop.f32.mrb[0].mxu0
      %3335 = vmatprep.mubr.f32.mxu0 0.0
      %3336 = vmatmul.mubr.f32.gmra.mrb[0].mxu0 %v3033
      %v3337 = vpop.f32.mrb[0].mxu0
      %v3338 = vadd.f32 0.0, %v3337
      %v3339 = vpop.f32.mrb[0].mxu0
      %3340 = vmatprep.mubr.f32.mxu0 0.0
      %3341 = vmatmul.mubr.f32.gmra.mrb[0].mxu0 %v3036
      %v3342 = vpop.f32.mrb[0].mxu0
      %v3343 = vadd.f32 0.0, %v3342
      %v3344 = vpop.f32.mrb[0].mxu0
      %3345 = vmatprep.mubr.f32.mxu0 0.0
      %3346 = vmatmul.mubr.f32.gmra.mrb[0].mxu0 %v3039
      %v3347 = vpop.f32.mrb[0].mxu0
      %v3348 = vadd.f32 0.0, %v3347
      %v3349 = vpop.f32.mrb[0].mxu0
      %3350 = vmatprep.mubr.f32.mxu0 0.0
      %3351 = vmatmul.mubr.f32.gmra.mrb[0].mxu0 %v3042
      %v3352 = vpop.f32.mrb[0].mxu0
      %v3353 = vadd.f32 0.0, %v3352
      %v3354 = vpop.f32.mrb[0].mxu0
      %3355 = vdwg.mxu0
      %v3356 = vadd.f32 %v2905, %v3117
      %v3357 = vadd.f32 %v2906, %v3119
      %v3358 = vadd.f32 %v2907, %v3278
      %v3359 = vadd.f32 %v2908, %v3123
      %v3360 = vadd.f32 %v2909, %v3125
      %v3361 = vadd.f32 %v2910, %v3283
      %v3362 = vadd.f32 %v2911, %v3129
      %v3363 = vadd.f32 %v2912, %v3131
      %v3364 = vadd.f32 %v2913, %v3288
      %v3365 = vadd.f32 %v2914, %v3135
      %v3366 = vadd.f32 %v2915, %v3137
      %v3367 = vadd.f32 %v2916, %v3293
      %v3368 = vadd.f32 %v2917, %v3141
      %v3369 = vadd.f32 %v2918, %v3143
      %v3370 = vadd.f32 %v2919, %v3298
      %v3371 = vadd.f32 %v2920, %v3147
      %v3372 = vadd.f32 %v2921, %v3149
      %v3373 = vadd.f32 %v2922, %v3303
      %v3374 = vadd.f32 %v2923, %v3153
      %v3375 = vadd.f32 %v2924, %v3155
      %v3376 = vadd.f32 %v2925, %v3308
      %v3377 = vadd.f32 %v2926, %v3159
      %v3378 = vadd.f32 %v2927, %v3161
      %v3379 = vadd.f32 %v2928, %v3313
      %v3380 = vadd.f32 %v2929, %v3165
      %v3381 = vadd.f32 %v2930, %v3167
      %v3382 = vadd.f32 %v2931, %v3318
      %v3383 = vadd.f32 %v2932, %v3171
      %v3384 = vadd.f32 %v2933, %v3173
      %v3385 = vadd.f32 %v2934, %v3323
      %v3386 = vadd.f32 %v2935, %v3177
      %v3387 = vadd.f32 %v2936, %v3179
      %v3388 = vadd.f32 %v2937, %v3328
      %v3389 = vadd.f32 %v2938, %v3183
      %v3390 = vadd.f32 %v2939, %v3185
      %v3391 = vadd.f32 %v2940, %v3333
      %v3392 = vadd.f32 %v2941, %v3189
      %v3393 = vadd.f32 %v2942, %v3191
      %v3394 = vadd.f32 %v2943, %v3338
      %v3395 = vadd.f32 %v2944, %v3195
      %v3396 = vadd.f32 %v2945, %v3197
      %v3397 = vadd.f32 %v2946, %v3343
      %v3398 = vadd.f32 %v2947, %v3201
      %v3399 = vadd.f32 %v2948, %v3203
      %v3400 = vadd.f32 %v2949, %v3348
      %v3401 = vadd.f32 %v2950, %v3207
      %v3402 = vadd.f32 %v2951, %v3209
      %v3403 = vadd.f32 %v2952, %v3353
      %v3404 = vld [vmem:[%s301] sm:$0x77]
      %v3405 = vld [vmem:[%s301 + $0x8] sm:$0x7]
      %s3406 = scalar_lea.vmem %s2, 896
      %v3407 = vld [vmem:[%s3406] sm:$0xff]
      %v3408 = vld [vmem:[%s3406 + $0x8] sm:$0xff]
      %v3409 = vld [vmem:[%s3406 + $0x10] sm:$0xff]
      %v3410 = vld [vmem:[%s3406 + $0x18] sm:$0xff]
      %v3411 = vld [vmem:[%s3406 + $0x20] sm:$0xff]
      %v3412 = vld [vmem:[%s3406 + $0x28] sm:$0xff]
      %v3413 = vld [vmem:[%s3406 + $0x30] sm:$0xff]
      %v3414 = vld [vmem:[%s3406 + $0x38] sm:$0xff]
      %v3415 = vld [vmem:[%s3406 + $0x40] sm:$0xff]
      %v3416 = vld [vmem:[%s3406 + $0x48] sm:$0xff]
      %v3417 = vld [vmem:[%s3406 + $0x50] sm:$0xff]
      %v3418 = vld [vmem:[%s3406 + $0x58] sm:$0xff]
      %v3419 = vld [vmem:[%s3406 + $0x60] sm:$0xff]
      %v3420 = vld [vmem:[%s3406 + $0x68] sm:$0xff]
      %v3421 = vld [vmem:[%s3406 + $0x70] sm:$0xff]
      %v3422 = vld [vmem:[%s3406 + $0x78] sm:$0xff]
      %v3425 = vcombine.high %v3404, %v3404
      %3426 = vrot.lane.b32.xlu0 %v3404, 95
      %v3427 = vpop.permute.xlu0 %3426
      %3428 = vrot.lane.b32.xlu0 %v3425, 95
      %v3429 = vpop.permute.xlu0 %3428
      %3430 = vrot.lane.b32.xlu0 %v3405, 95
      %v3431 = vpop.permute.xlu0 %3430
      %vm3432 = vcmask 777216
      %v3433 = vsel %vm3432, %v3427, %v3429
      %v3434 = vsel %vm3432, %v3429, %v3431
      %v3436 = vsel %vm405, %v3407, 0
      %v3439 = vsel %vm405, %v3408, 0
      %v3442 = vsel %vm405, %v3409, 0
      %v3445 = vsel %vm405, %v3410, 0
      %v3448 = vsel %vm405, %v3411, 0
      %v3451 = vsel %vm405, %v3412, 0
      %v3454 = vsel %vm405, %v3413, 0
      %v3457 = vsel %vm405, %v3414, 0
      %v3460 = vsel %vm405, %v3415, 0
      %v3463 = vsel %vm405, %v3416, 0
      %v3466 = vsel %vm405, %v3417, 0
      %v3469 = vsel %vm405, %v3418, 0
      %v3472 = vsel %vm405, %v3419, 0
      %v3475 = vsel %vm405, %v3420, 0
      %v3478 = vsel %vm405, %v3421, 0
      %v3481 = vsel %vm405, %v3422, 0
      %v3483 = vsel %vm454, %v3433, 0
      %v3485 = vsel %vm454, %v3434, 0
      %v3487 = vsel %vm454, %v3431, 0
      %3489 = vmatprep.subr.mxu0 %v3485
      %3490 = vmatpush1.msra.mxu0 %v3483
      %3491 = vmatprep.subr.mxu0 0.0
      %3492 = vmatpush1.msra.mxu0 0.0
      %3493 = vmatprep.subr.mxu0 0.0
      %3494 = vmatpush1.msra.mxu0 0.0
      %3495 = vmatprep.subr.mxu0 0.0
      %3496 = vmatpush1.msra.mxu0 0.0
      %3497 = vmatprep.subr.mxu0 0.0
      %3498 = vmatpush1.msra.mxu0 0.0
      %3499 = vmatprep.subr.mxu0 0.0
      %3500 = vmatpush1.msra.mxu0 0.0
      %3501 = vmatprep.subr.mxu0 0.0
      %3502 = vmatpush1.msra.mxu0 0.0
      %3503 = vmatprep.subr.mxu0 0.0
      %3504 = vmatpush1.msra.mxu0 0.0
      %3505 = vmatprep.subr.mxu0 0.0
      %3506 = vmatpush1.msra.mxu0 0.0
      %3507 = vmatprep.subr.mxu0 0.0
      %3508 = vmatpush1.msra.mxu0 0.0
      %3509 = vmatprep.subr.mxu0 0.0
      %3510 = vmatpush1.msra.mxu0 0.0
      %3511 = vmatprep.subr.mxu0 0.0
      %3512 = vmatpush1.msra.mxu0 0.0
      %3513 = vmatprep.subr.mxu0 0.0
      %3514 = vmatpush1.msra.mxu0 0.0
      %3515 = vmatprep.subr.mxu0 0.0
      %3516 = vmatpush1.msra.mxu0 0.0
      %3517 = vmatprep.subr.mxu0 0.0
      %3518 = vmatpush1.msra.mxu0 0.0
      %3519 = vmatprep.subr.mxu0 0.0
      %3520 = vmatpush1.msra.mxu0 0.0
      %3521 = vmatprep.subr.mxu0 0.0
      %3522 = vmatpush1.msra.mxu0 0.0
      %3523 = vmatprep.subr.mxu0 0.0
      %3524 = vmatpush1.msra.mxu0 0.0
      %3525 = vmatprep.subr.mxu0 0.0
      %3526 = vmatpush1.msra.mxu0 0.0
      %3527 = vmatprep.subr.mxu0 0.0
      %3528 = vmatpush1.msra.mxu0 0.0
      %3529 = vmatprep.subr.mxu0 0.0
      %3530 = vmatpush1.msra.mxu0 0.0
      %3531 = vmatprep.subr.mxu0 0.0
      %3532 = vmatpush1.msra.mxu0 0.0
      %3533 = vmatprep.subr.mxu0 0.0
      %3534 = vmatpush1.msra.mxu0 0.0
      %3535 = vmatprep.subr.mxu0 0.0
      %3536 = vmatpush1.msra.mxu0 0.0
      %3537 = vmatprep.subr.mxu0 0.0
      %3538 = vmatpush1.msra.mxu0 0.0
      %3539 = vmatprep.subr.mxu0 0.0
      %3540 = vmatpush1.msra.mxu0 0.0
      %3541 = vmatprep.subr.mxu0 0.0
      %3542 = vmatpush1.msra.mxu0 0.0
      %3543 = vmatprep.subr.mxu0 0.0
      %3544 = vmatpush1.msra.mxu0 0.0
      %3545 = vmatprep.subr.mxu0 0.0
      %3546 = vmatpush1.msra.mxu0 0.0
      %3547 = vmatprep.subr.mxu0 0.0
      %3548 = vmatpush1.msra.mxu0 0.0
      %3549 = vmatprep.subr.mxu0 0.0
      %3550 = vmatpush1.msra.mxu0 0.0
      %3551 = vmatprep.subr.mxu0 0.0
      %3552 = vmatpush1.msra.mxu0 0.0
      %3553 = vmatprep.mubr.f32.mxu0 0.0
      %3554 = vmatmul.mubr.f32.gmra.mrb[0].mxu0 %v3436
      %v3555 = vpop.f32.mrb[0].mxu0
      %v3556 = vadd.f32 0.0, %v3555
      %v3557 = vpop.f32.mrb[0].mxu0
      %v3558 = vadd.f32 0.0, %v3557
      %3559 = vmatprep.mubr.f32.mxu0 0.0
      %3560 = vmatmul.mubr.f32.gmra.mrb[0].mxu0 %v3439
      %v3561 = vpop.f32.mrb[0].mxu0
      %v3562 = vadd.f32 0.0, %v3561
      %v3563 = vpop.f32.mrb[0].mxu0
      %v3564 = vadd.f32 0.0, %v3563
      %3565 = vmatprep.mubr.f32.mxu0 0.0
      %3566 = vmatmul.mubr.f32.gmra.mrb[0].mxu0 %v3442
      %v3567 = vpop.f32.mrb[0].mxu0
      %v3568 = vadd.f32 0.0, %v3567
      %v3569 = vpop.f32.mrb[0].mxu0
      %v3570 = vadd.f32 0.0, %v3569
      %3571 = vmatprep.mubr.f32.mxu0 0.0
      %3572 = vmatmul.mubr.f32.gmra.mrb[0].mxu0 %v3445
      %v3573 = vpop.f32.mrb[0].mxu0
      %v3574 = vadd.f32 0.0, %v3573
      %v3575 = vpop.f32.mrb[0].mxu0
      %v3576 = vadd.f32 0.0, %v3575
      %3577 = vmatprep.mubr.f32.mxu0 0.0
      %3578 = vmatmul.mubr.f32.gmra.mrb[0].mxu0 %v3448
      %v3579 = vpop.f32.mrb[0].mxu0
      %v3580 = vadd.f32 0.0, %v3579
      %v3581 = vpop.f32.mrb[0].mxu0
      %v3582 = vadd.f32 0.0, %v3581
      %3583 = vmatprep.mubr.f32.mxu0 0.0
      %3584 = vmatmul.mubr.f32.gmra.mrb[0].mxu0 %v3451
      %v3585 = vpop.f32.mrb[0].mxu0
      %v3586 = vadd.f32 0.0, %v3585
      %v3587 = vpop.f32.mrb[0].mxu0
      %v3588 = vadd.f32 0.0, %v3587
      %3589 = vmatprep.mubr.f32.mxu0 0.0
      %3590 = vmatmul.mubr.f32.gmra.mrb[0].mxu0 %v3454
      %v3591 = vpop.f32.mrb[0].mxu0
      %v3592 = vadd.f32 0.0, %v3591
      %v3593 = vpop.f32.mrb[0].mxu0
      %v3594 = vadd.f32 0.0, %v3593
      %3595 = vmatprep.mubr.f32.mxu0 0.0
      %3596 = vmatmul.mubr.f32.gmra.mrb[0].mxu0 %v3457
      %v3597 = vpop.f32.mrb[0].mxu0
      %v3598 = vadd.f32 0.0, %v3597
      %v3599 = vpop.f32.mrb[0].mxu0
      %v3600 = vadd.f32 0.0, %v3599
      %3601 = vmatprep.mubr.f32.mxu0 0.0
      %3602 = vmatmul.mubr.f32.gmra.mrb[0].mxu0 %v3460
      %v3603 = vpop.f32.mrb[0].mxu0
      %v3604 = vadd.f32 0.0, %v3603
      %v3605 = vpop.f32.mrb[0].mxu0
      %v3606 = vadd.f32 0.0, %v3605
      %3607 = vmatprep.mubr.f32.mxu0 0.0
      %3608 = vmatmul.mubr.f32.gmra.mrb[0].mxu0 %v3463
      %v3609 = vpop.f32.mrb[0].mxu0
      %v3610 = vadd.f32 0.0, %v3609
      %v3611 = vpop.f32.mrb[0].mxu0
      %v3612 = vadd.f32 0.0, %v3611
      %3613 = vmatprep.mubr.f32.mxu0 0.0
      %3614 = vmatmul.mubr.f32.gmra.mrb[0].mxu0 %v3466
      %v3615 = vpop.f32.mrb[0].mxu0
      %v3616 = vadd.f32 0.0, %v3615
      %v3617 = vpop.f32.mrb[0].mxu0
      %v3618 = vadd.f32 0.0, %v3617
      %3619 = vmatprep.mubr.f32.mxu0 0.0
      %3620 = vmatmul.mubr.f32.gmra.mrb[0].mxu0 %v3469
      %v3621 = vpop.f32.mrb[0].mxu0
      %v3622 = vadd.f32 0.0, %v3621
      %v3623 = vpop.f32.mrb[0].mxu0
      %v3624 = vadd.f32 0.0, %v3623
      %3625 = vmatprep.mubr.f32.mxu0 0.0
      %3626 = vmatmul.mubr.f32.gmra.mrb[0].mxu0 %v3472
      %v3627 = vpop.f32.mrb[0].mxu0
      %v3628 = vadd.f32 0.0, %v3627
      %v3629 = vpop.f32.mrb[0].mxu0
      %v3630 = vadd.f32 0.0, %v3629
      %3631 = vmatprep.mubr.f32.mxu0 0.0
      %3632 = vmatmul.mubr.f32.gmra.mrb[0].mxu0 %v3475
      %v3633 = vpop.f32.mrb[0].mxu0
      %v3634 = vadd.f32 0.0, %v3633
      %v3635 = vpop.f32.mrb[0].mxu0
      %v3636 = vadd.f32 0.0, %v3635
      %3637 = vmatprep.mubr.f32.mxu0 0.0
      %3638 = vmatmul.mubr.f32.gmra.mrb[0].mxu0 %v3478
      %v3639 = vpop.f32.mrb[0].mxu0
      %v3640 = vadd.f32 0.0, %v3639
      %v3641 = vpop.f32.mrb[0].mxu0
      %v3642 = vadd.f32 0.0, %v3641
      %3643 = vmatprep.mubr.f32.mxu0 0.0
      %3644 = vmatmul.mubr.f32.gmra.mrb[0].mxu0 %v3481
      %v3645 = vpop.f32.mrb[0].mxu0
      %v3646 = vadd.f32 0.0, %v3645
      %v3647 = vpop.f32.mrb[0].mxu0
      %v3648 = vadd.f32 0.0, %v3647
      %3649 = vdwg.mxu0
      %3650 = vmatprep.subr.mxu0 0.0
      %3651 = vmatpush1.msra.mxu0 %v3487
      %3652 = vmatprep.subr.mxu0 0.0
      %3653 = vmatpush1.msra.mxu0 0.0
      %3654 = vmatprep.subr.mxu0 0.0
      %3655 = vmatpush1.msra.mxu0 0.0
      %3656 = vmatprep.subr.mxu0 0.0
      %3657 = vmatpush1.msra.mxu0 0.0
      %3658 = vmatprep.subr.mxu0 0.0
      %3659 = vmatpush1.msra.mxu0 0.0
      %3660 = vmatprep.subr.mxu0 0.0
      %3661 = vmatpush1.msra.mxu0 0.0
      %3662 = vmatprep.subr.mxu0 0.0
      %3663 = vmatpush1.msra.mxu0 0.0
      %3664 = vmatprep.subr.mxu0 0.0
      %3665 = vmatpush1.msra.mxu0 0.0
      %3666 = vmatprep.subr.mxu0 0.0
      %3667 = vmatpush1.msra.mxu0 0.0
      %3668 = vmatprep.subr.mxu0 0.0
      %3669 = vmatpush1.msra.mxu0 0.0
      %3670 = vmatprep.subr.mxu0 0.0
      %3671 = vmatpush1.msra.mxu0 0.0
      %3672 = vmatprep.subr.mxu0 0.0
      %3673 = vmatpush1.msra.mxu0 0.0
      %3674 = vmatprep.subr.mxu0 0.0
      %3675 = vmatpush1.msra.mxu0 0.0
      %3676 = vmatprep.subr.mxu0 0.0
      %3677 = vmatpush1.msra.mxu0 0.0
      %3678 = vmatprep.subr.mxu0 0.0
      %3679 = vmatpush1.msra.mxu0 0.0
      %3680 = vmatprep.subr.mxu0 0.0
      %3681 = vmatpush1.msra.mxu0 0.0
      %3682 = vmatprep.subr.mxu0 0.0
      %3683 = vmatpush1.msra.mxu0 0.0
      %3684 = vmatprep.subr.mxu0 0.0
      %3685 = vmatpush1.msra.mxu0 0.0
      %3686 = vmatprep.subr.mxu0 0.0
      %3687 = vmatpush1.msra.mxu0 0.0
      %3688 = vmatprep.subr.mxu0 0.0
      %3689 = vmatpush1.msra.mxu0 0.0
      %3690 = vmatprep.subr.mxu0 0.0
      %3691 = vmatpush1.msra.mxu0 0.0
      %3692 = vmatprep.subr.mxu0 0.0
      %3693 = vmatpush1.msra.mxu0 0.0
      %3694 = vmatprep.subr.mxu0 0.0
      %3695 = vmatpush1.msra.mxu0 0.0
      %3696 = vmatprep.subr.mxu0 0.0
      %3697 = vmatpush1.msra.mxu0 0.0
      %3698 = vmatprep.subr.mxu0 0.0
      %3699 = vmatpush1.msra.mxu0 0.0
      %3700 = vmatprep.subr.mxu0 0.0
      %3701 = vmatpush1.msra.mxu0 0.0
      %3702 = vmatprep.subr.mxu0 0.0
      %3703 = vmatpush1.msra.mxu0 0.0
      %3704 = vmatprep.subr.mxu0 0.0
      %3705 = vmatpush1.msra.mxu0 0.0
      %3706 = vmatprep.subr.mxu0 0.0
      %3707 = vmatpush1.msra.mxu0 0.0
      %3708 = vmatprep.subr.mxu0 0.0
      %3709 = vmatpush1.msra.mxu0 0.0
      %3710 = vmatprep.subr.mxu0 0.0
      %3711 = vmatpush1.msra.mxu0 0.0
      %3712 = vmatprep.subr.mxu0 0.0
      %3713 = vmatpush1.msra.mxu0 0.0
      %3714 = vmatprep.mubr.f32.mxu0 0.0
      %3715 = vmatmul.mubr.f32.gmra.mrb[0].mxu0 %v3436
      %v3716 = vpop.f32.mrb[0].mxu0
      %v3717 = vadd.f32 0.0, %v3716
      %v3718 = vpop.f32.mrb[0].mxu0
      %3719 = vmatprep.mubr.f32.mxu0 0.0
      %3720 = vmatmul.mubr.f32.gmra.mrb[0].mxu0 %v3439
      %v3721 = vpop.f32.mrb[0].mxu0
      %v3722 = vadd.f32 0.0, %v3721
      %v3723 = vpop.f32.mrb[0].mxu0
      %3724 = vmatprep.mubr.f32.mxu0 0.0
      %3725 = vmatmul.mubr.f32.gmra.mrb[0].mxu0 %v3442
      %v3726 = vpop.f32.mrb[0].mxu0
      %v3727 = vadd.f32 0.0, %v3726
      %v3728 = vpop.f32.mrb[0].mxu0
      %3729 = vmatprep.mubr.f32.mxu0 0.0
      %3730 = vmatmul.mubr.f32.gmra.mrb[0].mxu0 %v3445
      %v3731 = vpop.f32.mrb[0].mxu0
      %v3732 = vadd.f32 0.0, %v3731
      %v3733 = vpop.f32.mrb[0].mxu0
      %3734 = vmatprep.mubr.f32.mxu0 0.0
      %3735 = vmatmul.mubr.f32.gmra.mrb[0].mxu0 %v3448
      %v3736 = vpop.f32.mrb[0].mxu0
      %v3737 = vadd.f32 0.0, %v3736
      %v3738 = vpop.f32.mrb[0].mxu0
      %3739 = vmatprep.mubr.f32.mxu0 0.0
      %3740 = vmatmul.mubr.f32.gmra.mrb[0].mxu0 %v3451
      %v3741 = vpop.f32.mrb[0].mxu0
      %v3742 = vadd.f32 0.0, %v3741
      %v3743 = vpop.f32.mrb[0].mxu0
      %3744 = vmatprep.mubr.f32.mxu0 0.0
      %3745 = vmatmul.mubr.f32.gmra.mrb[0].mxu0 %v3454
      %v3746 = vpop.f32.mrb[0].mxu0
      %v3747 = vadd.f32 0.0, %v3746
      %v3748 = vpop.f32.mrb[0].mxu0
      %3749 = vmatprep.mubr.f32.mxu0 0.0
      %3750 = vmatmul.mubr.f32.gmra.mrb[0].mxu0 %v3457
      %v3751 = vpop.f32.mrb[0].mxu0
      %v3752 = vadd.f32 0.0, %v3751
      %v3753 = vpop.f32.mrb[0].mxu0
      %3754 = vmatprep.mubr.f32.mxu0 0.0
      %3755 = vmatmul.mubr.f32.gmra.mrb[0].mxu0 %v3460
      %v3756 = vpop.f32.mrb[0].mxu0
      %v3757 = vadd.f32 0.0, %v3756
      %v3758 = vpop.f32.mrb[0].mxu0
      %3759 = vmatprep.mubr.f32.mxu0 0.0
      %3760 = vmatmul.mubr.f32.gmra.mrb[0].mxu0 %v3463
      %v3761 = vpop.f32.mrb[0].mxu0
      %v3762 = vadd.f32 0.0, %v3761
      %v3763 = vpop.f32.mrb[0].mxu0
      %3764 = vmatprep.mubr.f32.mxu0 0.0
      %3765 = vmatmul.mubr.f32.gmra.mrb[0].mxu0 %v3466
      %v3766 = vpop.f32.mrb[0].mxu0
      %v3767 = vadd.f32 0.0, %v3766
      %v3768 = vpop.f32.mrb[0].mxu0
      %3769 = vmatprep.mubr.f32.mxu0 0.0
      %3770 = vmatmul.mubr.f32.gmra.mrb[0].mxu0 %v3469
      %v3771 = vpop.f32.mrb[0].mxu0
      %v3772 = vadd.f32 0.0, %v3771
      %v3773 = vpop.f32.mrb[0].mxu0
      %3774 = vmatprep.mubr.f32.mxu0 0.0
      %3775 = vmatmul.mubr.f32.gmra.mrb[0].mxu0 %v3472
      %v3776 = vpop.f32.mrb[0].mxu0
      %v3777 = vadd.f32 0.0, %v3776
      %v3778 = vpop.f32.mrb[0].mxu0
      %3779 = vmatprep.mubr.f32.mxu0 0.0
      %3780 = vmatmul.mubr.f32.gmra.mrb[0].mxu0 %v3475
      %v3781 = vpop.f32.mrb[0].mxu0
      %v3782 = vadd.f32 0.0, %v3781
      %v3783 = vpop.f32.mrb[0].mxu0
      %3784 = vmatprep.mubr.f32.mxu0 0.0
      %3785 = vmatmul.mubr.f32.gmra.mrb[0].mxu0 %v3478
      %v3786 = vpop.f32.mrb[0].mxu0
      %v3787 = vadd.f32 0.0, %v3786
      %v3788 = vpop.f32.mrb[0].mxu0
      %3789 = vmatprep.mubr.f32.mxu0 0.0
      %3790 = vmatmul.mubr.f32.gmra.mrb[0].mxu0 %v3481
      %v3791 = vpop.f32.mrb[0].mxu0
      %v3792 = vadd.f32 0.0, %v3791
      %v3793 = vpop.f32.mrb[0].mxu0
      %3794 = vdwg.mxu0
      %v3795 = vadd.f32 %v3356, %v3556
      %v3796 = vadd.f32 %v3357, %v3558
      %v3797 = vadd.f32 %v3358, %v3717
      %v3798 = vadd.f32 %v3359, %v3562
      %v3799 = vadd.f32 %v3360, %v3564
      %v3800 = vadd.f32 %v3361, %v3722
      %v3801 = vadd.f32 %v3362, %v3568
      %v3802 = vadd.f32 %v3363, %v3570
      %v3803 = vadd.f32 %v3364, %v3727
      %v3804 = vadd.f32 %v3365, %v3574
      %v3805 = vadd.f32 %v3366, %v3576
      %v3806 = vadd.f32 %v3367, %v3732
      %v3807 = vadd.f32 %v3368, %v3580
      %v3808 = vadd.f32 %v3369, %v3582
      %v3809 = vadd.f32 %v3370, %v3737
      %v3810 = vadd.f32 %v3371, %v3586
      %v3811 = vadd.f32 %v3372, %v3588
      %v3812 = vadd.f32 %v3373, %v3742
      %v3813 = vadd.f32 %v3374, %v3592
      %v3814 = vadd.f32 %v3375, %v3594
      %v3815 = vadd.f32 %v3376, %v3747
      %v3816 = vadd.f32 %v3377, %v3598
      %v3817 = vadd.f32 %v3378, %v3600
      %v3818 = vadd.f32 %v3379, %v3752
      %v3819 = vadd.f32 %v3380, %v3604
      %v3820 = vadd.f32 %v3381, %v3606
      %v3821 = vadd.f32 %v3382, %v3757
      %v3822 = vadd.f32 %v3383, %v3610
      %v3823 = vadd.f32 %v3384, %v3612
      %v3824 = vadd.f32 %v3385, %v3762
      %v3825 = vadd.f32 %v3386, %v3616
      %v3826 = vadd.f32 %v3387, %v3618
      %v3827 = vadd.f32 %v3388, %v3767
      %v3828 = vadd.f32 %v3389, %v3622
      %v3829 = vadd.f32 %v3390, %v3624
      %v3830 = vadd.f32 %v3391, %v3772
      %v3831 = vadd.f32 %v3392, %v3628
      %v3832 = vadd.f32 %v3393, %v3630
      %v3833 = vadd.f32 %v3394, %v3777
      %v3834 = vadd.f32 %v3395, %v3634
      %v3835 = vadd.f32 %v3396, %v3636
      %v3836 = vadd.f32 %v3397, %v3782
      %v3837 = vadd.f32 %v3398, %v3640
      %v3838 = vadd.f32 %v3399, %v3642
      %v3839 = vadd.f32 %v3400, %v3787
      %v3840 = vadd.f32 %v3401, %v3646
      %v3841 = vadd.f32 %v3402, %v3648
      %v3842 = vadd.f32 %v3403, %v3792
      %v3843 = vld [vmem:[%s301] sm:$0x77]
      %v3844 = vld [vmem:[%s301 + $0x8] sm:$0x7]
      %3845 = vrot.lane.b32.xlu0 %v1162, 34
      %v3846 = vpop.permute.xlu0 %3845
      %3847 = vrot.lane.b32.xlu0 %v1158, 34
      %v3848 = vpop.permute.xlu0 %3847
      %v3849 = vrot.slane %v3846, 4
      %vm3850 = vcmask 277504
      %v3851 = vsel %vm3850, %v3849, %v3846
      %v3852 = vsel %vm3850, %v3849, %v3848
      %v3855 = vmul.f32 %v3843, %v3851
      %v3856 = vmul.f32 %v3844, %v3852
      %s3857 = scalar_lea.vmem %s2, 1024
      %v3858 = vld [vmem:[%s3857] sm:$0xff]
      %v3859 = vld [vmem:[%s3857 + $0x8] sm:$0xff]
      %v3860 = vld [vmem:[%s3857 + $0x10] sm:$0xff]
      %v3861 = vld [vmem:[%s3857 + $0x18] sm:$0xff]
      %v3862 = vld [vmem:[%s3857 + $0x20] sm:$0xff]
      %v3863 = vld [vmem:[%s3857 + $0x28] sm:$0xff]
      %v3864 = vld [vmem:[%s3857 + $0x30] sm:$0xff]
      %v3865 = vld [vmem:[%s3857 + $0x38] sm:$0xff]
      %v3866 = vld [vmem:[%s3857 + $0x40] sm:$0xff]
      %v3867 = vld [vmem:[%s3857 + $0x48] sm:$0xff]
      %v3868 = vld [vmem:[%s3857 + $0x50] sm:$0xff]
      %v3869 = vld [vmem:[%s3857 + $0x58] sm:$0xff]
      %v3870 = vld [vmem:[%s3857 + $0x60] sm:$0xff]
      %v3871 = vld [vmem:[%s3857 + $0x68] sm:$0xff]
      %v3872 = vld [vmem:[%s3857 + $0x70] sm:$0xff]
      %v3873 = vld [vmem:[%s3857 + $0x78] sm:$0xff]
      %v3876 = vcombine.high %v3855, %v3855
      %3877 = vrot.lane.b32.xlu0 %v3855, 94
      %v3878 = vpop.permute.xlu0 %3877
      %3879 = vrot.lane.b32.xlu0 %v3876, 94
      %v3880 = vpop.permute.xlu0 %3879
      %3881 = vrot.lane.b32.xlu0 %v3856, 94
      %v3882 = vpop.permute.xlu0 %3881
      %vm3883 = vcmask 769024
      %v3884 = vsel %vm3883, %v3878, %v3880
      %v3885 = vsel %vm3883, %v3880, %v3882
      %v3887 = vsel %vm405, %v3858, 0
      %v3890 = vsel %vm405, %v3859, 0
      %v3893 = vsel %vm405, %v3860, 0
      %v3896 = vsel %vm405, %v3861, 0
      %v3899 = vsel %vm405, %v3862, 0
      %v3902 = vsel %vm405, %v3863, 0
      %v3905 = vsel %vm405, %v3864, 0
      %v3908 = vsel %vm405, %v3865, 0
      %v3911 = vsel %vm405, %v3866, 0
      %v3914 = vsel %vm405, %v3867, 0
      %v3917 = vsel %vm405, %v3868, 0
      %v3920 = vsel %vm405, %v3869, 0
      %v3923 = vsel %vm405, %v3870, 0
      %v3926 = vsel %vm405, %v3871, 0
      %v3929 = vsel %vm405, %v3872, 0
      %v3932 = vsel %vm405, %v3873, 0
      %v3934 = vsel %vm454, %v3884, 0
      %v3936 = vsel %vm454, %v3885, 0
      %v3938 = vsel %vm454, %v3882, 0
      %3940 = vmatprep.subr.mxu0 %v3936
      %3941 = vmatpush1.msra.mxu0 %v3934
      %3942 = vmatprep.subr.mxu0 0.0
      %3943 = vmatpush1.msra.mxu0 0.0
      %3944 = vmatprep.subr.mxu0 0.0
      %3945 = vmatpush1.msra.mxu0 0.0
      %3946 = vmatprep.subr.mxu0 0.0
      %3947 = vmatpush1.msra.mxu0 0.0
      %3948 = vmatprep.subr.mxu0 0.0
      %3949 = vmatpush1.msra.mxu0 0.0
      %3950 = vmatprep.subr.mxu0 0.0
      %3951 = vmatpush1.msra.mxu0 0.0
      %3952 = vmatprep.subr.mxu0 0.0
      %3953 = vmatpush1.msra.mxu0 0.0
      %3954 = vmatprep.subr.mxu0 0.0
      %3955 = vmatpush1.msra.mxu0 0.0
      %3956 = vmatprep.subr.mxu0 0.0
      %3957 = vmatpush1.msra.mxu0 0.0
      %3958 = vmatprep.subr.mxu0 0.0
      %3959 = vmatpush1.msra.mxu0 0.0
      %3960 = vmatprep.subr.mxu0 0.0
      %3961 = vmatpush1.msra.mxu0 0.0
      %3962 = vmatprep.subr.mxu0 0.0
      %3963 = vmatpush1.msra.mxu0 0.0
      %3964 = vmatprep.subr.mxu0 0.0
      %3965 = vmatpush1.msra.mxu0 0.0
      %3966 = vmatprep.subr.mxu0 0.0
      %3967 = vmatpush1.msra.mxu0 0.0
      %3968 = vmatprep.subr.mxu0 0.0
      %3969 = vmatpush1.msra.mxu0 0.0
      %3970 = vmatprep.subr.mxu0 0.0
      %3971 = vmatpush1.msra.mxu0 0.0
      %3972 = vmatprep.subr.mxu0 0.0
      %3973 = vmatpush1.msra.mxu0 0.0
      %3974 = vmatprep.subr.mxu0 0.0
      %3975 = vmatpush1.msra.mxu0 0.0
      %3976 = vmatprep.subr.mxu0 0.0
      %3977 = vmatpush1.msra.mxu0 0.0
      %3978 = vmatprep.subr.mxu0 0.0
      %3979 = vmatpush1.msra.mxu0 0.0
      %3980 = vmatprep.subr.mxu0 0.0
      %3981 = vmatpush1.msra.mxu0 0.0
      %3982 = vmatprep.subr.mxu0 0.0
      %3983 = vmatpush1.msra.mxu0 0.0
      %3984 = vmatprep.subr.mxu0 0.0
      %3985 = vmatpush1.msra.mxu0 0.0
      %3986 = vmatprep.subr.mxu0 0.0
      %3987 = vmatpush1.msra.mxu0 0.0
      %3988 = vmatprep.subr.mxu0 0.0
      %3989 = vmatpush1.msra.mxu0 0.0
      %3990 = vmatprep.subr.mxu0 0.0
      %3991 = vmatpush1.msra.mxu0 0.0
      %3992 = vmatprep.subr.mxu0 0.0
      %3993 = vmatpush1.msra.mxu0 0.0
      %3994 = vmatprep.subr.mxu0 0.0
      %3995 = vmatpush1.msra.mxu0 0.0
      %3996 = vmatprep.subr.mxu0 0.0
      %3997 = vmatpush1.msra.mxu0 0.0
      %3998 = vmatprep.subr.mxu0 0.0
      %3999 = vmatpush1.msra.mxu0 0.0
      %4000 = vmatprep.subr.mxu0 0.0
      %4001 = vmatpush1.msra.mxu0 0.0
      %4002 = vmatprep.subr.mxu0 0.0
      %4003 = vmatpush1.msra.mxu0 0.0
      %4004 = vmatprep.mubr.f32.mxu0 0.0
      %4005 = vmatmul.mubr.f32.gmra.mrb[0].mxu0 %v3887
      %v4006 = vpop.f32.mrb[0].mxu0
      %v4007 = vadd.f32 0.0, %v4006
      %v4008 = vpop.f32.mrb[0].mxu0
      %v4009 = vadd.f32 0.0, %v4008
      %4010 = vmatprep.mubr.f32.mxu0 0.0
      %4011 = vmatmul.mubr.f32.gmra.mrb[0].mxu0 %v3890
      %v4012 = vpop.f32.mrb[0].mxu0
      %v4013 = vadd.f32 0.0, %v4012
      %v4014 = vpop.f32.mrb[0].mxu0
      %v4015 = vadd.f32 0.0, %v4014
      %4016 = vmatprep.mubr.f32.mxu0 0.0
      %4017 = vmatmul.mubr.f32.gmra.mrb[0].mxu0 %v3893
      %v4018 = vpop.f32.mrb[0].mxu0
      %v4019 = vadd.f32 0.0, %v4018
      %v4020 = vpop.f32.mrb[0].mxu0
      %v4021 = vadd.f32 0.0, %v4020
      %4022 = vmatprep.mubr.f32.mxu0 0.0
      %4023 = vmatmul.mubr.f32.gmra.mrb[0].mxu0 %v3896
      %v4024 = vpop.f32.mrb[0].mxu0
      %v4025 = vadd.f32 0.0, %v4024
      %v4026 = vpop.f32.mrb[0].mxu0
      %v4027 = vadd.f32 0.0, %v4026
      %4028 = vmatprep.mubr.f32.mxu0 0.0
      %4029 = vmatmul.mubr.f32.gmra.mrb[0].mxu0 %v3899
      %v4030 = vpop.f32.mrb[0].mxu0
      %v4031 = vadd.f32 0.0, %v4030
      %v4032 = vpop.f32.mrb[0].mxu0
      %v4033 = vadd.f32 0.0, %v4032
      %4034 = vmatprep.mubr.f32.mxu0 0.0
      %4035 = vmatmul.mubr.f32.gmra.mrb[0].mxu0 %v3902
      %v4036 = vpop.f32.mrb[0].mxu0
      %v4037 = vadd.f32 0.0, %v4036
      %v4038 = vpop.f32.mrb[0].mxu0
      %v4039 = vadd.f32 0.0, %v4038
      %4040 = vmatprep.mubr.f32.mxu0 0.0
      %4041 = vmatmul.mubr.f32.gmra.mrb[0].mxu0 %v3905
      %v4042 = vpop.f32.mrb[0].mxu0
      %v4043 = vadd.f32 0.0, %v4042
      %v4044 = vpop.f32.mrb[0].mxu0
      %v4045 = vadd.f32 0.0, %v4044
      %4046 = vmatprep.mubr.f32.mxu0 0.0
      %4047 = vmatmul.mubr.f32.gmra.mrb[0].mxu0 %v3908
      %v4048 = vpop.f32.mrb[0].mxu0
      %v4049 = vadd.f32 0.0, %v4048
      %v4050 = vpop.f32.mrb[0].mxu0
      %v4051 = vadd.f32 0.0, %v4050
      %4052 = vmatprep.mubr.f32.mxu0 0.0
      %4053 = vmatmul.mubr.f32.gmra.mrb[0].mxu0 %v3911
      %v4054 = vpop.f32.mrb[0].mxu0
      %v4055 = vadd.f32 0.0, %v4054
      %v4056 = vpop.f32.mrb[0].mxu0
      %v4057 = vadd.f32 0.0, %v4056
      %4058 = vmatprep.mubr.f32.mxu0 0.0
      %4059 = vmatmul.mubr.f32.gmra.mrb[0].mxu0 %v3914
      %v4060 = vpop.f32.mrb[0].mxu0
      %v4061 = vadd.f32 0.0, %v4060
      %v4062 = vpop.f32.mrb[0].mxu0
      %v4063 = vadd.f32 0.0, %v4062
      %4064 = vmatprep.mubr.f32.mxu0 0.0
      %4065 = vmatmul.mubr.f32.gmra.mrb[0].mxu0 %v3917
      %v4066 = vpop.f32.mrb[0].mxu0
      %v4067 = vadd.f32 0.0, %v4066
      %v4068 = vpop.f32.mrb[0].mxu0
      %v4069 = vadd.f32 0.0, %v4068
      %4070 = vmatprep.mubr.f32.mxu0 0.0
      %4071 = vmatmul.mubr.f32.gmra.mrb[0].mxu0 %v3920
      %v4072 = vpop.f32.mrb[0].mxu0
      %v4073 = vadd.f32 0.0, %v4072
      %v4074 = vpop.f32.mrb[0].mxu0
      %v4075 = vadd.f32 0.0, %v4074
      %4076 = vmatprep.mubr.f32.mxu0 0.0
      %4077 = vmatmul.mubr.f32.gmra.mrb[0].mxu0 %v3923
      %v4078 = vpop.f32.mrb[0].mxu0
      %v4079 = vadd.f32 0.0, %v4078
      %v4080 = vpop.f32.mrb[0].mxu0
      %v4081 = vadd.f32 0.0, %v4080
      %4082 = vmatprep.mubr.f32.mxu0 0.0
      %4083 = vmatmul.mubr.f32.gmra.mrb[0].mxu0 %v3926
      %v4084 = vpop.f32.mrb[0].mxu0
      %v4085 = vadd.f32 0.0, %v4084
      %v4086 = vpop.f32.mrb[0].mxu0
      %v4087 = vadd.f32 0.0, %v4086
      %4088 = vmatprep.mubr.f32.mxu0 0.0
      %4089 = vmatmul.mubr.f32.gmra.mrb[0].mxu0 %v3929
      %v4090 = vpop.f32.mrb[0].mxu0
      %v4091 = vadd.f32 0.0, %v4090
      %v4092 = vpop.f32.mrb[0].mxu0
      %v4093 = vadd.f32 0.0, %v4092
      %4094 = vmatprep.mubr.f32.mxu0 0.0
      %4095 = vmatmul.mubr.f32.gmra.mrb[0].mxu0 %v3932
      %v4096 = vpop.f32.mrb[0].mxu0
      %v4097 = vadd.f32 0.0, %v4096
      %v4098 = vpop.f32.mrb[0].mxu0
      %v4099 = vadd.f32 0.0, %v4098
      %4100 = vdwg.mxu0
      %4101 = vmatprep.subr.mxu0 0.0
      %4102 = vmatpush1.msra.mxu0 %v3938
      %4103 = vmatprep.subr.mxu0 0.0
      %4104 = vmatpush1.msra.mxu0 0.0
      %4105 = vmatprep.subr.mxu0 0.0
      %4106 = vmatpush1.msra.mxu0 0.0
      %4107 = vmatprep.subr.mxu0 0.0
      %4108 = vmatpush1.msra.mxu0 0.0
      %4109 = vmatprep.subr.mxu0 0.0
      %4110 = vmatpush1.msra.mxu0 0.0
      %4111 = vmatprep.subr.mxu0 0.0
      %4112 = vmatpush1.msra.mxu0 0.0
      %4113 = vmatprep.subr.mxu0 0.0
      %4114 = vmatpush1.msra.mxu0 0.0
      %4115 = vmatprep.subr.mxu0 0.0
      %4116 = vmatpush1.msra.mxu0 0.0
      %4117 = vmatprep.subr.mxu0 0.0
      %4118 = vmatpush1.msra.mxu0 0.0
      %4119 = vmatprep.subr.mxu0 0.0
      %4120 = vmatpush1.msra.mxu0 0.0
      %4121 = vmatprep.subr.mxu0 0.0
      %4122 = vmatpush1.msra.mxu0 0.0
      %4123 = vmatprep.subr.mxu0 0.0
      %4124 = vmatpush1.msra.mxu0 0.0
      %4125 = vmatprep.subr.mxu0 0.0
      %4126 = vmatpush1.msra.mxu0 0.0
      %4127 = vmatprep.subr.mxu0 0.0
      %4128 = vmatpush1.msra.mxu0 0.0
      %4129 = vmatprep.subr.mxu0 0.0
      %4130 = vmatpush1.msra.mxu0 0.0
      %4131 = vmatprep.subr.mxu0 0.0
      %4132 = vmatpush1.msra.mxu0 0.0
      %4133 = vmatprep.subr.mxu0 0.0
      %4134 = vmatpush1.msra.mxu0 0.0
      %4135 = vmatprep.subr.mxu0 0.0
      %4136 = vmatpush1.msra.mxu0 0.0
      %4137 = vmatprep.subr.mxu0 0.0
      %4138 = vmatpush1.msra.mxu0 0.0
      %4139 = vmatprep.subr.mxu0 0.0
      %4140 = vmatpush1.msra.mxu0 0.0
      %4141 = vmatprep.subr.mxu0 0.0
      %4142 = vmatpush1.msra.mxu0 0.0
      %4143 = vmatprep.subr.mxu0 0.0
      %4144 = vmatpush1.msra.mxu0 0.0
      %4145 = vmatprep.subr.mxu0 0.0
      %4146 = vmatpush1.msra.mxu0 0.0
      %4147 = vmatprep.subr.mxu0 0.0
      %4148 = vmatpush1.msra.mxu0 0.0
      %4149 = vmatprep.subr.mxu0 0.0
      %4150 = vmatpush1.msra.mxu0 0.0
      %4151 = vmatprep.subr.mxu0 0.0
      %4152 = vmatpush1.msra.mxu0 0.0
      %4153 = vmatprep.subr.mxu0 0.0
      %4154 = vmatpush1.msra.mxu0 0.0
      %4155 = vmatprep.subr.mxu0 0.0
      %4156 = vmatpush1.msra.mxu0 0.0
      %4157 = vmatprep.subr.mxu0 0.0
      %4158 = vmatpush1.msra.mxu0 0.0
      %4159 = vmatprep.subr.mxu0 0.0
      %4160 = vmatpush1.msra.mxu0 0.0
      %4161 = vmatprep.subr.mxu0 0.0
      %4162 = vmatpush1.msra.mxu0 0.0
      %4163 = vmatprep.subr.mxu0 0.0
      %4164 = vmatpush1.msra.mxu0 0.0
      %4165 = vmatprep.mubr.f32.mxu0 0.0
      %4166 = vmatmul.mubr.f32.gmra.mrb[0].mxu0 %v3887
      %v4167 = vpop.f32.mrb[0].mxu0
      %v4168 = vadd.f32 0.0, %v4167
      %v4169 = vpop.f32.mrb[0].mxu0
      %4170 = vmatprep.mubr.f32.mxu0 0.0
      %4171 = vmatmul.mubr.f32.gmra.mrb[0].mxu0 %v3890
      %v4172 = vpop.f32.mrb[0].mxu0
      %v4173 = vadd.f32 0.0, %v4172
      %v4174 = vpop.f32.mrb[0].mxu0
      %4175 = vmatprep.mubr.f32.mxu0 0.0
      %4176 = vmatmul.mubr.f32.gmra.mrb[0].mxu0 %v3893
      %v4177 = vpop.f32.mrb[0].mxu0
      %v4178 = vadd.f32 0.0, %v4177
      %v4179 = vpop.f32.mrb[0].mxu0
      %4180 = vmatprep.mubr.f32.mxu0 0.0
      %4181 = vmatmul.mubr.f32.gmra.mrb[0].mxu0 %v3896
      %v4182 = vpop.f32.mrb[0].mxu0
      %v4183 = vadd.f32 0.0, %v4182
      %v4184 = vpop.f32.mrb[0].mxu0
      %4185 = vmatprep.mubr.f32.mxu0 0.0
      %4186 = vmatmul.mubr.f32.gmra.mrb[0].mxu0 %v3899
      %v4187 = vpop.f32.mrb[0].mxu0
      %v4188 = vadd.f32 0.0, %v4187
      %v4189 = vpop.f32.mrb[0].mxu0
      %4190 = vmatprep.mubr.f32.mxu0 0.0
      %4191 = vmatmul.mubr.f32.gmra.mrb[0].mxu0 %v3902
      %v4192 = vpop.f32.mrb[0].mxu0
      %v4193 = vadd.f32 0.0, %v4192
      %v4194 = vpop.f32.mrb[0].mxu0
      %4195 = vmatprep.mubr.f32.mxu0 0.0
      %4196 = vmatmul.mubr.f32.gmra.mrb[0].mxu0 %v3905
      %v4197 = vpop.f32.mrb[0].mxu0
      %v4198 = vadd.f32 0.0, %v4197
      %v4199 = vpop.f32.mrb[0].mxu0
      %4200 = vmatprep.mubr.f32.mxu0 0.0
      %4201 = vmatmul.mubr.f32.gmra.mrb[0].mxu0 %v3908
      %v4202 = vpop.f32.mrb[0].mxu0
      %v4203 = vadd.f32 0.0, %v4202
      %v4204 = vpop.f32.mrb[0].mxu0
      %4205 = vmatprep.mubr.f32.mxu0 0.0
      %4206 = vmatmul.mubr.f32.gmra.mrb[0].mxu0 %v3911
      %v4207 = vpop.f32.mrb[0].mxu0
      %v4208 = vadd.f32 0.0, %v4207
      %v4209 = vpop.f32.mrb[0].mxu0
      %4210 = vmatprep.mubr.f32.mxu0 0.0
      %4211 = vmatmul.mubr.f32.gmra.mrb[0].mxu0 %v3914
      %v4212 = vpop.f32.mrb[0].mxu0
      %v4213 = vadd.f32 0.0, %v4212
      %v4214 = vpop.f32.mrb[0].mxu0
      %4215 = vmatprep.mubr.f32.mxu0 0.0
      %4216 = vmatmul.mubr.f32.gmra.mrb[0].mxu0 %v3917
      %v4217 = vpop.f32.mrb[0].mxu0
      %v4218 = vadd.f32 0.0, %v4217
      %v4219 = vpop.f32.mrb[0].mxu0
      %4220 = vmatprep.mubr.f32.mxu0 0.0
      %4221 = vmatmul.mubr.f32.gmra.mrb[0].mxu0 %v3920
      %v4222 = vpop.f32.mrb[0].mxu0
      %v4223 = vadd.f32 0.0, %v4222
      %v4224 = vpop.f32.mrb[0].mxu0
      %4225 = vmatprep.mubr.f32.mxu0 0.0
      %4226 = vmatmul.mubr.f32.gmra.mrb[0].mxu0 %v3923
      %v4227 = vpop.f32.mrb[0].mxu0
      %v4228 = vadd.f32 0.0, %v4227
      %v4229 = vpop.f32.mrb[0].mxu0
      %4230 = vmatprep.mubr.f32.mxu0 0.0
      %4231 = vmatmul.mubr.f32.gmra.mrb[0].mxu0 %v3926
      %v4232 = vpop.f32.mrb[0].mxu0
      %v4233 = vadd.f32 0.0, %v4232
      %v4234 = vpop.f32.mrb[0].mxu0
      %4235 = vmatprep.mubr.f32.mxu0 0.0
      %4236 = vmatmul.mubr.f32.gmra.mrb[0].mxu0 %v3929
      %v4237 = vpop.f32.mrb[0].mxu0
      %v4238 = vadd.f32 0.0, %v4237
      %v4239 = vpop.f32.mrb[0].mxu0
      %4240 = vmatprep.mubr.f32.mxu0 0.0
      %4241 = vmatmul.mubr.f32.gmra.mrb[0].mxu0 %v3932
      %v4242 = vpop.f32.mrb[0].mxu0
      %v4243 = vadd.f32 0.0, %v4242
      %v4244 = vpop.f32.mrb[0].mxu0
      %4245 = vdwg.mxu0
      %v4246 = vadd.f32 %v3795, %v4007
      %v4247 = vadd.f32 %v3796, %v4009
      %v4248 = vadd.f32 %v3797, %v4168
      %v4249 = vadd.f32 %v3798, %v4013
      %v4250 = vadd.f32 %v3799, %v4015
      %v4251 = vadd.f32 %v3800, %v4173
      %v4252 = vadd.f32 %v3801, %v4019
      %v4253 = vadd.f32 %v3802, %v4021
      %v4254 = vadd.f32 %v3803, %v4178
      %v4255 = vadd.f32 %v3804, %v4025
      %v4256 = vadd.f32 %v3805, %v4027
      %v4257 = vadd.f32 %v3806, %v4183
      %v4258 = vadd.f32 %v3807, %v4031
      %v4259 = vadd.f32 %v3808, %v4033
      %v4260 = vadd.f32 %v3809, %v4188
      %v4261 = vadd.f32 %v3810, %v4037
      %v4262 = vadd.f32 %v3811, %v4039
      %v4263 = vadd.f32 %v3812, %v4193
      %v4264 = vadd.f32 %v3813, %v4043
      %v4265 = vadd.f32 %v3814, %v4045
      %v4266 = vadd.f32 %v3815, %v4198
      %v4267 = vadd.f32 %v3816, %v4049
      %v4268 = vadd.f32 %v3817, %v4051
      %v4269 = vadd.f32 %v3818, %v4203
      %v4270 = vadd.f32 %v3819, %v4055
      %v4271 = vadd.f32 %v3820, %v4057
      %v4272 = vadd.f32 %v3821, %v4208
      %v4273 = vadd.f32 %v3822, %v4061
      %v4274 = vadd.f32 %v3823, %v4063
      %v4275 = vadd.f32 %v3824, %v4213
      %v4276 = vadd.f32 %v3825, %v4067
      %v4277 = vadd.f32 %v3826, %v4069
      %v4278 = vadd.f32 %v3827, %v4218
      %v4279 = vadd.f32 %v3828, %v4073
      %v4280 = vadd.f32 %v3829, %v4075
      %v4281 = vadd.f32 %v3830, %v4223
      %v4282 = vadd.f32 %v3831, %v4079
      %v4283 = vadd.f32 %v3832, %v4081
      %v4284 = vadd.f32 %v3833, %v4228
      %v4285 = vadd.f32 %v3834, %v4085
      %v4286 = vadd.f32 %v3835, %v4087
      %v4287 = vadd.f32 %v3836, %v4233
      %v4288 = vadd.f32 %v3837, %v4091
      %v4289 = vadd.f32 %v3838, %v4093
      %v4290 = vadd.f32 %v3839, %v4238
      %v4291 = vadd.f32 %v3840, %v4097
      %v4292 = vadd.f32 %v3841, %v4099
      %v4293 = vadd.f32 %v3842, %v4243
      %v4294 = vld [vmem:[%s3] sm:$0xff]
      %v4295 = vld [vmem:[%s3 + $0x8] sm:$0xff]
      %v4296 = vld [vmem:[%s3 + $0x10] sm:$0xff]
      %v4297 = vld [vmem:[%s3 + $0x18] sm:$0xff]
      %v4298 = vld [vmem:[%s3 + $0x20] sm:$0xff]
      %v4299 = vld [vmem:[%s3 + $0x28] sm:$0xff]
      %v4300 = vld [vmem:[%s3 + $0x30] sm:$0xff]
      %v4301 = vld [vmem:[%s3 + $0x38] sm:$0xff]
      %v4302 = vld [vmem:[%s3 + $0x40] sm:$0xff]
      %v4303 = vld [vmem:[%s3 + $0x48] sm:$0xff]
      %v4304 = vld [vmem:[%s3 + $0x50] sm:$0xff]
      %v4305 = vld [vmem:[%s3 + $0x58] sm:$0xff]
      %v4306 = vld [vmem:[%s3 + $0x60] sm:$0xff]
      %v4307 = vld [vmem:[%s3 + $0x68] sm:$0xff]
      %v4308 = vld [vmem:[%s3 + $0x70] sm:$0xff]
      %v4309 = vld [vmem:[%s3 + $0x78] sm:$0xff]
      %4311 = vset.pattern.permute.xlu0 0
      %4312 = vperm.xlu0 %4311, %v4294
      %v4313 = vpop.permute.xlu0 %4312
      %4316 = vset.pattern.permute.xlu0 0
      %4317 = vperm.xlu0 %4316, %v4295
      %v4318 = vpop.permute.xlu0 %4317
      %4321 = vset.pattern.permute.xlu0 0
      %4322 = vperm.xlu0 %4321, %v4296
      %v4323 = vpop.permute.xlu0 %4322
      %4326 = vset.pattern.permute.xlu0 0
      %4327 = vperm.xlu0 %4326, %v4297
      %v4328 = vpop.permute.xlu0 %4327
      %4331 = vset.pattern.permute.xlu0 0
      %4332 = vperm.xlu0 %4331, %v4298
      %v4333 = vpop.permute.xlu0 %4332
      %4336 = vset.pattern.permute.xlu0 0
      %4337 = vperm.xlu0 %4336, %v4299
      %v4338 = vpop.permute.xlu0 %4337
      %4341 = vset.pattern.permute.xlu0 0
      %4342 = vperm.xlu0 %4341, %v4300
      %v4343 = vpop.permute.xlu0 %4342
      %4346 = vset.pattern.permute.xlu0 0
      %4347 = vperm.xlu0 %4346, %v4301
      %v4348 = vpop.permute.xlu0 %4347
      %4351 = vset.pattern.permute.xlu0 0
      %4352 = vperm.xlu0 %4351, %v4302
      %v4353 = vpop.permute.xlu0 %4352
      %4356 = vset.pattern.permute.xlu0 0
      %4357 = vperm.xlu0 %4356, %v4303
      %v4358 = vpop.permute.xlu0 %4357
      %4361 = vset.pattern.permute.xlu0 0
      %4362 = vperm.xlu0 %4361, %v4304
      %v4363 = vpop.permute.xlu0 %4362
      %4366 = vset.pattern.permute.xlu0 0
      %4367 = vperm.xlu0 %4366, %v4305
      %v4368 = vpop.permute.xlu0 %4367
      %4371 = vset.pattern.permute.xlu0 0
      %4372 = vperm.xlu0 %4371, %v4306
      %v4373 = vpop.permute.xlu0 %4372
      %4376 = vset.pattern.permute.xlu0 0
      %4377 = vperm.xlu0 %4376, %v4307
      %v4378 = vpop.permute.xlu0 %4377
      %4381 = vset.pattern.permute.xlu0 0
      %4382 = vperm.xlu0 %4381, %v4308
      %v4383 = vpop.permute.xlu0 %4382
      %4386 = vset.pattern.permute.xlu0 0
      %4387 = vperm.xlu0 %4386, %v4309
      %v4388 = vpop.permute.xlu0 %4387
      %v4390 = vadd.f32 %v4246, %v4313
      %v4391 = vadd.f32 %v4247, %v4313
      %v4392 = vadd.f32 %v4248, %v4313
      %v4393 = vadd.f32 %v4249, %v4318
      %v4394 = vadd.f32 %v4250, %v4318
      %v4395 = vadd.f32 %v4251, %v4318
      %v4396 = vadd.f32 %v4252, %v4323
      %v4397 = vadd.f32 %v4253, %v4323
      %v4398 = vadd.f32 %v4254, %v4323
      %v4399 = vadd.f32 %v4255, %v4328
      %v4400 = vadd.f32 %v4256, %v4328
      %v4401 = vadd.f32 %v4257, %v4328
      %v4402 = vadd.f32 %v4258, %v4333
      %v4403 = vadd.f32 %v4259, %v4333
      %v4404 = vadd.f32 %v4260, %v4333
      %v4405 = vadd.f32 %v4261, %v4338
      %v4406 = vadd.f32 %v4262, %v4338
      %v4407 = vadd.f32 %v4263, %v4338
      %v4408 = vadd.f32 %v4264, %v4343
      %v4409 = vadd.f32 %v4265, %v4343
      %v4410 = vadd.f32 %v4266, %v4343
      %v4411 = vadd.f32 %v4267, %v4348
      %v4412 = vadd.f32 %v4268, %v4348
      %v4413 = vadd.f32 %v4269, %v4348
      %v4414 = vadd.f32 %v4270, %v4353
      %v4415 = vadd.f32 %v4271, %v4353
      %v4416 = vadd.f32 %v4272, %v4353
      %v4417 = vadd.f32 %v4273, %v4358
      %v4418 = vadd.f32 %v4274, %v4358
      %v4419 = vadd.f32 %v4275, %v4358
      %v4420 = vadd.f32 %v4276, %v4363
      %v4421 = vadd.f32 %v4277, %v4363
      %v4422 = vadd.f32 %v4278, %v4363
      %v4423 = vadd.f32 %v4279, %v4368
      %v4424 = vadd.f32 %v4280, %v4368
      %v4425 = vadd.f32 %v4281, %v4368
      %v4426 = vadd.f32 %v4282, %v4373
      %v4427 = vadd.f32 %v4283, %v4373
      %v4428 = vadd.f32 %v4284, %v4373
      %v4429 = vadd.f32 %v4285, %v4378
      %v4430 = vadd.f32 %v4286, %v4378
      %v4431 = vadd.f32 %v4287, %v4378
      %v4432 = vadd.f32 %v4288, %v4383
      %v4433 = vadd.f32 %v4289, %v4383
      %v4434 = vadd.f32 %v4290, %v4383
      %v4435 = vadd.f32 %v4291, %v4388
      %v4436 = vadd.f32 %v4292, %v4388
      %v4437 = vadd.f32 %v4293, %v4388
      %v4438 = vmax.f32 %v4390, 0.0
      %v4439 = vmax.f32 %v4391, 0.0
      %v4440 = vmax.f32 %v4392, 0.0
      %v4441 = vmax.f32 %v4393, 0.0
      %v4442 = vmax.f32 %v4394, 0.0
      %v4443 = vmax.f32 %v4395, 0.0
      %v4444 = vmax.f32 %v4396, 0.0
      %v4445 = vmax.f32 %v4397, 0.0
      %v4446 = vmax.f32 %v4398, 0.0
      %v4447 = vmax.f32 %v4399, 0.0
      %v4448 = vmax.f32 %v4400, 0.0
      %v4449 = vmax.f32 %v4401, 0.0
      %v4450 = vmax.f32 %v4402, 0.0
      %v4451 = vmax.f32 %v4403, 0.0
      %v4452 = vmax.f32 %v4404, 0.0
      %v4453 = vmax.f32 %v4405, 0.0
      %v4454 = vmax.f32 %v4406, 0.0
      %v4455 = vmax.f32 %v4407, 0.0
      %v4456 = vmax.f32 %v4408, 0.0
      %v4457 = vmax.f32 %v4409, 0.0
      %v4458 = vmax.f32 %v4410, 0.0
      %v4459 = vmax.f32 %v4411, 0.0
      %v4460 = vmax.f32 %v4412, 0.0
      %v4461 = vmax.f32 %v4413, 0.0
      %v4462 = vmax.f32 %v4414, 0.0
      %v4463 = vmax.f32 %v4415, 0.0
      %v4464 = vmax.f32 %v4416, 0.0
      %v4465 = vmax.f32 %v4417, 0.0
      %v4466 = vmax.f32 %v4418, 0.0
      %v4467 = vmax.f32 %v4419, 0.0
      %v4468 = vmax.f32 %v4420, 0.0
      %v4469 = vmax.f32 %v4421, 0.0
      %v4470 = vmax.f32 %v4422, 0.0
      %v4471 = vmax.f32 %v4423, 0.0
      %v4472 = vmax.f32 %v4424, 0.0
      %v4473 = vmax.f32 %v4425, 0.0
      %v4474 = vmax.f32 %v4426, 0.0
      %v4475 = vmax.f32 %v4427, 0.0
      %v4476 = vmax.f32 %v4428, 0.0
      %v4477 = vmax.f32 %v4429, 0.0
      %v4478 = vmax.f32 %v4430, 0.0
      %v4479 = vmax.f32 %v4431, 0.0
      %v4480 = vmax.f32 %v4432, 0.0
      %v4481 = vmax.f32 %v4433, 0.0
      %v4482 = vmax.f32 %v4434, 0.0
      %v4483 = vmax.f32 %v4435, 0.0
      %v4484 = vmax.f32 %v4436, 0.0
      %v4485 = vmax.f32 %v4437, 0.0
      %v4486 = vlaneseq
      %v4487 = vshrl.u32 %v4486, 7
      %v4488 = vsub.s32 0, %v4487
      %v4489 = vrot.slane %v320, %v4488
      %v4490 = vlaneseq
      %v4491 = vshrl.u32 %v4490, 7
      %v4492 = vsub.s32 4, %v4491
      %v4493 = vrot.slane %v320, %v4492
      %v4494 = vlaneseq
      %v4495 = vshrl.u32 %v4494, 7
      %v4496 = vsub.s32 0, %v4495
      %v4497 = vrot.slane %v321, %v4496
      %v4501 = vlaneseq
      %v4502 = vshrl.u32 %v4501, 7
      %v4503 = vsub.s32 0, %v4502
      %v4504 = vrot.slane %v4489, %v4503
      %v4505 = vlaneseq
      %v4506 = vshrl.u32 %v4505, 7
      %v4507 = vsub.s32 0, %v4506
      %v4508 = vrot.slane %v4493, %v4507
      %v4509 = vlaneseq
      %v4510 = vshrl.u32 %v4509, 7
      %v4511 = vsub.s32 0, %v4510
      %v4512 = vrot.slane %v4497, %v4511
      %v4513 = vmul.f32 %v4438, %v4504
      %v4514 = vmul.f32 %v4439, %v4508
      %v4515 = vmul.f32 %v4440, %v4512
      %v4516 = vmul.f32 %v4441, %v4504
      %v4517 = vmul.f32 %v4442, %v4508
      %v4518 = vmul.f32 %v4443, %v4512
      %v4519 = vmul.f32 %v4444, %v4504
      %v4520 = vmul.f32 %v4445, %v4508
      %v4521 = vmul.f32 %v4446, %v4512
      %v4522 = vmul.f32 %v4447, %v4504
      %v4523 = vmul.f32 %v4448, %v4508
      %v4524 = vmul.f32 %v4449, %v4512
      %v4525 = vmul.f32 %v4450, %v4504
      %v4526 = vmul.f32 %v4451, %v4508
      %v4527 = vmul.f32 %v4452, %v4512
      %v4528 = vmul.f32 %v4453, %v4504
      %v4529 = vmul.f32 %v4454, %v4508
      %v4530 = vmul.f32 %v4455, %v4512
      %v4531 = vmul.f32 %v4456, %v4504
      %v4532 = vmul.f32 %v4457, %v4508
      %v4533 = vmul.f32 %v4458, %v4512
      %v4534 = vmul.f32 %v4459, %v4504
      %v4535 = vmul.f32 %v4460, %v4508
      %v4536 = vmul.f32 %v4461, %v4512
      %v4537 = vmul.f32 %v4462, %v4504
      %v4538 = vmul.f32 %v4463, %v4508
      %v4539 = vmul.f32 %v4464, %v4512
      %v4540 = vmul.f32 %v4465, %v4504
      %v4541 = vmul.f32 %v4466, %v4508
      %v4542 = vmul.f32 %v4467, %v4512
      %v4543 = vmul.f32 %v4468, %v4504
      %v4544 = vmul.f32 %v4469, %v4508
      %v4545 = vmul.f32 %v4470, %v4512
      %v4546 = vmul.f32 %v4471, %v4504
      %v4547 = vmul.f32 %v4472, %v4508
      %v4548 = vmul.f32 %v4473, %v4512
      %v4549 = vmul.f32 %v4474, %v4504
      %v4550 = vmul.f32 %v4475, %v4508
      %v4551 = vmul.f32 %v4476, %v4512
      %v4552 = vmul.f32 %v4477, %v4504
      %v4553 = vmul.f32 %v4478, %v4508
      %v4554 = vmul.f32 %v4479, %v4512
      %v4555 = vmul.f32 %v4480, %v4504
      %v4556 = vmul.f32 %v4481, %v4508
      %v4557 = vmul.f32 %v4482, %v4512
      %v4558 = vmul.f32 %v4483, %v4504
      %v4559 = vmul.f32 %v4484, %v4508
      %v4560 = vmul.f32 %v4485, %v4512
      %4561 = vst [vmem:[%s311] sm:$0xff] %v4513
      %4562 = vst.msk [vmem:[%s311 + $0x8] sm:$0xff] %vm3850, %v4514
      %4563 = vst [vmem:[%s311 + $0x10] sm:$0xff] %v4516
      %4564 = vst.msk [vmem:[%s311 + $0x18] sm:$0xff] %vm3850, %v4517
      %4565 = vst [vmem:[%s311 + $0x20] sm:$0xff] %v4519
      %4566 = vst.msk [vmem:[%s311 + $0x28] sm:$0xff] %vm3850, %v4520
      %4567 = vst [vmem:[%s311 + $0x30] sm:$0xff] %v4522
      %4568 = vst.msk [vmem:[%s311 + $0x38] sm:$0xff] %vm3850, %v4523
      %4569 = vst [vmem:[%s311 + $0x40] sm:$0xff] %v4525
      %4570 = vst.msk [vmem:[%s311 + $0x48] sm:$0xff] %vm3850, %v4526
      %4571 = vst [vmem:[%s311 + $0x50] sm:$0xff] %v4528
      %4572 = vst.msk [vmem:[%s311 + $0x58] sm:$0xff] %vm3850, %v4529
      %4573 = vst [vmem:[%s311 + $0x60] sm:$0xff] %v4531
      %4574 = vst.msk [vmem:[%s311 + $0x68] sm:$0xff] %vm3850, %v4532
      %4575 = vst [vmem:[%s311 + $0x70] sm:$0xff] %v4534
      %4576 = vst.msk [vmem:[%s311 + $0x78] sm:$0xff] %vm3850, %v4535
      %4577 = vst [vmem:[%s311 + $0x80] sm:$0xff] %v4537
      %4578 = vst.msk [vmem:[%s311 + $0x88] sm:$0xff] %vm3850, %v4538
      %4579 = vst [vmem:[%s311 + $0x90] sm:$0xff] %v4540
      %4580 = vst.msk [vmem:[%s311 + $0x98] sm:$0xff] %vm3850, %v4541
      %4581 = vst [vmem:[%s311 + $0xa0] sm:$0xff] %v4543
      %4582 = vst.msk [vmem:[%s311 + $0xa8] sm:$0xff] %vm3850, %v4544
      %4583 = vst [vmem:[%s311 + $0xb0] sm:$0xff] %v4546
      %4584 = vst.msk [vmem:[%s311 + $0xb8] sm:$0xff] %vm3850, %v4547
      %4585 = vst [vmem:[%s311 + $0xc0] sm:$0xff] %v4549
      %4586 = vst.msk [vmem:[%s311 + $0xc8] sm:$0xff] %vm3850, %v4550
      %4587 = vst [vmem:[%s311 + $0xd0] sm:$0xff] %v4552
      %4588 = vst.msk [vmem:[%s311 + $0xd8] sm:$0xff] %vm3850, %v4553
      %4589 = vst [vmem:[%s311 + $0xe0] sm:$0xff] %v4555
      %4590 = vst.msk [vmem:[%s311 + $0xe8] sm:$0xff] %vm3850, %v4556
      %4591 = vst [vmem:[%s311 + $0xf0] sm:$0xff] %v4558
      %4592 = vst.msk [vmem:[%s311 + $0xf8] sm:$0xff] %vm3850, %v4559
      %s4593 = scalar_lea.vmem %s311, 256
      %4594 = vst [vmem:[%s4593] sm:$0xff] %v4514
      %4595 = vst.msk [vmem:[%s4593 + $0x8] sm:$0xff] %vm3850, %v4515
      %4596 = vst [vmem:[%s4593 + $0x10] sm:$0xff] %v4517
      %4597 = vst.msk [vmem:[%s4593 + $0x18] sm:$0xff] %vm3850, %v4518
      %4598 = vst [vmem:[%s4593 + $0x20] sm:$0xff] %v4520
      %4599 = vst.msk [vmem:[%s4593 + $0x28] sm:$0xff] %vm3850, %v4521
      %4600 = vst [vmem:[%s4593 + $0x30] sm:$0xff] %v4523
      %4601 = vst.msk [vmem:[%s4593 + $0x38] sm:$0xff] %vm3850, %v4524
      %4602 = vst [vmem:[%s4593 + $0x40] sm:$0xff] %v4526
      %4603 = vst.msk [vmem:[%s4593 + $0x48] sm:$0xff] %vm3850, %v4527
      %4604 = vst [vmem:[%s4593 + $0x50] sm:$0xff] %v4529
      %4605 = vst.msk [vmem:[%s4593 + $0x58] sm:$0xff] %vm3850, %v4530
      %4606 = vst [vmem:[%s4593 + $0x60] sm:$0xff] %v4532
      %4607 = vst.msk [vmem:[%s4593 + $0x68] sm:$0xff] %vm3850, %v4533
      %4608 = vst [vmem:[%s4593 + $0x70] sm:$0xff] %v4535
      %4609 = vst.msk [vmem:[%s4593 + $0x78] sm:$0xff] %vm3850, %v4536
      %4610 = vst [vmem:[%s4593 + $0x80] sm:$0xff] %v4538
      %4611 = vst.msk [vmem:[%s4593 + $0x88] sm:$0xff] %vm3850, %v4539
      %4612 = vst [vmem:[%s4593 + $0x90] sm:$0xff] %v4541
      %4613 = vst.msk [vmem:[%s4593 + $0x98] sm:$0xff] %vm3850, %v4542
      %4614 = vst [vmem:[%s4593 + $0xa0] sm:$0xff] %v4544
      %4615 = vst.msk [vmem:[%s4593 + $0xa8] sm:$0xff] %vm3850, %v4545
      %4616 = vst [vmem:[%s4593 + $0xb0] sm:$0xff] %v4547
      %4617 = vst.msk [vmem:[%s4593 + $0xb8] sm:$0xff] %vm3850, %v4548
      %4618 = vst [vmem:[%s4593 + $0xc0] sm:$0xff] %v4550
      %4619 = vst.msk [vmem:[%s4593 + $0xc8] sm:$0xff] %vm3850, %v4551
      %4620 = vst [vmem:[%s4593 + $0xd0] sm:$0xff] %v4553
      %4621 = vst.msk [vmem:[%s4593 + $0xd8] sm:$0xff] %vm3850, %v4554
      %4622 = vst [vmem:[%s4593 + $0xe0] sm:$0xff] %v4556
      %4623 = vst.msk [vmem:[%s4593 + $0xe8] sm:$0xff] %vm3850, %v4557
      %4624 = vst [vmem:[%s4593 + $0xf0] sm:$0xff] %v4559
      %4625 = vst.msk [vmem:[%s4593 + $0xf8] sm:$0xff] %vm3850, %v4560
      %v4626 = vld [vmem:[%s306] sm:$0xff]
      %v4628 = vcombine.high %v4626, %v4626
      %vm4630 = vcmask 1043456
      %v4631 = vsel %vm4630, %v4626, 0.0
      %v4632 = vsel %vm4630, %v4628, 0.0
      %v4633 = vadd.f32 %v4631, %v4632
      %4634 = vadd.xlane.f32.xlu0 %v4633
      %v4635 = vpop.xlane.xlu0 %4634
      %v4636 = vrcp.pop 256.0
      %v4637 = vmul.f32 %v4635, %v4636
      %v4640 = vunpack.c.l.s4 839922192
      %v4641 = vunpack.c.0.s8 %v4640
      %v4642 = vlaneseq
      %v4643 = vshrl.u32 %v4642, 7
      %v4644 = vsub.s32 %v4641, %v4643
      %v4645 = vrot.slane %v4637, %v4644
      %v4647 = vsub.f32 %v4626, %v4645
      %v4648 = vmul.f32 %v4647, %v4647
      %v4650 = vcombine.high %v4648, %v4648
      %v4652 = vsel %vm4630, %v4648, 0.0
      %v4653 = vsel %vm4630, %v4650, 0.0
      %v4654 = vadd.f32 %v4652, %v4653
      %4655 = vadd.xlane.f32.xlu0 %v4654
      %v4656 = vpop.xlane.xlu0 %4655
      %v4657 = vmul.f32 %v4656, %v4636
      %vm4658 = vcmask 3072
      %4659 = vst.msk [vmem:[%s315] sm:$0xf] %vm4658, %v4637
      %v4660 = vadd.f32 %v4657, 1e-05
      %v4661 = vrsqrt.pop %v4660
      %4662 = vst.msk [vmem:[%s319] sm:$0xf] %vm4658, %v4661
      %p4663 = scmp.lt.s32.totalorder %s19, 1
      %s4664 = scalar_select %p4663, %s19, 1
      %s4665 = smul.addr %s4664, 64
      %s4666 = smul.addr %s4665, 8
      %s4667 = scalar_lea.vmem %s5, %s4666
      %p4668 = scmp.lt.s32.totalorder %s19, 1
      %s4669 = scalar_select %p4668, %s19, 1
      %s4670 = smul.addr %s4669, 4
      %s4671 = scalar_lea.vmem %s6, %s4670
      %p4672 = scmp.lt.s32.totalorder %s19, 1
      %s4673 = scalar_select %p4672, %s19, 1
      %s4674 = smul.addr %s4673, 4
      %s4675 = scalar_lea.vmem %s7, %s4674
      // Predicated region
      $region41: #{tpu_custom_call.1} parent=39 // pred_check
        %p4676 = pneg %p152
      $region42: #{tpu_custom_call.1} parent=39 // pred_check_branch
        %4678 = sbr.rel (%p4676) target = $region44
      $region43: #{tpu_custom_call.1} parent=39 // pred_region
        _
      $region44: #{tpu_custom_call.1} parent=39 // pred_fallthru
        _
      // Predicated region
      $region45: #{tpu_custom_call.1} parent=39 // pred_check
        %p4679 = pneg %p178
      $region46: #{tpu_custom_call.1} parent=39 // pred_check_branch
        %4681 = sbr.rel (%p4679) target = $region48
      $region47: #{tpu_custom_call.1} parent=39 // pred_region
        _
      $region48: #{tpu_custom_call.1} parent=39 // pred_fallthru
        _
      // Predicated region
      $region49: #{tpu_custom_call.1} parent=39 // pred_check
        %p4682 = pneg %p204
      $region50: #{tpu_custom_call.1} parent=39 // pred_check_branch
        %4684 = sbr.rel (%p4682) target = $region52
      $region51: #{tpu_custom_call.1} parent=39 // pred_region
        _
      $region52: #{tpu_custom_call.1} parent=39 // pred_fallthru
        _
    $region40: #{tpu_custom_call.1} parent=5 // pred_fallthru
      _
    %p4685 = scmp.le.s32.totalorder 2, %s14
    // Predicated region
    $region53: #{tpu_custom_call.1} parent=5 // pred_check
      %p4686 = pneg %p4685
    $region54: #{tpu_custom_call.1} parent=5 // pred_check_branch
      %4688 = sbr.rel (%p4686) target = $region56
    $region55: #{tpu_custom_call.1} parent=5 // pred_region
      %s4689 = ssub.s32 %s14, 2
      // Predicated region
      $region57: #{tpu_custom_call.1} parent=55 // pred_check
        %p4690 = pneg %p158
      $region58: #{tpu_custom_call.1} parent=55 // pred_check_branch
        %4692 = sbr.rel (%p4690) target = $region60
      $region59: #{tpu_custom_call.1} parent=55 // pred_region
        %p4693 = scmp.lt.s32.totalorder %s20, 1
        %s4694 = scalar_select %p4693, %s20, 1
        %s4695 = smul.addr %s4694, 64
        %s4696 = smul.addr %s4695, 8
        %s4697 = scalar_lea.vmem %s5, %s4696
      $region60: #{tpu_custom_call.1} parent=55 // pred_fallthru
        _
      // Predicated region
      $region61: #{tpu_custom_call.1} parent=55 // pred_check
        %p4698 = pneg %p184
      $region62: #{tpu_custom_call.1} parent=55 // pred_check_branch
        %4700 = sbr.rel (%p4698) target = $region64
      $region63: #{tpu_custom_call.1} parent=55 // pred_region
        %p4701 = scmp.lt.s32.totalorder %s20, 1
        %s4702 = scalar_select %p4701, %s20, 1
        %s4703 = smul.addr %s4702, 4
        %s4704 = scalar_lea.vmem %s6, %s4703
      $region64: #{tpu_custom_call.1} parent=55 // pred_fallthru
        _
      // Predicated region
      $region65: #{tpu_custom_call.1} parent=55 // pred_check
        %p4705 = pneg %p210
      $region66: #{tpu_custom_call.1} parent=55 // pred_check_branch
        %4707 = sbr.rel (%p4705) target = $region68
      $region67: #{tpu_custom_call.1} parent=55 // pred_region
        %p4708 = scmp.lt.s32.totalorder %s20, 1
        %s4709 = scalar_select %p4708, %s20, 1
        %s4710 = smul.addr %s4709, 4
        %s4711 = scalar_lea.vmem %s7, %s4710
      $region68: #{tpu_custom_call.1} parent=55 // pred_fallthru
        _
    $region56: #{tpu_custom_call.1} parent=5 // pred_fallthru
      _
  $region6: #{tpu_custom_call.1} parent=0 // loop_footer
    %s18 = sadd.s32 1, %s14
  $region7: #{tpu_custom_call.1} parent=0 // loop_footer_branch
    %13 = sbr.rel target = $region3
  $region8: #{tpu_custom_call.1} parent=0 // loop_exit
    _

</llo_original>
